<compile_context>
chip_gen: v7x
topology: tpu7x:2x2x1
jax: 0.10.0
libtpu: 0.0.40
codegen_flags: <defaults>
</compile_context>

<pallas_src>
import functools

import jax
import jax.numpy as jnp
from jax.experimental import pallas as pl
from jax.experimental.pallas import tpu as pltpu


def _identity(x):
    return x


# ----------------------------------------------------------------------------
# Pallas kernel: full-horizon CEM rollout for one block of candidate rows.
# ----------------------------------------------------------------------------
def _rollout_kernel(a_pre_ref, snoise_ref, s0_ref,
                    w_hs_ref, w_musig_ref, b_musig_ref,
                    w_rh_ref, w_rs_ref,
                    rew_out_ref,
                    *, horizon, h_size, s_size):
    rows = s0_ref.shape[0]

    # Hoist weights out of the unrolled loop (one VMEM read each).
    w_hs = w_hs_ref[...]          # (h+s, h)   bf16
    w_musig = w_musig_ref[...]    # (h, 2*s)   bf16
    b_musig = b_musig_ref[...]    # (1, 2*s)   f32
    w_rh = w_rh_ref[...]          # (1, h)     f32
    w_rs = w_rs_ref[...]          # (1, s)     f32

    h = jnp.zeros((rows, h_size), jnp.float32)
    s = s0_ref[...]
    rew = jnp.zeros((rows, 1), jnp.float32)

    for t in range(horizon):       # static horizon -> fully unrolled
        # RSSM transition, fused: h' = tanh([h|s] @ [W_h;W_s] + (a @ W_a + b))
        hs = jnp.concatenate([h, s], axis=-1).astype(jnp.bfloat16)
        pre = (jnp.dot(hs, w_hs, preferred_element_type=jnp.float32)
               + a_pre_ref[t])
        h = jnp.tanh(pre)

        # Fused second stage: [s_mu | s_sig_pre] = h' @ [W_mu | W_sig] + b
        ms = (jnp.dot(h.astype(jnp.bfloat16), w_musig,
                      preferred_element_type=jnp.float32) + b_musig)
        s_mu = ms[:, :s_size]
        s_sigma = jax.nn.softplus(ms[:, s_size:])
        s = s_mu + s_sigma * snoise_ref[t]

        # Reward head (N=1): VPU multiply + lane reduction instead of a matmul.
        rew = rew + (jnp.sum(h * w_rh, axis=-1, keepdims=True)
                     + jnp.sum(s * w_rs, axis=-1, keepdims=True))

    rew_out_ref[...] = rew


def rollout(a_pre, snoise, s0, w_hs, w_musig, b_musig, w_rh, w_rs,
            *, horizon, h_size, s_size, num_row_blocks=1):
    """Full-horizon rollout for R = B*n_try candidate rows.

    Returns: rew_sum (R, 1) float32
    """
    R = s0.shape[0]
    assert R % num_row_blocks == 0
    rb = R // num_row_blocks

    kernel = functools.partial(_rollout_kernel, horizon=horizon,
                               h_size=h_size, s_size=s_size)

    in_specs = [
        pl.BlockSpec((horizon, rb, h_size), lambda i: (0, i, 0)),   # a_pre
        pl.BlockSpec((horizon, rb, s_size), lambda i: (0, i, 0)),   # snoise
        pl.BlockSpec((rb, s_size), lambda i: (i, 0)),               # s0
        pl.BlockSpec((h_size + s_size, h_size), lambda i: (0, 0)),  # W_hs
        pl.BlockSpec((h_size, 2 * s_size), lambda i: (0, 0)),       # W_musig
        pl.BlockSpec((1, 2 * s_size), lambda i: (0, 0)),            # b_musig
        pl.BlockSpec((1, h_size), lambda i: (0, 0)),                # w_rh
        pl.BlockSpec((1, s_size), lambda i: (0, 0)),                # w_rs
    ]
    out_specs = pl.BlockSpec((rb, 1), lambda i: (i, 0))

    return pl.pallas_call(
        kernel,
        out_shape=jax.ShapeDtypeStruct((R, 1), jnp.float32),
        grid_spec=pltpu.PrefetchScalarGridSpec(
            num_scalar_prefetch=0,
            grid=(num_row_blocks,),
            in_specs=in_specs,
            out_specs=out_specs,
        ),
        compiler_params=pltpu.CompilerParams(
            # Row blocks are independent candidates -> parallel (lets v7x's
            # two TensorCores split the work when num_row_blocks > 1).
            dimension_semantics=("parallel",),
        ),
    )(a_pre, snoise, s0, w_hs, w_musig, b_musig, w_rh, w_rs)


# ----------------------------------------------------------------------------
# DynamicsAgent forward pass (CEM planning) built around the kernel.
# ----------------------------------------------------------------------------
class DynamicsAgentPallas:
    def __init__(self, obs_shape, obs_depth, a_size, hyps, key,
                 discrete=False, num_row_blocks=1):
        self.obs_shape = obs_shape
        self.obs_depth = obs_depth
        self.a_size = a_size
        self.h_size = hyps["h_size"]
        self.s_size = hyps["s_size"]
        self.horizon = (hyps["plan_horizon"]
                        if hyps.get("plan_horizon") is not None
                        else hyps["horizon"])
        self.n_keep = hyps["k"]
        self.n_try = hyps["n_samples"]
        assert self.n_keep < self.n_try
        self.n_iters = hyps["n_cem_iters"]
        self.discrete = discrete
        # On v7x set num_row_blocks=2 so the two TensorCores each take half
        # the candidate rows; keep 1 on v5e/v6e so a single call fills the MXU.
        self.num_row_blocks = num_row_blocks

        obs_flat = 1
        for d in obs_shape:
            obs_flat *= d

        keys = jax.random.split(key, 10)

        def init(k, shape, fan_in):
            return (jax.random.normal(k, shape, jnp.float32)
                    / jnp.sqrt(jnp.float32(fan_in)))

        h, s, a = self.h_size, self.s_size, self.a_size
        fan = h + s + a
        w_h = init(keys[0], (h, h), fan)
        w_s = init(keys[1], (s, h), fan)
        self.w_a = init(keys[2], (a, h), fan)        # applied in the wrapper
        self.b_rnn = jnp.zeros((1, h), jnp.float32)  # folded into a_pre
        w_mu = init(keys[3], (h, s), h)
        w_sig = init(keys[4], (h, s), h)
        # Fused weights; bf16 MXU operands, f32 accumulation / elementwise.
        self.w_hs = jnp.concatenate([w_h, w_s], axis=0).astype(jnp.bfloat16)
        self.w_musig = jnp.concatenate([w_mu, w_sig], axis=1).astype(jnp.bfloat16)
        self.b_musig = jnp.zeros((1, 2 * s), jnp.float32)
        self.w_rh = init(keys[5], (1, h), h + s)     # reward head on [h|s]
        self.w_rs = init(keys[6], (1, s), h + s)
        self.b_rew = jnp.zeros((), jnp.float32)

        # TODO(synk): the real encoder is a conv net; a linear flatten-encoder
        # stands in here since the reference architecture is not provided.
        self.enc_w = init(keys[7], (obs_flat, s), obs_flat)
        self.enc_b = jnp.zeros((s,), jnp.float32)

        self._key = keys[8]          # advanced every forward() call
        self._plan_cache = {}

    # ------------------------------------------------------------------ plan
    def _make_plan_fn(self, act_fxn):
        horizon, n_try, n_keep = self.horizon, self.n_try, self.n_keep
        a_size, h_size, s_size = self.a_size, self.h_size, self.s_size

        def plan(obs, key):
            B = obs.shape[0]
            R = B * n_try
            obs_flat = obs.reshape(B, -1).astype(jnp.float32)
            s0_all = jnp.tanh(obs_flat @ self.enc_w + self.enc_b)    # (B, s)
            s0_rep = jnp.broadcast_to(
                s0_all[:, None, :], (B, n_try, s_size)).reshape(R, s_size)

            mus = jnp.zeros((B, horizon, a_size), jnp.float32)
            sigmas = jnp.ones((B, horizon, a_size), jnp.float32)

            for _ in range(self.n_iters):
                key, ka, ks = jax.random.split(key, 3)
                anoise = jax.random.normal(
                    ka, (B, horizon, n_try, a_size), jnp.float32)
                snoise = jax.random.normal(
                    ks, (horizon, B, n_try, s_size), jnp.float32
                ).reshape(horizon, R, s_size)

                # actions[t] = act_fxn(mu[t] + sigma[t] * randn)
                actions = act_fxn(mus[:, :, None, :]
                                  + sigmas[:, :, None, :] * anoise)
                # Precompute the lane-sparse (a_size=8) contribution outside
                # the kernel: a_pre = actions @ W_a + b_rnn  (lane-dense h).
                a_pre = (jnp.einsum("bhna,ak->bhnk", actions, self.w_a)
                         + self.b_rnn)
                a_pre = a_pre.transpose(1, 0, 2, 3).reshape(horizon, R, h_size)

                rew = rollout(a_pre, snoise, s0_rep,
                              self.w_hs, self.w_musig, self.b_musig,
                              self.w_rh, self.w_rs,
                              horizon=horizon, h_size=h_size, s_size=s_size,
                              num_row_blocks=self.num_row_blocks)
                rews = rew.reshape(B, n_try) + horizon * self.b_rew

                # CEM refit (per batch element): top-k, mean, unbiased std.
                _, top_idxs = jax.lax.top_k(rews, n_keep)            # (B, k)
                idx = jnp.broadcast_to(top_idxs[:, None, :, None],
                                       (B, horizon, n_keep, a_size))
                k_best = jnp.take_along_axis(actions, idx, axis=2)
                mus = jnp.mean(k_best, axis=2)
                sigmas = jnp.std(k_best, axis=2, ddof=1) + 1e-6      # torch std

            return act_fxn(mus[:, 0, :])

        return jax.jit(plan)

    # --------------------------------------------------------------- forward
    def forward(self, obs, act_fxn=_identity):
        """obs: (B, C, H, W) NCHW float array -> action (B, a_size)."""
        self._key, sub = jax.random.split(self._key)   # fresh noise per call
        fn = self._plan_cache.get(act_fxn)
        if fn is None:
            fn = self._make_plan_fn(act_fxn)
            self._plan_cache[act_fxn] = fn
        return fn(obs, sub)


# ----------------------------------------------------------------------------
if __name__ == "__main__":
    key = jax.random.PRNGKey(0)
    k_obs, k_agent = jax.random.split(key)

    obs_shape = (4, 16, 16)           # (C, H, W) after stacking (obs_depth=4)
    hyps = dict(
        action_repeat=3,
        h_size=128,
        s_size=128,
        plan_horizon=4,
        horizon=4,
        k=16,
        n_samples=128,
        n_cem_iters=2,
    )
    a_size = 8
    batch = 2

    agent = DynamicsAgentPallas(obs_shape, obs_depth=4, a_size=a_size,
                                hyps=hyps, key=k_agent)

    obs = jax.random.normal(k_obs, (batch,) + obs_shape, jnp.float32)  # NCHW
    action = agent.forward(obs)
    action = jax.block_until_ready(action)
    assert action.shape == (batch, a_size)
    assert jnp.all(jnp.isfinite(action))
    print("KERNEL_OK")
</pallas_src>

<mosaic_0001>
module attributes {stable_mosaic.version = 11 : i64} {
  func.func @_rollout_kernel(%arg0: i32, %arg1: memref<4x256x128xf32, #tpu.memory_space<vmem>>, %arg2: memref<4x256x128xf32, #tpu.memory_space<vmem>>, %arg3: memref<256x128xf32, #tpu.memory_space<vmem>>, %arg4: memref<256x128xbf16, #tpu.memory_space<vmem>>, %arg5: memref<128x256xbf16, #tpu.memory_space<vmem>>, %arg6: memref<1x256xf32, #tpu.memory_space<vmem>>, %arg7: memref<1x128xf32, #tpu.memory_space<vmem>>, %arg8: memref<1x128xf32, #tpu.memory_space<vmem>>, %arg9: memref<256x1xf32, #tpu.memory_space<vmem>>) attributes {dimension_semantics = [#tpu.dimension_semantics<parallel>], iteration_bounds = array<i64: 1>, scalar_prefetch = 0 : i64, scratch_operands = 0 : i64, tpu.core_type = #tpu.core_type<tc>, window_params = [{transform_indices = @transform_0, window_bounds = array<i64: 4, 256, 128>}, {transform_indices = @transform_1, window_bounds = array<i64: 4, 256, 128>}, {transform_indices = @transform_2, window_bounds = array<i64: 256, 128>}, {pipeline_mode = #tpu.pipeline_mode<synchronous>, transform_indices = @transform_3, window_bounds = array<i64: 256, 128>}, {pipeline_mode = #tpu.pipeline_mode<synchronous>, transform_indices = @transform_4, window_bounds = array<i64: 128, 256>}, {pipeline_mode = #tpu.pipeline_mode<synchronous>, transform_indices = @transform_5, window_bounds = array<i64: 1, 256>}, {pipeline_mode = #tpu.pipeline_mode<synchronous>, transform_indices = @transform_6, window_bounds = array<i64: 1, 128>}, {pipeline_mode = #tpu.pipeline_mode<synchronous>, transform_indices = @transform_7, window_bounds = array<i64: 1, 128>}, {transform_indices = @transform_8, window_bounds = array<i64: 256, 1>}]} {
    %c0 = arith.constant 0 : index
    %c0_0 = arith.constant 0 : index
    %0 = vector.load %arg4[%c0, %c0_0] : memref<256x128xbf16, #tpu.memory_space<vmem>>, vector<256x128xbf16>
    %c0_1 = arith.constant 0 : index
    %c0_2 = arith.constant 0 : index
    %1 = vector.load %arg5[%c0_1, %c0_2] : memref<128x256xbf16, #tpu.memory_space<vmem>>, vector<128x256xbf16>
    %c0_3 = arith.constant 0 : index
    %c0_4 = arith.constant 0 : index
    %2 = vector.load %arg6[%c0_3, %c0_4] : memref<1x256xf32, #tpu.memory_space<vmem>>, vector<1x256xf32>
    %c0_5 = arith.constant 0 : index
    %c0_6 = arith.constant 0 : index
    %3 = vector.load %arg7[%c0_5, %c0_6] : memref<1x128xf32, #tpu.memory_space<vmem>>, vector<1x128xf32>
    %c0_7 = arith.constant 0 : index
    %c0_8 = arith.constant 0 : index
    %4 = vector.load %arg8[%c0_7, %c0_8] : memref<1x128xf32, #tpu.memory_space<vmem>>, vector<1x128xf32>
    %cst = arith.constant 0.000000e+00 : f32
    %5 = vector.broadcast %cst : f32 to vector<256x128xf32>
    %c0_9 = arith.constant 0 : index
    %c0_10 = arith.constant 0 : index
    %6 = vector.load %arg3[%c0_9, %c0_10] : memref<256x128xf32, #tpu.memory_space<vmem>>, vector<256x128xf32>
    %cst_11 = arith.constant 0.000000e+00 : f32
    %7 = vector.broadcast %cst_11 : f32 to vector<256x1xf32>
    %8 = tpu.concatenate %5, %6 in 1 : vector<256x128xf32>, vector<256x128xf32> -> vector<256x256xf32>
    %9 = arith.truncf %8 : vector<256x256xf32> to vector<256x256xbf16>
    %cst_12 = arith.constant dense<0.000000e+00> : vector<256x128xf32>
    %10 = tpu.matmul %9, %0, %cst_12 {dimension_numbers = #tpu.dot_dimension_numbers<[1], [0], [0], [1], [0, 0, 1, 1], [], []>} : vector<256x256xbf16>, vector<256x128xbf16>, vector<256x128xf32> -> vector<256x128xf32>
    %c0_13 = arith.constant 0 : index
    %c0_14 = arith.constant 0 : index
    %c0_15 = arith.constant 0 : index
    %11 = vector.load %arg1[%c0_13, %c0_14, %c0_15] : memref<4x256x128xf32, #tpu.memory_space<vmem>>, vector<1x256x128xf32>
    %12 = vector.shape_cast %11 : vector<1x256x128xf32> to vector<256x128xf32>
    %13 = arith.addf %10, %12 : vector<256x128xf32>
    %14 = math.tanh %13 : vector<256x128xf32>
    %15 = arith.truncf %14 : vector<256x128xf32> to vector<256x128xbf16>
    %cst_16 = arith.constant dense<0.000000e+00> : vector<256x256xf32>
    %16 = tpu.matmul %15, %1, %cst_16 {dimension_numbers = #tpu.dot_dimension_numbers<[1], [0], [0], [1], [0, 0, 1, 1], [], []>} : vector<256x128xbf16>, vector<128x256xbf16>, vector<256x256xf32> -> vector<256x256xf32>
    %17 = vector.broadcast %2 : vector<1x256xf32> to vector<256x256xf32>
    %18 = arith.addf %16, %17 : vector<256x256xf32>
    %19 = vector.extract_strided_slice %18 {offsets = [0, 0], sizes = [256, 128], strides = [1, 1]} : vector<256x256xf32> to vector<256x128xf32>
    %20 = vector.extract_strided_slice %18 {offsets = [0, 128], sizes = [256, 128], strides = [1, 1]} : vector<256x256xf32> to vector<256x128xf32>
    %cst_17 = arith.constant 0.000000e+00 : f32
    %21 = vector.broadcast %cst_17 : f32 to vector<256x128xf32>
    %22 = arith.maximumf %20, %21 : vector<256x128xf32>
    %23 = vector.broadcast %cst_17 : f32 to vector<256x128xf32>
    %24 = arith.subf %20, %23 : vector<256x128xf32>
    %25 = arith.cmpf one, %24, %24 : vector<256x128xf32>
    %26 = vector.broadcast %cst_17 : f32 to vector<256x128xf32>
    %27 = arith.addf %20, %26 : vector<256x128xf32>
    %28 = math.absf %24 : vector<256x128xf32>
    %cst_18 = arith.constant 0.000000e+00 : f32
    %29 = vector.broadcast %cst_18 : f32 to vector<256x128xf32>
    %30 = arith.subf %29, %28 : vector<256x128xf32>
    %31 = math.exp %30 : vector<256x128xf32>
    %32 = math.log1p %31 : vector<256x128xf32>
    %33 = arith.addf %22, %32 : vector<256x128xf32>
    %34 = arith.select %25, %27, %33 : vector<256x128xi1>, vector<256x128xf32>
    %c0_19 = arith.constant 0 : index
    %c0_20 = arith.constant 0 : index
    %c0_21 = arith.constant 0 : index
    %35 = vector.load %arg2[%c0_19, %c0_20, %c0_21] : memref<4x256x128xf32, #tpu.memory_space<vmem>>, vector<1x256x128xf32>
    %36 = vector.shape_cast %35 : vector<1x256x128xf32> to vector<256x128xf32>
    %37 = arith.mulf %34, %36 : vector<256x128xf32>
    %38 = arith.addf %19, %37 : vector<256x128xf32>
    %39 = vector.broadcast %3 : vector<1x128xf32> to vector<256x128xf32>
    %40 = arith.mulf %14, %39 : vector<256x128xf32>
    %cst_22 = arith.constant dense<0.000000e+00> : vector<256xf32>
    %41 = vector.multi_reduction <add>, %40, %cst_22 [1] : vector<256x128xf32> to vector<256xf32>
    %42 = vector.shape_cast %41 : vector<256xf32> to vector<256x1xf32>
    %43 = vector.broadcast %4 : vector<1x128xf32> to vector<256x128xf32>
    %44 = arith.mulf %38, %43 : vector<256x128xf32>
    %cst_23 = arith.constant dense<0.000000e+00> : vector<256xf32>
    %45 = vector.multi_reduction <add>, %44, %cst_23 [1] : vector<256x128xf32> to vector<256xf32>
    %46 = vector.shape_cast %45 : vector<256xf32> to vector<256x1xf32>
    %47 = arith.addf %42, %46 : vector<256x1xf32>
    %48 = arith.addf %7, %47 : vector<256x1xf32>
    %49 = tpu.concatenate %14, %38 in 1 : vector<256x128xf32>, vector<256x128xf32> -> vector<256x256xf32>
    %50 = arith.truncf %49 : vector<256x256xf32> to vector<256x256xbf16>
    %cst_24 = arith.constant dense<0.000000e+00> : vector<256x128xf32>
    %51 = tpu.matmul %50, %0, %cst_24 {dimension_numbers = #tpu.dot_dimension_numbers<[1], [0], [0], [1], [0, 0, 1, 1], [], []>} : vector<256x256xbf16>, vector<256x128xbf16>, vector<256x128xf32> -> vector<256x128xf32>
    %c1 = arith.constant 1 : index
    %c0_25 = arith.constant 0 : index
    %c0_26 = arith.constant 0 : index
    %52 = vector.load %arg1[%c1, %c0_25, %c0_26] : memref<4x256x128xf32, #tpu.memory_space<vmem>>, vector<1x256x128xf32>
    %53 = vector.shape_cast %52 : vector<1x256x128xf32> to vector<256x128xf32>
    %54 = arith.addf %51, %53 : vector<256x128xf32>
    %55 = math.tanh %54 : vector<256x128xf32>
    %56 = arith.truncf %55 : vector<256x128xf32> to vector<256x128xbf16>
    %cst_27 = arith.constant dense<0.000000e+00> : vector<256x256xf32>
    %57 = tpu.matmul %56, %1, %cst_27 {dimension_numbers = #tpu.dot_dimension_numbers<[1], [0], [0], [1], [0, 0, 1, 1], [], []>} : vector<256x128xbf16>, vector<128x256xbf16>, vector<256x256xf32> -> vector<256x256xf32>
    %58 = vector.broadcast %2 : vector<1x256xf32> to vector<256x256xf32>
    %59 = arith.addf %57, %58 : vector<256x256xf32>
    %60 = vector.extract_strided_slice %59 {offsets = [0, 0], sizes = [256, 128], strides = [1, 1]} : vector<256x256xf32> to vector<256x128xf32>
    %61 = vector.extract_strided_slice %59 {offsets = [0, 128], sizes = [256, 128], strides = [1, 1]} : vector<256x256xf32> to vector<256x128xf32>
    %cst_28 = arith.constant 0.000000e+00 : f32
    %62 = vector.broadcast %cst_28 : f32 to vector<256x128xf32>
    %63 = arith.maximumf %61, %62 : vector<256x128xf32>
    %64 = vector.broadcast %cst_28 : f32 to vector<256x128xf32>
    %65 = arith.subf %61, %64 : vector<256x128xf32>
    %66 = arith.cmpf one, %65, %65 : vector<256x128xf32>
    %67 = vector.broadcast %cst_28 : f32 to vector<256x128xf32>
    %68 = arith.addf %61, %67 : vector<256x128xf32>
    %69 = math.absf %65 : vector<256x128xf32>
    %cst_29 = arith.constant 0.000000e+00 : f32
    %70 = vector.broadcast %cst_29 : f32 to vector<256x128xf32>
    %71 = arith.subf %70, %69 : vector<256x128xf32>
    %72 = math.exp %71 : vector<256x128xf32>
    %73 = math.log1p %72 : vector<256x128xf32>
    %74 = arith.addf %63, %73 : vector<256x128xf32>
    %75 = arith.select %66, %68, %74 : vector<256x128xi1>, vector<256x128xf32>
    %c1_30 = arith.constant 1 : index
    %c0_31 = arith.constant 0 : index
    %c0_32 = arith.constant 0 : index
    %76 = vector.load %arg2[%c1_30, %c0_31, %c0_32] : memref<4x256x128xf32, #tpu.memory_space<vmem>>, vector<1x256x128xf32>
    %77 = vector.shape_cast %76 : vector<1x256x128xf32> to vector<256x128xf32>
    %78 = arith.mulf %75, %77 : vector<256x128xf32>
    %79 = arith.addf %60, %78 : vector<256x128xf32>
    %80 = vector.broadcast %3 : vector<1x128xf32> to vector<256x128xf32>
    %81 = arith.mulf %55, %80 : vector<256x128xf32>
    %cst_33 = arith.constant dense<0.000000e+00> : vector<256xf32>
    %82 = vector.multi_reduction <add>, %81, %cst_33 [1] : vector<256x128xf32> to vector<256xf32>
    %83 = vector.shape_cast %82 : vector<256xf32> to vector<256x1xf32>
    %84 = vector.broadcast %4 : vector<1x128xf32> to vector<256x128xf32>
    %85 = arith.mulf %79, %84 : vector<256x128xf32>
    %cst_34 = arith.constant dense<0.000000e+00> : vector<256xf32>
    %86 = vector.multi_reduction <add>, %85, %cst_34 [1] : vector<256x128xf32> to vector<256xf32>
    %87 = vector.shape_cast %86 : vector<256xf32> to vector<256x1xf32>
    %88 = arith.addf %83, %87 : vector<256x1xf32>
    %89 = arith.addf %48, %88 : vector<256x1xf32>
    %90 = tpu.concatenate %55, %79 in 1 : vector<256x128xf32>, vector<256x128xf32> -> vector<256x256xf32>
    %91 = arith.truncf %90 : vector<256x256xf32> to vector<256x256xbf16>
    %cst_35 = arith.constant dense<0.000000e+00> : vector<256x128xf32>
    %92 = tpu.matmul %91, %0, %cst_35 {dimension_numbers = #tpu.dot_dimension_numbers<[1], [0], [0], [1], [0, 0, 1, 1], [], []>} : vector<256x256xbf16>, vector<256x128xbf16>, vector<256x128xf32> -> vector<256x128xf32>
    %c2 = arith.constant 2 : index
    %c0_36 = arith.constant 0 : index
    %c0_37 = arith.constant 0 : index
    %93 = vector.load %arg1[%c2, %c0_36, %c0_37] : memref<4x256x128xf32, #tpu.memory_space<vmem>>, vector<1x256x128xf32>
    %94 = vector.shape_cast %93 : vector<1x256x128xf32> to vector<256x128xf32>
    %95 = arith.addf %92, %94 : vector<256x128xf32>
    %96 = math.tanh %95 : vector<256x128xf32>
    %97 = arith.truncf %96 : vector<256x128xf32> to vector<256x128xbf16>
    %cst_38 = arith.constant dense<0.000000e+00> : vector<256x256xf32>
    %98 = tpu.matmul %97, %1, %cst_38 {dimension_numbers = #tpu.dot_dimension_numbers<[1], [0], [0], [1], [0, 0, 1, 1], [], []>} : vector<256x128xbf16>, vector<128x256xbf16>, vector<256x256xf32> -> vector<256x256xf32>
    %99 = vector.broadcast %2 : vector<1x256xf32> to vector<256x256xf32>
    %100 = arith.addf %98, %99 : vector<256x256xf32>
    %101 = vector.extract_strided_slice %100 {offsets = [0, 0], sizes = [256, 128], strides = [1, 1]} : vector<256x256xf32> to vector<256x128xf32>
    %102 = vector.extract_strided_slice %100 {offsets = [0, 128], sizes = [256, 128], strides = [1, 1]} : vector<256x256xf32> to vector<256x128xf32>
    %cst_39 = arith.constant 0.000000e+00 : f32
    %103 = vector.broadcast %cst_39 : f32 to vector<256x128xf32>
    %104 = arith.maximumf %102, %103 : vector<256x128xf32>
    %105 = vector.broadcast %cst_39 : f32 to vector<256x128xf32>
    %106 = arith.subf %102, %105 : vector<256x128xf32>
    %107 = arith.cmpf one, %106, %106 : vector<256x128xf32>
    %108 = vector.broadcast %cst_39 : f32 to vector<256x128xf32>
    %109 = arith.addf %102, %108 : vector<256x128xf32>
    %110 = math.absf %106 : vector<256x128xf32>
    %cst_40 = arith.constant 0.000000e+00 : f32
    %111 = vector.broadcast %cst_40 : f32 to vector<256x128xf32>
    %112 = arith.subf %111, %110 : vector<256x128xf32>
    %113 = math.exp %112 : vector<256x128xf32>
    %114 = math.log1p %113 : vector<256x128xf32>
    %115 = arith.addf %104, %114 : vector<256x128xf32>
    %116 = arith.select %107, %109, %115 : vector<256x128xi1>, vector<256x128xf32>
    %c2_41 = arith.constant 2 : index
    %c0_42 = arith.constant 0 : index
    %c0_43 = arith.constant 0 : index
    %117 = vector.load %arg2[%c2_41, %c0_42, %c0_43] : memref<4x256x128xf32, #tpu.memory_space<vmem>>, vector<1x256x128xf32>
    %118 = vector.shape_cast %117 : vector<1x256x128xf32> to vector<256x128xf32>
    %119 = arith.mulf %116, %118 : vector<256x128xf32>
    %120 = arith.addf %101, %119 : vector<256x128xf32>
    %121 = vector.broadcast %3 : vector<1x128xf32> to vector<256x128xf32>
    %122 = arith.mulf %96, %121 : vector<256x128xf32>
    %cst_44 = arith.constant dense<0.000000e+00> : vector<256xf32>
    %123 = vector.multi_reduction <add>, %122, %cst_44 [1] : vector<256x128xf32> to vector<256xf32>
    %124 = vector.shape_cast %123 : vector<256xf32> to vector<256x1xf32>
    %125 = vector.broadcast %4 : vector<1x128xf32> to vector<256x128xf32>
    %126 = arith.mulf %120, %125 : vector<256x128xf32>
    %cst_45 = arith.constant dense<0.000000e+00> : vector<256xf32>
    %127 = vector.multi_reduction <add>, %126, %cst_45 [1] : vector<256x128xf32> to vector<256xf32>
    %128 = vector.shape_cast %127 : vector<256xf32> to vector<256x1xf32>
    %129 = arith.addf %124, %128 : vector<256x1xf32>
    %130 = arith.addf %89, %129 : vector<256x1xf32>
    %131 = tpu.concatenate %96, %120 in 1 : vector<256x128xf32>, vector<256x128xf32> -> vector<256x256xf32>
    %132 = arith.truncf %131 : vector<256x256xf32> to vector<256x256xbf16>
    %cst_46 = arith.constant dense<0.000000e+00> : vector<256x128xf32>
    %133 = tpu.matmul %132, %0, %cst_46 {dimension_numbers = #tpu.dot_dimension_numbers<[1], [0], [0], [1], [0, 0, 1, 1], [], []>} : vector<256x256xbf16>, vector<256x128xbf16>, vector<256x128xf32> -> vector<256x128xf32>
    %c3 = arith.constant 3 : index
    %c0_47 = arith.constant 0 : index
    %c0_48 = arith.constant 0 : index
    %134 = vector.load %arg1[%c3, %c0_47, %c0_48] : memref<4x256x128xf32, #tpu.memory_space<vmem>>, vector<1x256x128xf32>
    %135 = vector.shape_cast %134 : vector<1x256x128xf32> to vector<256x128xf32>
    %136 = arith.addf %133, %135 : vector<256x128xf32>
    %137 = math.tanh %136 : vector<256x128xf32>
    %138 = arith.truncf %137 : vector<256x128xf32> to vector<256x128xbf16>
    %cst_49 = arith.constant dense<0.000000e+00> : vector<256x256xf32>
    %139 = tpu.matmul %138, %1, %cst_49 {dimension_numbers = #tpu.dot_dimension_numbers<[1], [0], [0], [1], [0, 0, 1, 1], [], []>} : vector<256x128xbf16>, vector<128x256xbf16>, vector<256x256xf32> -> vector<256x256xf32>
    %140 = vector.broadcast %2 : vector<1x256xf32> to vector<256x256xf32>
    %141 = arith.addf %139, %140 : vector<256x256xf32>
    %142 = vector.extract_strided_slice %141 {offsets = [0, 0], sizes = [256, 128], strides = [1, 1]} : vector<256x256xf32> to vector<256x128xf32>
    %143 = vector.extract_strided_slice %141 {offsets = [0, 128], sizes = [256, 128], strides = [1, 1]} : vector<256x256xf32> to vector<256x128xf32>
    %cst_50 = arith.constant 0.000000e+00 : f32
    %144 = vector.broadcast %cst_50 : f32 to vector<256x128xf32>
    %145 = arith.maximumf %143, %144 : vector<256x128xf32>
    %146 = vector.broadcast %cst_50 : f32 to vector<256x128xf32>
    %147 = arith.subf %143, %146 : vector<256x128xf32>
    %148 = arith.cmpf one, %147, %147 : vector<256x128xf32>
    %149 = vector.broadcast %cst_50 : f32 to vector<256x128xf32>
    %150 = arith.addf %143, %149 : vector<256x128xf32>
    %151 = math.absf %147 : vector<256x128xf32>
    %cst_51 = arith.constant 0.000000e+00 : f32
    %152 = vector.broadcast %cst_51 : f32 to vector<256x128xf32>
    %153 = arith.subf %152, %151 : vector<256x128xf32>
    %154 = math.exp %153 : vector<256x128xf32>
    %155 = math.log1p %154 : vector<256x128xf32>
    %156 = arith.addf %145, %155 : vector<256x128xf32>
    %157 = arith.select %148, %150, %156 : vector<256x128xi1>, vector<256x128xf32>
    %c3_52 = arith.constant 3 : index
    %c0_53 = arith.constant 0 : index
    %c0_54 = arith.constant 0 : index
    %158 = vector.load %arg2[%c3_52, %c0_53, %c0_54] : memref<4x256x128xf32, #tpu.memory_space<vmem>>, vector<1x256x128xf32>
    %159 = vector.shape_cast %158 : vector<1x256x128xf32> to vector<256x128xf32>
    %160 = arith.mulf %157, %159 : vector<256x128xf32>
    %161 = arith.addf %142, %160 : vector<256x128xf32>
    %162 = vector.broadcast %3 : vector<1x128xf32> to vector<256x128xf32>
    %163 = arith.mulf %137, %162 : vector<256x128xf32>
    %cst_55 = arith.constant dense<0.000000e+00> : vector<256xf32>
    %164 = vector.multi_reduction <add>, %163, %cst_55 [1] : vector<256x128xf32> to vector<256xf32>
    %165 = vector.shape_cast %164 : vector<256xf32> to vector<256x1xf32>
    %166 = vector.broadcast %4 : vector<1x128xf32> to vector<256x128xf32>
    %167 = arith.mulf %161, %166 : vector<256x128xf32>
    %cst_56 = arith.constant dense<0.000000e+00> : vector<256xf32>
    %168 = vector.multi_reduction <add>, %167, %cst_56 [1] : vector<256x128xf32> to vector<256xf32>
    %169 = vector.shape_cast %168 : vector<256xf32> to vector<256x1xf32>
    %170 = arith.addf %165, %169 : vector<256x1xf32>
    %171 = arith.addf %130, %170 : vector<256x1xf32>
    %c0_57 = arith.constant 0 : index
    %c0_58 = arith.constant 0 : index
    %172 = vector.load %arg9[%c0_57, %c0_58] : memref<256x1xf32, #tpu.memory_space<vmem>>, vector<256x1xf32>
    tpu.vector_store %arg9[%c0_57, %c0_58], %171 {strides = array<i32>} : memref<256x1xf32, #tpu.memory_space<vmem>>, vector<256x1xf32>,
    return
  }
  func.func @transform_0(%arg0: i32) -> (i32, i32, i32) {
    %c0_i32 = arith.constant 0 : i32
    %c0_i32_0 = arith.constant 0 : i32
    %c0_i32_1 = arith.constant 0 : i32
    return %c0_i32, %arg0, %c0_i32_0 : i32, i32, i32
  }
  func.func @transform_1(%arg0: i32) -> (i32, i32, i32) {
    %c0_i32 = arith.constant 0 : i32
    %c0_i32_0 = arith.constant 0 : i32
    %c0_i32_1 = arith.constant 0 : i32
    return %c0_i32, %arg0, %c0_i32_0 : i32, i32, i32
  }
  func.func @transform_2(%arg0: i32) -> (i32, i32) {
    %c0_i32 = arith.constant 0 : i32
    %c0_i32_0 = arith.constant 0 : i32
    return %arg0, %c0_i32 : i32, i32
  }
  func.func @transform_3(%arg0: i32) -> (i32, i32) {
    %c0_i32 = arith.constant 0 : i32
    %c0_i32_0 = arith.constant 0 : i32
    %c0_i32_1 = arith.constant 0 : i32
    return %c0_i32, %c0_i32_0 : i32, i32
  }
  func.func @transform_4(%arg0: i32) -> (i32, i32) {
    %c0_i32 = arith.constant 0 : i32
    %c0_i32_0 = arith.constant 0 : i32
    %c0_i32_1 = arith.constant 0 : i32
    return %c0_i32, %c0_i32_0 : i32, i32
  }
  func.func @transform_5(%arg0: i32) -> (i32, i32) {
    %c0_i32 = arith.constant 0 : i32
    %c0_i32_0 = arith.constant 0 : i32
    %c0_i32_1 = arith.constant 0 : i32
    return %c0_i32, %c0_i32_0 : i32, i32
  }
  func.func @transform_6(%arg0: i32) -> (i32, i32) {
    %c0_i32 = arith.constant 0 : i32
    %c0_i32_0 = arith.constant 0 : i32
    %c0_i32_1 = arith.constant 0 : i32
    return %c0_i32, %c0_i32_0 : i32, i32
  }
  func.func @transform_7(%arg0: i32) -> (i32, i32) {
    %c0_i32 = arith.constant 0 : i32
    %c0_i32_0 = arith.constant 0 : i32
    %c0_i32_1 = arith.constant 0 : i32
    return %c0_i32, %c0_i32_0 : i32, i32
  }
  func.func @transform_8(%arg0: i32) -> (i32, i32) {
    %c0_i32 = arith.constant 0 : i32
    %c0_i32_0 = arith.constant 0 : i32
    return %arg0, %c0_i32 : i32, i32
  }
}

</mosaic_0001>

<llo_original>
// kernel: plan.2
$region0: #{plan.2}
  #allocation0 [shape = 'u32[]', space=smem, size = 0x4, offset = 0x4, fixed_abs, tag = 'smem constant byte address 0x4 - core index']
  #allocation1 [shape = 'u32[144,128]{1,0:T(1,128)}', space=vmem, size = 0x12000, scoped, tag = 'internal scratch']
  %s0 = inlined_call_operand.vmem [shape: f32[4,256,128], index: 0, kind: input, shape index: {}]
  %s1 = inlined_call_operand.vmem [shape: f32[4,256,128], index: 1, kind: input, shape index: {}]
  %s2 = inlined_call_operand.vmem [shape: f32[256,128], index: 2, kind: input, shape index: {}]
  %s3 = inlined_call_operand.vmem [shape: bf16[256,128], index: 3, kind: input, shape index: {}]
  %s4 = inlined_call_operand.vmem [shape: bf16[128,256], index: 4, kind: input, shape index: {}]
  %s5 = inlined_call_operand.vmem [shape: f32[1,256], index: 5, kind: input, shape index: {}]
  %s6 = inlined_call_operand.vmem [shape: f32[1,128], index: 6, kind: input, shape index: {}]
  %s7 = inlined_call_operand.vmem [shape: f32[1,128], index: 7, kind: input, shape index: {}]
  %s8 = inlined_call_operand.vmem [shape: f32[256,1], index: 8, kind: output, shape index: {}]
  %s9 = sld [smem:[#allocation0]]
  $region42: #{plan.2} parent=0
    _
  %s11 = ssub.s32 1, %s9
  %s12 = scalar_select 0, %s11, %s9
  // Predicated region
  $region2: #{plan.2} parent=0 // pred_check
    _
  $region3: #{plan.2} parent=0 // pred_check_branch
    %14 = sbr.rel (0) target = $region5
  $region4: #{plan.2} parent=0 // pred_region
    _
  $region5: #{plan.2} parent=0 // pred_fallthru
    _
  // Predicated region
  $region6: #{plan.2} parent=0 // pred_check
    _
  $region7: #{plan.2} parent=0 // pred_check_branch
    %16 = sbr.rel (0) target = $region9
  $region8: #{plan.2} parent=0 // pred_region
    _
  $region9: #{plan.2} parent=0 // pred_fallthru
    _
  // Predicated region
  $region10: #{plan.2} parent=0 // pred_check
    _
  $region11: #{plan.2} parent=0 // pred_check_branch
    %18 = sbr.rel (0) target = $region13
  $region12: #{plan.2} parent=0 // pred_region
    _
  $region13: #{plan.2} parent=0 // pred_fallthru
    _
  // Predicated region
  $region14: #{plan.2} parent=0 // pred_check
    _
  $region15: #{plan.2} parent=0 // pred_check_branch
    %20 = sbr.rel (0) target = $region17
  $region16: #{plan.2} parent=0 // pred_region
    _
  $region17: #{plan.2} parent=0 // pred_fallthru
    _
  // Predicated region
  $region18: #{plan.2} parent=0 // pred_check
    _
  $region19: #{plan.2} parent=0 // pred_check_branch
    %22 = sbr.rel (0) target = $region21
  $region20: #{plan.2} parent=0 // pred_region
    _
  $region21: #{plan.2} parent=0 // pred_fallthru
    _
  // Predicated region
  $region22: #{plan.2} parent=0 // pred_check
    _
  $region23: #{plan.2} parent=0 // pred_check_branch
    %24 = sbr.rel (0) target = $region25
  $region24: #{plan.2} parent=0 // pred_region
    _
  $region25: #{plan.2} parent=0 // pred_fallthru
    _
  // Predicated region
  $region26: #{plan.2} parent=0 // pred_check
    _
  $region27: #{plan.2} parent=0 // pred_check_branch
    %26 = sbr.rel (0) target = $region29
  $region28: #{plan.2} parent=0 // pred_region
    _
  $region29: #{plan.2} parent=0 // pred_fallthru
    _
  // Predicated region
  $region30: #{plan.2} parent=0 // pred_check
    _
  $region31: #{plan.2} parent=0 // pred_check_branch
    %28 = sbr.rel (0) target = $region33
  $region32: #{plan.2} parent=0 // pred_region
    _
  $region33: #{plan.2} parent=0 // pred_fallthru
    _
  %v30 = vld [vmem:[%s3] sm:$0xf]
  %v31 = vld [vmem:[%s3 + $0x4] sm:$0xf]
  %v32 = vld [vmem:[%s3 + $0x8] sm:$0xf]
  %v33 = vld [vmem:[%s3 + $0xc] sm:$0xf]
  %v34 = vld [vmem:[%s3 + $0x10] sm:$0xf]
  %v35 = vld [vmem:[%s3 + $0x14] sm:$0xf]
  %v36 = vld [vmem:[%s3 + $0x18] sm:$0xf]
  %v37 = vld [vmem:[%s3 + $0x1c] sm:$0xf]
  %v38 = vld [vmem:[%s3 + $0x20] sm:$0xf]
  %v39 = vld [vmem:[%s3 + $0x24] sm:$0xf]
  %v40 = vld [vmem:[%s3 + $0x28] sm:$0xf]
  %v41 = vld [vmem:[%s3 + $0x2c] sm:$0xf]
  %v42 = vld [vmem:[%s3 + $0x30] sm:$0xf]
  %v43 = vld [vmem:[%s3 + $0x34] sm:$0xf]
  %v44 = vld [vmem:[%s3 + $0x38] sm:$0xf]
  %v45 = vld [vmem:[%s3 + $0x3c] sm:$0xf]
  %v46 = vld [vmem:[%s3 + $0x40] sm:$0xf]
  %v47 = vld [vmem:[%s3 + $0x44] sm:$0xf]
  %v48 = vld [vmem:[%s3 + $0x48] sm:$0xf]
  %v49 = vld [vmem:[%s3 + $0x4c] sm:$0xf]
  %v50 = vld [vmem:[%s3 + $0x50] sm:$0xf]
  %v51 = vld [vmem:[%s3 + $0x54] sm:$0xf]
  %v52 = vld [vmem:[%s3 + $0x58] sm:$0xf]
  %v53 = vld [vmem:[%s3 + $0x5c] sm:$0xf]
  %v54 = vld [vmem:[%s3 + $0x60] sm:$0xf]
  %v55 = vld [vmem:[%s3 + $0x64] sm:$0xf]
  %v56 = vld [vmem:[%s3 + $0x68] sm:$0xf]
  %v57 = vld [vmem:[%s3 + $0x6c] sm:$0xf]
  %v58 = vld [vmem:[%s3 + $0x70] sm:$0xf]
  %v59 = vld [vmem:[%s3 + $0x74] sm:$0xf]
  %v60 = vld [vmem:[%s3 + $0x78] sm:$0xf]
  %v61 = vld [vmem:[%s3 + $0x7c] sm:$0xf]
  %v62 = vld [vmem:[%s4] sm:$0xff]
  %v63 = vld [vmem:[%s4 + $0x8] sm:$0xff]
  %v64 = vld [vmem:[%s4 + $0x10] sm:$0xff]
  %v65 = vld [vmem:[%s4 + $0x18] sm:$0xff]
  %v66 = vld [vmem:[%s4 + $0x20] sm:$0xff]
  %v67 = vld [vmem:[%s4 + $0x28] sm:$0xff]
  %v68 = vld [vmem:[%s4 + $0x30] sm:$0xff]
  %v69 = vld [vmem:[%s4 + $0x38] sm:$0xff]
  %v70 = vld [vmem:[%s4 + $0x40] sm:$0xff]
  %v71 = vld [vmem:[%s4 + $0x48] sm:$0xff]
  %v72 = vld [vmem:[%s4 + $0x50] sm:$0xff]
  %v73 = vld [vmem:[%s4 + $0x58] sm:$0xff]
  %v74 = vld [vmem:[%s4 + $0x60] sm:$0xff]
  %v75 = vld [vmem:[%s4 + $0x68] sm:$0xff]
  %v76 = vld [vmem:[%s4 + $0x70] sm:$0xff]
  %v77 = vld [vmem:[%s4 + $0x78] sm:$0xff]
  %v78 = vld [vmem:[%s5] sm:$0x3]
  %v79 = vld [vmem:[%s6] sm:$0x1]
  %v80 = vld [vmem:[%s7] sm:$0x1]
  %v81 = vld [vmem:[%s2] sm:$0xff]
  %v82 = vld [vmem:[%s2 + $0x8] sm:$0xff]
  %v83 = vld [vmem:[%s2 + $0x10] sm:$0xff]
  %v84 = vld [vmem:[%s2 + $0x18] sm:$0xff]
  %v85 = vld [vmem:[%s2 + $0x20] sm:$0xff]
  %v86 = vld [vmem:[%s2 + $0x28] sm:$0xff]
  %v87 = vld [vmem:[%s2 + $0x30] sm:$0xff]
  %v88 = vld [vmem:[%s2 + $0x38] sm:$0xff]
  %v89 = vld [vmem:[%s2 + $0x40] sm:$0xff]
  %v90 = vld [vmem:[%s2 + $0x48] sm:$0xff]
  %v91 = vld [vmem:[%s2 + $0x50] sm:$0xff]
  %v92 = vld [vmem:[%s2 + $0x58] sm:$0xff]
  %v93 = vld [vmem:[%s2 + $0x60] sm:$0xff]
  %v94 = vld [vmem:[%s2 + $0x68] sm:$0xff]
  %v95 = vld [vmem:[%s2 + $0x70] sm:$0xff]
  %v96 = vld [vmem:[%s2 + $0x78] sm:$0xff]
  %v97 = vld [vmem:[%s2 + $0x80] sm:$0xff]
  %v98 = vld [vmem:[%s2 + $0x88] sm:$0xff]
  %v99 = vld [vmem:[%s2 + $0x90] sm:$0xff]
  %v100 = vld [vmem:[%s2 + $0x98] sm:$0xff]
  %v101 = vld [vmem:[%s2 + $0xa0] sm:$0xff]
  %v102 = vld [vmem:[%s2 + $0xa8] sm:$0xff]
  %v103 = vld [vmem:[%s2 + $0xb0] sm:$0xff]
  %v104 = vld [vmem:[%s2 + $0xb8] sm:$0xff]
  %v105 = vld [vmem:[%s2 + $0xc0] sm:$0xff]
  %v106 = vld [vmem:[%s2 + $0xc8] sm:$0xff]
  %v107 = vld [vmem:[%s2 + $0xd0] sm:$0xff]
  %v108 = vld [vmem:[%s2 + $0xd8] sm:$0xff]
  %v109 = vld [vmem:[%s2 + $0xe0] sm:$0xff]
  %v110 = vld [vmem:[%s2 + $0xe8] sm:$0xff]
  %v111 = vld [vmem:[%s2 + $0xf0] sm:$0xff]
  %v112 = vld [vmem:[%s2 + $0xf8] sm:$0xff]
  %v113 = vpack.c.bf16 0.0, 0.0
  %v114 = vpack.c.bf16 %v82, %v81
  %v115 = vpack.c.bf16 %v84, %v83
  %v116 = vpack.c.bf16 %v86, %v85
  %v117 = vpack.c.bf16 %v88, %v87
  %v118 = vpack.c.bf16 %v90, %v89
  %v119 = vpack.c.bf16 %v92, %v91
  %v120 = vpack.c.bf16 %v94, %v93
  %v121 = vpack.c.bf16 %v96, %v95
  %v122 = vpack.c.bf16 %v98, %v97
  %v123 = vpack.c.bf16 %v100, %v99
  %v124 = vpack.c.bf16 %v102, %v101
  %v125 = vpack.c.bf16 %v104, %v103
  %v126 = vpack.c.bf16 %v106, %v105
  %v127 = vpack.c.bf16 %v108, %v107
  %v128 = vpack.c.bf16 %v110, %v109
  %v129 = vpack.c.bf16 %v112, %v111
  %v130 = vld [vmem:[%s0] sm:$0xff]
  %v131 = vld [vmem:[%s0 + $0x8] sm:$0xff]
  %v132 = vld [vmem:[%s0 + $0x10] sm:$0xff]
  %v133 = vld [vmem:[%s0 + $0x18] sm:$0xff]
  %v134 = vld [vmem:[%s0 + $0x20] sm:$0xff]
  %v135 = vld [vmem:[%s0 + $0x28] sm:$0xff]
  %v136 = vld [vmem:[%s0 + $0x30] sm:$0xff]
  %v137 = vld [vmem:[%s0 + $0x38] sm:$0xff]
  %v138 = vld [vmem:[%s0 + $0x40] sm:$0xff]
  %v139 = vld [vmem:[%s0 + $0x48] sm:$0xff]
  %v140 = vld [vmem:[%s0 + $0x50] sm:$0xff]
  %v141 = vld [vmem:[%s0 + $0x58] sm:$0xff]
  %v142 = vld [vmem:[%s0 + $0x60] sm:$0xff]
  %v143 = vld [vmem:[%s0 + $0x68] sm:$0xff]
  %v144 = vld [vmem:[%s0 + $0x70] sm:$0xff]
  %v145 = vld [vmem:[%s0 + $0x78] sm:$0xff]
  %v146 = vld [vmem:[%s0 + $0x80] sm:$0xff]
  %v147 = vld [vmem:[%s0 + $0x88] sm:$0xff]
  %v148 = vld [vmem:[%s0 + $0x90] sm:$0xff]
  %v149 = vld [vmem:[%s0 + $0x98] sm:$0xff]
  %v150 = vld [vmem:[%s0 + $0xa0] sm:$0xff]
  %v151 = vld [vmem:[%s0 + $0xa8] sm:$0xff]
  %v152 = vld [vmem:[%s0 + $0xb0] sm:$0xff]
  %v153 = vld [vmem:[%s0 + $0xb8] sm:$0xff]
  %v154 = vld [vmem:[%s0 + $0xc0] sm:$0xff]
  %v155 = vld [vmem:[%s0 + $0xc8] sm:$0xff]
  %v156 = vld [vmem:[%s0 + $0xd0] sm:$0xff]
  %v157 = vld [vmem:[%s0 + $0xd8] sm:$0xff]
  %v158 = vld [vmem:[%s0 + $0xe0] sm:$0xff]
  %v159 = vld [vmem:[%s0 + $0xe8] sm:$0xff]
  %v160 = vld [vmem:[%s0 + $0xf0] sm:$0xff]
  %v161 = vld [vmem:[%s0 + $0xf8] sm:$0xff]
  %v194 = vunpack.c.l.b16 %v30
  %v195 = vunpack.c.l.b16 %v31
  %v196 = vunpack.c.l.b16 %v32
  %v197 = vunpack.c.l.b16 %v33
  %v198 = vunpack.c.l.b16 %v34
  %v199 = vunpack.c.l.b16 %v35
  %v200 = vunpack.c.l.b16 %v36
  %v201 = vunpack.c.l.b16 %v37
  %v202 = vunpack.c.l.b16 %v38
  %v203 = vunpack.c.l.b16 %v39
  %v204 = vunpack.c.l.b16 %v40
  %v205 = vunpack.c.l.b16 %v41
  %v206 = vunpack.c.l.b16 %v42
  %v207 = vunpack.c.l.b16 %v43
  %v208 = vunpack.c.l.b16 %v44
  %v209 = vunpack.c.l.b16 %v45
  %v210 = vunpack.c.l.b16 %v46
  %v211 = vunpack.c.l.b16 %v47
  %v212 = vunpack.c.l.b16 %v48
  %v213 = vunpack.c.l.b16 %v49
  %v214 = vunpack.c.l.b16 %v50
  %v215 = vunpack.c.l.b16 %v51
  %v216 = vunpack.c.l.b16 %v52
  %v217 = vunpack.c.l.b16 %v53
  %v218 = vunpack.c.l.b16 %v54
  %v219 = vunpack.c.l.b16 %v55
  %v220 = vunpack.c.l.b16 %v56
  %v221 = vunpack.c.l.b16 %v57
  %v222 = vunpack.c.l.b16 %v58
  %v223 = vunpack.c.l.b16 %v59
  %v224 = vunpack.c.l.b16 %v60
  %v225 = vunpack.c.l.b16 %v61
  %v226 = vpack.c.b16 %v195, %v194
  %v227 = vpack.c.b16 %v197, %v196
  %v228 = vpack.c.b16 %v199, %v198
  %v229 = vpack.c.b16 %v201, %v200
  %v230 = vpack.c.b16 %v203, %v202
  %v231 = vpack.c.b16 %v205, %v204
  %v232 = vpack.c.b16 %v207, %v206
  %v233 = vpack.c.b16 %v209, %v208
  %v234 = vpack.c.b16 %v211, %v210
  %v235 = vpack.c.b16 %v213, %v212
  %v236 = vpack.c.b16 %v215, %v214
  %v237 = vpack.c.b16 %v217, %v216
  %v238 = vpack.c.b16 %v219, %v218
  %v239 = vpack.c.b16 %v221, %v220
  %v240 = vpack.c.b16 %v223, %v222
  %v241 = vpack.c.b16 %v225, %v224
  %258 = vmatprep.subr.bf16.mxu0 0
  %259 = vmatpush1.bf16.msra.mxu0 %v226
  %260 = vmatprep.subr.bf16.mxu0 0
  %261 = vmatpush1.bf16.msra.mxu0 %v227
  %262 = vmatprep.subr.bf16.mxu0 0
  %263 = vmatpush1.bf16.msra.mxu0 %v228
  %264 = vmatprep.subr.bf16.mxu0 0
  %265 = vmatpush1.bf16.msra.mxu0 %v229
  %266 = vmatprep.subr.bf16.mxu0 0
  %267 = vmatpush1.bf16.msra.mxu0 %v230
  %268 = vmatprep.subr.bf16.mxu0 0
  %269 = vmatpush1.bf16.msra.mxu0 %v231
  %270 = vmatprep.subr.bf16.mxu0 0
  %271 = vmatpush1.bf16.msra.mxu0 %v232
  %272 = vmatprep.subr.bf16.mxu0 0
  %273 = vmatpush1.bf16.msra.mxu0 %v233
  %274 = vmatprep.subr.bf16.mxu0 0
  %275 = vmatpush1.bf16.msra.mxu0 %v234
  %276 = vmatprep.subr.bf16.mxu0 0
  %277 = vmatpush1.bf16.msra.mxu0 %v235
  %278 = vmatprep.subr.bf16.mxu0 0
  %279 = vmatpush1.bf16.msra.mxu0 %v236
  %280 = vmatprep.subr.bf16.mxu0 0
  %281 = vmatpush1.bf16.msra.mxu0 %v237
  %282 = vmatprep.subr.bf16.mxu0 0
  %283 = vmatpush1.bf16.msra.mxu0 %v238
  %284 = vmatprep.subr.bf16.mxu0 0
  %285 = vmatpush1.bf16.msra.mxu0 %v239
  %286 = vmatprep.subr.bf16.mxu0 0
  %287 = vmatpush1.bf16.msra.mxu0 %v240
  %288 = vmatprep.subr.bf16.mxu0 0
  %289 = vmatpush1.bf16.msra.mxu0 %v241
  %290 = vmatprep.mubr.bf16.mxu0 %v114
  %291 = vmatmul.mubr.bf16.gmra.mrb[0].mxu0 %v113
  %v292 = vpop.f32.mrb[0].mxu0
  %v293 = vadd.f32 %v130, %v292
  %v294 = vpop.f32.mrb[0].mxu0
  %v295 = vpop.f32.mrb[0].mxu0
  %v296 = vadd.f32 %v131, %v295
  %v297 = vpop.f32.mrb[0].mxu0
  %298 = vmatprep.mubr.bf16.mxu0 %v115
  %299 = vmatmul.mubr.bf16.gmra.mrb[0].mxu0 %v113
  %v300 = vpop.f32.mrb[0].mxu0
  %v301 = vadd.f32 %v132, %v300
  %v302 = vpop.f32.mrb[0].mxu0
  %v303 = vpop.f32.mrb[0].mxu0
  %v304 = vadd.f32 %v133, %v303
  %v305 = vpop.f32.mrb[0].mxu0
  %306 = vmatprep.mubr.bf16.mxu0 %v116
  %307 = vmatmul.mubr.bf16.gmra.mrb[0].mxu0 %v113
  %v308 = vpop.f32.mrb[0].mxu0
  %v309 = vadd.f32 %v134, %v308
  %v310 = vpop.f32.mrb[0].mxu0
  %v311 = vpop.f32.mrb[0].mxu0
  %v312 = vadd.f32 %v135, %v311
  %v313 = vpop.f32.mrb[0].mxu0
  %314 = vmatprep.mubr.bf16.mxu0 %v117
  %315 = vmatmul.mubr.bf16.gmra.mrb[0].mxu0 %v113
  %v316 = vpop.f32.mrb[0].mxu0
  %v317 = vadd.f32 %v136, %v316
  %v318 = vpop.f32.mrb[0].mxu0
  %v319 = vpop.f32.mrb[0].mxu0
  %v320 = vadd.f32 %v137, %v319
  %v321 = vpop.f32.mrb[0].mxu0
  %322 = vmatprep.mubr.bf16.mxu0 %v118
  %323 = vmatmul.mubr.bf16.gmra.mrb[0].mxu0 %v113
  %v324 = vpop.f32.mrb[0].mxu0
  %v325 = vadd.f32 %v138, %v324
  %v326 = vpop.f32.mrb[0].mxu0
  %v327 = vpop.f32.mrb[0].mxu0
  %v328 = vadd.f32 %v139, %v327
  %v329 = vpop.f32.mrb[0].mxu0
  %330 = vmatprep.mubr.bf16.mxu0 %v119
  %331 = vmatmul.mubr.bf16.gmra.mrb[0].mxu0 %v113
  %v332 = vpop.f32.mrb[0].mxu0
  %v333 = vadd.f32 %v140, %v332
  %v334 = vpop.f32.mrb[0].mxu0
  %v335 = vpop.f32.mrb[0].mxu0
  %v336 = vadd.f32 %v141, %v335
  %v337 = vpop.f32.mrb[0].mxu0
  %338 = vmatprep.mubr.bf16.mxu0 %v120
  %339 = vmatmul.mubr.bf16.gmra.mrb[0].mxu0 %v113
  %v340 = vpop.f32.mrb[0].mxu0
  %v341 = vadd.f32 %v142, %v340
  %v342 = vpop.f32.mrb[0].mxu0
  %v343 = vpop.f32.mrb[0].mxu0
  %v344 = vadd.f32 %v143, %v343
  %v345 = vpop.f32.mrb[0].mxu0
  %346 = vmatprep.mubr.bf16.mxu0 %v121
  %347 = vmatmul.mubr.bf16.gmra.mrb[0].mxu0 %v113
  %v348 = vpop.f32.mrb[0].mxu0
  %v349 = vadd.f32 %v144, %v348
  %v350 = vpop.f32.mrb[0].mxu0
  %v351 = vpop.f32.mrb[0].mxu0
  %v352 = vadd.f32 %v145, %v351
  %v353 = vpop.f32.mrb[0].mxu0
  %354 = vmatprep.mubr.bf16.mxu0 %v122
  %355 = vmatmul.mubr.bf16.gmra.mrb[0].mxu0 %v113
  %v356 = vpop.f32.mrb[0].mxu0
  %v357 = vadd.f32 %v146, %v356
  %v358 = vpop.f32.mrb[0].mxu0
  %v359 = vpop.f32.mrb[0].mxu0
  %v360 = vadd.f32 %v147, %v359
  %v361 = vpop.f32.mrb[0].mxu0
  %362 = vmatprep.mubr.bf16.mxu0 %v123
  %363 = vmatmul.mubr.bf16.gmra.mrb[0].mxu0 %v113
  %v364 = vpop.f32.mrb[0].mxu0
  %v365 = vadd.f32 %v148, %v364
  %v366 = vpop.f32.mrb[0].mxu0
  %v367 = vpop.f32.mrb[0].mxu0
  %v368 = vadd.f32 %v149, %v367
  %v369 = vpop.f32.mrb[0].mxu0
  %370 = vmatprep.mubr.bf16.mxu0 %v124
  %371 = vmatmul.mubr.bf16.gmra.mrb[0].mxu0 %v113
  %v372 = vpop.f32.mrb[0].mxu0
  %v373 = vadd.f32 %v150, %v372
  %v374 = vpop.f32.mrb[0].mxu0
  %v375 = vpop.f32.mrb[0].mxu0
  %v376 = vadd.f32 %v151, %v375
  %v377 = vpop.f32.mrb[0].mxu0
  %378 = vmatprep.mubr.bf16.mxu0 %v125
  %379 = vmatmul.mubr.bf16.gmra.mrb[0].mxu0 %v113
  %v380 = vpop.f32.mrb[0].mxu0
  %v381 = vadd.f32 %v152, %v380
  %v382 = vpop.f32.mrb[0].mxu0
  %v383 = vpop.f32.mrb[0].mxu0
  %v384 = vadd.f32 %v153, %v383
  %v385 = vpop.f32.mrb[0].mxu0
  %386 = vmatprep.mubr.bf16.mxu0 %v126
  %387 = vmatmul.mubr.bf16.gmra.mrb[0].mxu0 %v113
  %v388 = vpop.f32.mrb[0].mxu0
  %v389 = vadd.f32 %v154, %v388
  %v390 = vpop.f32.mrb[0].mxu0
  %v391 = vpop.f32.mrb[0].mxu0
  %v392 = vadd.f32 %v155, %v391
  %v393 = vpop.f32.mrb[0].mxu0
  %394 = vmatprep.mubr.bf16.mxu0 %v127
  %395 = vmatmul.mubr.bf16.gmra.mrb[0].mxu0 %v113
  %v396 = vpop.f32.mrb[0].mxu0
  %v397 = vadd.f32 %v156, %v396
  %v398 = vpop.f32.mrb[0].mxu0
  %v399 = vpop.f32.mrb[0].mxu0
  %v400 = vadd.f32 %v157, %v399
  %v401 = vpop.f32.mrb[0].mxu0
  %402 = vmatprep.mubr.bf16.mxu0 %v128
  %403 = vmatmul.mubr.bf16.gmra.mrb[0].mxu0 %v113
  %v404 = vpop.f32.mrb[0].mxu0
  %v405 = vadd.f32 %v158, %v404
  %v406 = vpop.f32.mrb[0].mxu0
  %v407 = vpop.f32.mrb[0].mxu0
  %v408 = vadd.f32 %v159, %v407
  %v409 = vpop.f32.mrb[0].mxu0
  %410 = vmatprep.mubr.bf16.mxu0 %v129
  %411 = vmatmul.mubr.bf16.gmra.mrb[0].mxu0 %v113
  %v412 = vpop.f32.mrb[0].mxu0
  %v413 = vadd.f32 %v160, %v412
  %v414 = vpop.f32.mrb[0].mxu0
  %v415 = vpop.f32.mrb[0].mxu0
  %v416 = vadd.f32 %v161, %v415
  %v417 = vpop.f32.mrb[0].mxu0
  %418 = vdwg.mxu0
  %v419 = vtanh.pop %v293
  %v420 = vtanh.pop %v296
  %v421 = vtanh.pop %v301
  %v422 = vtanh.pop %v304
  %v423 = vtanh.pop %v309
  %v424 = vtanh.pop %v312
  %v425 = vtanh.pop %v317
  %v426 = vtanh.pop %v320
  %v427 = vtanh.pop %v325
  %v428 = vtanh.pop %v328
  %v429 = vtanh.pop %v333
  %v430 = vtanh.pop %v336
  %v431 = vtanh.pop %v341
  %v432 = vtanh.pop %v344
  %v433 = vtanh.pop %v349
  %v434 = vtanh.pop %v352
  %v435 = vtanh.pop %v357
  %v436 = vtanh.pop %v360
  %v437 = vtanh.pop %v365
  %v438 = vtanh.pop %v368
  %v439 = vtanh.pop %v373
  %v440 = vtanh.pop %v376
  %v441 = vtanh.pop %v381
  %v442 = vtanh.pop %v384
  %v443 = vtanh.pop %v389
  %v444 = vtanh.pop %v392
  %v445 = vtanh.pop %v397
  %v446 = vtanh.pop %v400
  %v447 = vtanh.pop %v405
  %v448 = vtanh.pop %v408
  %v449 = vtanh.pop %v413
  %v450 = vtanh.pop %v416
  %v451 = vpack.c.bf16 %v420, %v419
  %v452 = vpack.c.bf16 %v422, %v421
  %v453 = vpack.c.bf16 %v424, %v423
  %v454 = vpack.c.bf16 %v426, %v425
  %v455 = vpack.c.bf16 %v428, %v427
  %v456 = vpack.c.bf16 %v430, %v429
  %v457 = vpack.c.bf16 %v432, %v431
  %v458 = vpack.c.bf16 %v434, %v433
  %v459 = vpack.c.bf16 %v436, %v435
  %v460 = vpack.c.bf16 %v438, %v437
  %v461 = vpack.c.bf16 %v440, %v439
  %v462 = vpack.c.bf16 %v442, %v441
  %v463 = vpack.c.bf16 %v444, %v443
  %v464 = vpack.c.bf16 %v446, %v445
  %v465 = vpack.c.bf16 %v448, %v447
  %v466 = vpack.c.bf16 %v450, %v449
  %v468 = vlaneseq
  %v469 = vshrl.u32 %v468, 7
  %v470 = vsub.s32 0, %v469
  %v471 = vrot.slane %v78, %v470
  %v472 = vlaneseq
  %v473 = vshrl.u32 %v472, 7
  %v474 = vsub.s32 1, %v473
  %v475 = vrot.slane %v78, %v474
  %v494 = vunpack.c.l.b16 %v62
  %v495 = vunpack.c.h.b16 %v62
  %v496 = vunpack.c.l.b16 %v63
  %v497 = vunpack.c.h.b16 %v63
  %v498 = vunpack.c.l.b16 %v64
  %v499 = vunpack.c.h.b16 %v64
  %v500 = vunpack.c.l.b16 %v65
  %v501 = vunpack.c.h.b16 %v65
  %v502 = vunpack.c.l.b16 %v66
  %v503 = vunpack.c.h.b16 %v66
  %v504 = vunpack.c.l.b16 %v67
  %v505 = vunpack.c.h.b16 %v67
  %v506 = vunpack.c.l.b16 %v68
  %v507 = vunpack.c.h.b16 %v68
  %v508 = vunpack.c.l.b16 %v69
  %v509 = vunpack.c.h.b16 %v69
  %v510 = vunpack.c.l.b16 %v70
  %v511 = vunpack.c.h.b16 %v70
  %v512 = vunpack.c.l.b16 %v71
  %v513 = vunpack.c.h.b16 %v71
  %v514 = vunpack.c.l.b16 %v72
  %v515 = vunpack.c.h.b16 %v72
  %v516 = vunpack.c.l.b16 %v73
  %v517 = vunpack.c.h.b16 %v73
  %v518 = vunpack.c.l.b16 %v74
  %v519 = vunpack.c.h.b16 %v74
  %v520 = vunpack.c.l.b16 %v75
  %v521 = vunpack.c.h.b16 %v75
  %v522 = vunpack.c.l.b16 %v76
  %v523 = vunpack.c.h.b16 %v76
  %v524 = vunpack.c.l.b16 %v77
  %v525 = vunpack.c.h.b16 %v77
  %v526 = vpack.c.b16 %v496, %v494
  %v527 = vpack.c.b16 %v497, %v495
  %v528 = vpack.c.b16 %v500, %v498
  %v529 = vpack.c.b16 %v501, %v499
  %v530 = vpack.c.b16 %v504, %v502
  %v531 = vpack.c.b16 %v505, %v503
  %v532 = vpack.c.b16 %v508, %v506
  %v533 = vpack.c.b16 %v509, %v507
  %v534 = vpack.c.b16 %v512, %v510
  %v535 = vpack.c.b16 %v513, %v511
  %v536 = vpack.c.b16 %v516, %v514
  %v537 = vpack.c.b16 %v517, %v515
  %v538 = vpack.c.b16 %v520, %v518
  %v539 = vpack.c.b16 %v521, %v519
  %v540 = vpack.c.b16 %v524, %v522
  %v541 = vpack.c.b16 %v525, %v523
  %558 = vmatprep.subr.bf16.mxu0 %v527
  %559 = vmatpush1.bf16.msra.mxu0 %v526
  %560 = vmatprep.subr.bf16.mxu0 %v529
  %561 = vmatpush1.bf16.msra.mxu0 %v528
  %562 = vmatprep.subr.bf16.mxu0 %v531
  %563 = vmatpush1.bf16.msra.mxu0 %v530
  %564 = vmatprep.subr.bf16.mxu0 %v533
  %565 = vmatpush1.bf16.msra.mxu0 %v532
  %566 = vmatprep.subr.bf16.mxu0 %v535
  %567 = vmatpush1.bf16.msra.mxu0 %v534
  %568 = vmatprep.subr.bf16.mxu0 %v537
  %569 = vmatpush1.bf16.msra.mxu0 %v536
  %570 = vmatprep.subr.bf16.mxu0 %v539
  %571 = vmatpush1.bf16.msra.mxu0 %v538
  %572 = vmatprep.subr.bf16.mxu0 %v541
  %573 = vmatpush1.bf16.msra.mxu0 %v540
  %574 = vmatprep.subr.bf16.mxu0 0
  %575 = vmatpush1.bf16.msra.mxu0 0
  %576 = vmatprep.subr.bf16.mxu0 0
  %577 = vmatpush1.bf16.msra.mxu0 0
  %578 = vmatprep.subr.bf16.mxu0 0
  %579 = vmatpush1.bf16.msra.mxu0 0
  %580 = vmatprep.subr.bf16.mxu0 0
  %581 = vmatpush1.bf16.msra.mxu0 0
  %582 = vmatprep.subr.bf16.mxu0 0
  %583 = vmatpush1.bf16.msra.mxu0 0
  %584 = vmatprep.subr.bf16.mxu0 0
  %585 = vmatpush1.bf16.msra.mxu0 0
  %586 = vmatprep.subr.bf16.mxu0 0
  %587 = vmatpush1.bf16.msra.mxu0 0
  %588 = vmatprep.subr.bf16.mxu0 0
  %589 = vmatpush1.bf16.msra.mxu0 0
  %590 = vmatprep.mubr.bf16.mxu0 0
  %591 = vmatmul.mubr.bf16.gmra.mrb[0].mxu0 %v451
  %v592 = vpop.f32.mrb[0].mxu0
  %v593 = vadd.f32 %v471, %v592
  %v594 = vpop.f32.mrb[0].mxu0
  %v595 = vadd.f32 %v475, %v594
  %v596 = vpop.f32.mrb[0].mxu0
  %v597 = vadd.f32 %v471, %v596
  %v598 = vpop.f32.mrb[0].mxu0
  %v599 = vadd.f32 %v475, %v598
  %600 = vmatprep.mubr.bf16.mxu0 0
  %601 = vmatmul.mubr.bf16.gmra.mrb[0].mxu0 %v452
  %v602 = vpop.f32.mrb[0].mxu0
  %v603 = vadd.f32 %v471, %v602
  %v604 = vpop.f32.mrb[0].mxu0
  %v605 = vadd.f32 %v475, %v604
  %v606 = vpop.f32.mrb[0].mxu0
  %v607 = vadd.f32 %v471, %v606
  %v608 = vpop.f32.mrb[0].mxu0
  %v609 = vadd.f32 %v475, %v608
  %610 = vmatprep.mubr.bf16.mxu0 0
  %611 = vmatmul.mubr.bf16.gmra.mrb[0].mxu0 %v453
  %v612 = vpop.f32.mrb[0].mxu0
  %v613 = vadd.f32 %v471, %v612
  %v614 = vpop.f32.mrb[0].mxu0
  %v615 = vadd.f32 %v475, %v614
  %v616 = vpop.f32.mrb[0].mxu0
  %v617 = vadd.f32 %v471, %v616
  %v618 = vpop.f32.mrb[0].mxu0
  %v619 = vadd.f32 %v475, %v618
  %620 = vmatprep.mubr.bf16.mxu0 0
  %621 = vmatmul.mubr.bf16.gmra.mrb[0].mxu0 %v454
  %v622 = vpop.f32.mrb[0].mxu0
  %v623 = vadd.f32 %v471, %v622
  %v624 = vpop.f32.mrb[0].mxu0
  %v625 = vadd.f32 %v475, %v624
  %v626 = vpop.f32.mrb[0].mxu0
  %v627 = vadd.f32 %v471, %v626
  %v628 = vpop.f32.mrb[0].mxu0
  %v629 = vadd.f32 %v475, %v628
  %630 = vmatprep.mubr.bf16.mxu0 0
  %631 = vmatmul.mubr.bf16.gmra.mrb[0].mxu0 %v455
  %v632 = vpop.f32.mrb[0].mxu0
  %v633 = vadd.f32 %v471, %v632
  %v634 = vpop.f32.mrb[0].mxu0
  %v635 = vadd.f32 %v475, %v634
  %v636 = vpop.f32.mrb[0].mxu0
  %v637 = vadd.f32 %v471, %v636
  %v638 = vpop.f32.mrb[0].mxu0
  %v639 = vadd.f32 %v475, %v638
  %640 = vmatprep.mubr.bf16.mxu0 0
  %641 = vmatmul.mubr.bf16.gmra.mrb[0].mxu0 %v456
  %v642 = vpop.f32.mrb[0].mxu0
  %v643 = vadd.f32 %v471, %v642
  %v644 = vpop.f32.mrb[0].mxu0
  %v645 = vadd.f32 %v475, %v644
  %v646 = vpop.f32.mrb[0].mxu0
  %v647 = vadd.f32 %v471, %v646
  %v648 = vpop.f32.mrb[0].mxu0
  %v649 = vadd.f32 %v475, %v648
  %650 = vmatprep.mubr.bf16.mxu0 0
  %651 = vmatmul.mubr.bf16.gmra.mrb[0].mxu0 %v457
  %v652 = vpop.f32.mrb[0].mxu0
  %v653 = vadd.f32 %v471, %v652
  %v654 = vpop.f32.mrb[0].mxu0
  %v655 = vadd.f32 %v475, %v654
  %v656 = vpop.f32.mrb[0].mxu0
  %v657 = vadd.f32 %v471, %v656
  %v658 = vpop.f32.mrb[0].mxu0
  %v659 = vadd.f32 %v475, %v658
  %660 = vmatprep.mubr.bf16.mxu0 0
  %661 = vmatmul.mubr.bf16.gmra.mrb[0].mxu0 %v458
  %v662 = vpop.f32.mrb[0].mxu0
  %v663 = vadd.f32 %v471, %v662
  %v664 = vpop.f32.mrb[0].mxu0
  %v665 = vadd.f32 %v475, %v664
  %v666 = vpop.f32.mrb[0].mxu0
  %v667 = vadd.f32 %v471, %v666
  %v668 = vpop.f32.mrb[0].mxu0
  %v669 = vadd.f32 %v475, %v668
  %670 = vmatprep.mubr.bf16.mxu0 0
  %671 = vmatmul.mubr.bf16.gmra.mrb[0].mxu0 %v459
  %v672 = vpop.f32.mrb[0].mxu0
  %v673 = vadd.f32 %v471, %v672
  %v674 = vpop.f32.mrb[0].mxu0
  %v675 = vadd.f32 %v475, %v674
  %v676 = vpop.f32.mrb[0].mxu0
  %v677 = vadd.f32 %v471, %v676
  %v678 = vpop.f32.mrb[0].mxu0
  %v679 = vadd.f32 %v475, %v678
  %680 = vmatprep.mubr.bf16.mxu0 0
  %681 = vmatmul.mubr.bf16.gmra.mrb[0].mxu0 %v460
  %v682 = vpop.f32.mrb[0].mxu0
  %v683 = vadd.f32 %v471, %v682
  %v684 = vpop.f32.mrb[0].mxu0
  %v685 = vadd.f32 %v475, %v684
  %v686 = vpop.f32.mrb[0].mxu0
  %v687 = vadd.f32 %v471, %v686
  %v688 = vpop.f32.mrb[0].mxu0
  %v689 = vadd.f32 %v475, %v688
  %690 = vmatprep.mubr.bf16.mxu0 0
  %691 = vmatmul.mubr.bf16.gmra.mrb[0].mxu0 %v461
  %v692 = vpop.f32.mrb[0].mxu0
  %v693 = vadd.f32 %v471, %v692
  %v694 = vpop.f32.mrb[0].mxu0
  %v695 = vadd.f32 %v475, %v694
  %v696 = vpop.f32.mrb[0].mxu0
  %v697 = vadd.f32 %v471, %v696
  %v698 = vpop.f32.mrb[0].mxu0
  %v699 = vadd.f32 %v475, %v698
  %700 = vmatprep.mubr.bf16.mxu0 0
  %701 = vmatmul.mubr.bf16.gmra.mrb[0].mxu0 %v462
  %v702 = vpop.f32.mrb[0].mxu0
  %v703 = vadd.f32 %v471, %v702
  %v704 = vpop.f32.mrb[0].mxu0
  %v705 = vadd.f32 %v475, %v704
  %v706 = vpop.f32.mrb[0].mxu0
  %v707 = vadd.f32 %v471, %v706
  %v708 = vpop.f32.mrb[0].mxu0
  %v709 = vadd.f32 %v475, %v708
  %710 = vmatprep.mubr.bf16.mxu0 0
  %711 = vmatmul.mubr.bf16.gmra.mrb[0].mxu0 %v463
  %v712 = vpop.f32.mrb[0].mxu0
  %v713 = vadd.f32 %v471, %v712
  %v714 = vpop.f32.mrb[0].mxu0
  %v715 = vadd.f32 %v475, %v714
  %v716 = vpop.f32.mrb[0].mxu0
  %v717 = vadd.f32 %v471, %v716
  %v718 = vpop.f32.mrb[0].mxu0
  %v719 = vadd.f32 %v475, %v718
  %720 = vmatprep.mubr.bf16.mxu0 0
  %721 = vmatmul.mubr.bf16.gmra.mrb[0].mxu0 %v464
  %v722 = vpop.f32.mrb[0].mxu0
  %v723 = vadd.f32 %v471, %v722
  %v724 = vpop.f32.mrb[0].mxu0
  %v725 = vadd.f32 %v475, %v724
  %v726 = vpop.f32.mrb[0].mxu0
  %v727 = vadd.f32 %v471, %v726
  %v728 = vpop.f32.mrb[0].mxu0
  %v729 = vadd.f32 %v475, %v728
  %730 = vmatprep.mubr.bf16.mxu0 0
  %731 = vmatmul.mubr.bf16.gmra.mrb[0].mxu0 %v465
  %v732 = vpop.f32.mrb[0].mxu0
  %v733 = vadd.f32 %v471, %v732
  %v734 = vpop.f32.mrb[0].mxu0
  %v735 = vadd.f32 %v475, %v734
  %v736 = vpop.f32.mrb[0].mxu0
  %v737 = vadd.f32 %v471, %v736
  %v738 = vpop.f32.mrb[0].mxu0
  %v739 = vadd.f32 %v475, %v738
  %740 = vmatprep.mubr.bf16.mxu0 0
  %741 = vmatmul.mubr.bf16.gmra.mrb[0].mxu0 %v466
  %v742 = vpop.f32.mrb[0].mxu0
  %v743 = vadd.f32 %v471, %v742
  %v744 = vpop.f32.mrb[0].mxu0
  %v745 = vadd.f32 %v475, %v744
  %v746 = vpop.f32.mrb[0].mxu0
  %v747 = vadd.f32 %v471, %v746
  %v748 = vpop.f32.mrb[0].mxu0
  %v749 = vadd.f32 %v475, %v748
  %750 = vdwg.mxu0
  %v751 = vmax.f32 %v595, 0.0
  %v752 = vmax.f32 %v599, 0.0
  %v753 = vmax.f32 %v605, 0.0
  %v754 = vmax.f32 %v609, 0.0
  %v755 = vmax.f32 %v615, 0.0
  %v756 = vmax.f32 %v619, 0.0
  %v757 = vmax.f32 %v625, 0.0
  %v758 = vmax.f32 %v629, 0.0
  %v759 = vmax.f32 %v635, 0.0
  %v760 = vmax.f32 %v639, 0.0
  %v761 = vmax.f32 %v645, 0.0
  %v762 = vmax.f32 %v649, 0.0
  %v763 = vmax.f32 %v655, 0.0
  %v764 = vmax.f32 %v659, 0.0
  %v765 = vmax.f32 %v665, 0.0
  %v766 = vmax.f32 %v669, 0.0
  %v767 = vmax.f32 %v675, 0.0
  %v768 = vmax.f32 %v679, 0.0
  %v769 = vmax.f32 %v685, 0.0
  %v770 = vmax.f32 %v689, 0.0
  %v771 = vmax.f32 %v695, 0.0
  %v772 = vmax.f32 %v699, 0.0
  %v773 = vmax.f32 %v705, 0.0
  %v774 = vmax.f32 %v709, 0.0
  %v775 = vmax.f32 %v715, 0.0
  %v776 = vmax.f32 %v719, 0.0
  %v777 = vmax.f32 %v725, 0.0
  %v778 = vmax.f32 %v729, 0.0
  %v779 = vmax.f32 %v735, 0.0
  %v780 = vmax.f32 %v739, 0.0
  %v781 = vmax.f32 %v745, 0.0
  %v782 = vmax.f32 %v749, 0.0
  %vm783 = vcmp.ne.f32.partialorder %v595, %v595
  %vm784 = vcmp.ne.f32.partialorder %v599, %v599
  %vm785 = vcmp.ne.f32.partialorder %v605, %v605
  %vm786 = vcmp.ne.f32.partialorder %v609, %v609
  %vm787 = vcmp.ne.f32.partialorder %v615, %v615
  %vm788 = vcmp.ne.f32.partialorder %v619, %v619
  %vm789 = vcmp.ne.f32.partialorder %v625, %v625
  %vm790 = vcmp.ne.f32.partialorder %v629, %v629
  %vm791 = vcmp.ne.f32.partialorder %v635, %v635
  %vm792 = vcmp.ne.f32.partialorder %v639, %v639
  %vm793 = vcmp.ne.f32.partialorder %v645, %v645
  %vm794 = vcmp.ne.f32.partialorder %v649, %v649
  %vm795 = vcmp.ne.f32.partialorder %v655, %v655
  %vm796 = vcmp.ne.f32.partialorder %v659, %v659
  %vm797 = vcmp.ne.f32.partialorder %v665, %v665
  %vm798 = vcmp.ne.f32.partialorder %v669, %v669
  %vm799 = vcmp.ne.f32.partialorder %v675, %v675
  %vm800 = vcmp.ne.f32.partialorder %v679, %v679
  %vm801 = vcmp.ne.f32.partialorder %v685, %v685
  %vm802 = vcmp.ne.f32.partialorder %v689, %v689
  %vm803 = vcmp.ne.f32.partialorder %v695, %v695
  %vm804 = vcmp.ne.f32.partialorder %v699, %v699
  %vm805 = vcmp.ne.f32.partialorder %v705, %v705
  %vm806 = vcmp.ne.f32.partialorder %v709, %v709
  %vm807 = vcmp.ne.f32.partialorder %v715, %v715
  %vm808 = vcmp.ne.f32.partialorder %v719, %v719
  %vm809 = vcmp.ne.f32.partialorder %v725, %v725
  %vm810 = vcmp.ne.f32.partialorder %v729, %v729
  %vm811 = vcmp.ne.f32.partialorder %v735, %v735
  %vm812 = vcmp.ne.f32.partialorder %v739, %v739
  %vm813 = vcmp.ne.f32.partialorder %v745, %v745
  %vm814 = vcmp.ne.f32.partialorder %v749, %v749
  %v815 = vadd.f32 %v595, 0.0
  %v816 = vadd.f32 %v599, 0.0
  %v817 = vadd.f32 %v605, 0.0
  %v818 = vadd.f32 %v609, 0.0
  %v819 = vadd.f32 %v615, 0.0
  %v820 = vadd.f32 %v619, 0.0
  %v821 = vadd.f32 %v625, 0.0
  %v822 = vadd.f32 %v629, 0.0
  %v823 = vadd.f32 %v635, 0.0
  %v824 = vadd.f32 %v639, 0.0
  %v825 = vadd.f32 %v645, 0.0
  %v826 = vadd.f32 %v649, 0.0
  %v827 = vadd.f32 %v655, 0.0
  %v828 = vadd.f32 %v659, 0.0
  %v829 = vadd.f32 %v665, 0.0
  %v830 = vadd.f32 %v669, 0.0
  %v831 = vadd.f32 %v675, 0.0
  %v832 = vadd.f32 %v679, 0.0
  %v833 = vadd.f32 %v685, 0.0
  %v834 = vadd.f32 %v689, 0.0
  %v835 = vadd.f32 %v695, 0.0
  %v836 = vadd.f32 %v699, 0.0
  %v837 = vadd.f32 %v705, 0.0
  %v838 = vadd.f32 %v709, 0.0
  %v839 = vadd.f32 %v715, 0.0
  %v840 = vadd.f32 %v719, 0.0
  %v841 = vadd.f32 %v725, 0.0
  %v842 = vadd.f32 %v729, 0.0
  %v843 = vadd.f32 %v735, 0.0
  %v844 = vadd.f32 %v739, 0.0
  %v845 = vadd.f32 %v745, 0.0
  %v846 = vadd.f32 %v749, 0.0
  %v847 = vand.u32 2147483647, %v595
  %v848 = vand.u32 2147483647, %v599
  %v849 = vand.u32 2147483647, %v605
  %v850 = vand.u32 2147483647, %v609
  %v851 = vand.u32 2147483647, %v615
  %v852 = vand.u32 2147483647, %v619
  %v853 = vand.u32 2147483647, %v625
  %v854 = vand.u32 2147483647, %v629
  %v855 = vand.u32 2147483647, %v635
  %v856 = vand.u32 2147483647, %v639
  %v857 = vand.u32 2147483647, %v645
  %v858 = vand.u32 2147483647, %v649
  %v859 = vand.u32 2147483647, %v655
  %v860 = vand.u32 2147483647, %v659
  %v861 = vand.u32 2147483647, %v665
  %v862 = vand.u32 2147483647, %v669
  %v863 = vand.u32 2147483647, %v675
  %v864 = vand.u32 2147483647, %v679
  %v865 = vand.u32 2147483647, %v685
  %v866 = vand.u32 2147483647, %v689
  %v867 = vand.u32 2147483647, %v695
  %v868 = vand.u32 2147483647, %v699
  %v869 = vand.u32 2147483647, %v705
  %v870 = vand.u32 2147483647, %v709
  %v871 = vand.u32 2147483647, %v715
  %v872 = vand.u32 2147483647, %v719
  %v873 = vand.u32 2147483647, %v725
  %v874 = vand.u32 2147483647, %v729
  %v875 = vand.u32 2147483647, %v735
  %v876 = vand.u32 2147483647, %v739
  %v877 = vand.u32 2147483647, %v745
  %v878 = vand.u32 2147483647, %v749
  %v879 = vsub.f32 0.0, %v847
  %v880 = vsub.f32 0.0, %v848
  %v881 = vsub.f32 0.0, %v849
  %v882 = vsub.f32 0.0, %v850
  %v883 = vsub.f32 0.0, %v851
  %v884 = vsub.f32 0.0, %v852
  %v885 = vsub.f32 0.0, %v853
  %v886 = vsub.f32 0.0, %v854
  %v887 = vsub.f32 0.0, %v855
  %v888 = vsub.f32 0.0, %v856
  %v889 = vsub.f32 0.0, %v857
  %v890 = vsub.f32 0.0, %v858
  %v891 = vsub.f32 0.0, %v859
  %v892 = vsub.f32 0.0, %v860
  %v893 = vsub.f32 0.0, %v861
  %v894 = vsub.f32 0.0, %v862
  %v895 = vsub.f32 0.0, %v863
  %v896 = vsub.f32 0.0, %v864
  %v897 = vsub.f32 0.0, %v865
  %v898 = vsub.f32 0.0, %v866
  %v899 = vsub.f32 0.0, %v867
  %v900 = vsub.f32 0.0, %v868
  %v901 = vsub.f32 0.0, %v869
  %v902 = vsub.f32 0.0, %v870
  %v903 = vsub.f32 0.0, %v871
  %v904 = vsub.f32 0.0, %v872
  %v905 = vsub.f32 0.0, %v873
  %v906 = vsub.f32 0.0, %v874
  %v907 = vsub.f32 0.0, %v875
  %v908 = vsub.f32 0.0, %v876
  %v909 = vsub.f32 0.0, %v877
  %v910 = vsub.f32 0.0, %v878
  %v911 = vmul.f32 %v879, 1.442695
  %v912 = vpow.pop %v911
  %v913 = vmul.f32 %v880, 1.442695
  %v914 = vpow.pop %v913
  %v915 = vmul.f32 %v881, 1.442695
  %v916 = vpow.pop %v915
  %v917 = vmul.f32 %v882, 1.442695
  %v918 = vpow.pop %v917
  %v919 = vmul.f32 %v883, 1.442695
  %v920 = vpow.pop %v919
  %v921 = vmul.f32 %v884, 1.442695
  %v922 = vpow.pop %v921
  %v923 = vmul.f32 %v885, 1.442695
  %v924 = vpow.pop %v923
  %v925 = vmul.f32 %v886, 1.442695
  %v926 = vpow.pop %v925
  %v927 = vmul.f32 %v887, 1.442695
  %v928 = vpow.pop %v927
  %v929 = vmul.f32 %v888, 1.442695
  %v930 = vpow.pop %v929
  %v931 = vmul.f32 %v889, 1.442695
  %v932 = vpow.pop %v931
  %v933 = vmul.f32 %v890, 1.442695
  %v934 = vpow.pop %v933
  %v935 = vmul.f32 %v891, 1.442695
  %v936 = vpow.pop %v935
  %v937 = vmul.f32 %v892, 1.442695
  %v938 = vpow.pop %v937
  %v939 = vmul.f32 %v893, 1.442695
  %v940 = vpow.pop %v939
  %v941 = vmul.f32 %v894, 1.442695
  %v942 = vpow.pop %v941
  %v943 = vmul.f32 %v895, 1.442695
  %v944 = vpow.pop %v943
  %v945 = vmul.f32 %v896, 1.442695
  %v946 = vpow.pop %v945
  %v947 = vmul.f32 %v897, 1.442695
  %v948 = vpow.pop %v947
  %v949 = vmul.f32 %v898, 1.442695
  %v950 = vpow.pop %v949
  %v951 = vmul.f32 %v899, 1.442695
  %v952 = vpow.pop %v951
  %v953 = vmul.f32 %v900, 1.442695
  %v954 = vpow.pop %v953
  %v955 = vmul.f32 %v901, 1.442695
  %v956 = vpow.pop %v955
  %v957 = vmul.f32 %v902, 1.442695
  %v958 = vpow.pop %v957
  %v959 = vmul.f32 %v903, 1.442695
  %v960 = vpow.pop %v959
  %v961 = vmul.f32 %v904, 1.442695
  %v962 = vpow.pop %v961
  %v963 = vmul.f32 %v905, 1.442695
  %v964 = vpow.pop %v963
  %v965 = vmul.f32 %v906, 1.442695
  %v966 = vpow.pop %v965
  %v967 = vmul.f32 %v907, 1.442695
  %v968 = vpow.pop %v967
  %v969 = vmul.f32 %v908, 1.442695
  %v970 = vpow.pop %v969
  %v971 = vmul.f32 %v909, 1.442695
  %v972 = vpow.pop %v971
  %v973 = vmul.f32 %v910, 1.442695
  %v974 = vpow.pop %v973
  %v975 = vadd.f32 %v912, 1.0
  %v976 = vlog2.pop %v975
  %v977 = vmul.f32 %v976, 0.6931472
  %v978 = vmul.f32 -0.5, %v912
  %v979 = vadd.f32 %v978, 1.0
  %v980 = vmul.f32 %v979, %v912
  %v981 = vand.u32 2147483647, %v912
  %vm982 = vcmp.lt.f32.partialorder %v981, 0.0004427343
  %v983 = vsel %vm982, %v980, %v977
  %v984 = vadd.f32 %v914, 1.0
  %v985 = vlog2.pop %v984
  %v986 = vmul.f32 %v985, 0.6931472
  %v987 = vmul.f32 -0.5, %v914
  %v988 = vadd.f32 %v987, 1.0
  %v989 = vmul.f32 %v988, %v914
  %v990 = vand.u32 2147483647, %v914
  %vm991 = vcmp.lt.f32.partialorder %v990, 0.0004427343
  %v992 = vsel %vm991, %v989, %v986
  %v993 = vadd.f32 %v916, 1.0
  %v994 = vlog2.pop %v993
  %v995 = vmul.f32 %v994, 0.6931472
  %v996 = vmul.f32 -0.5, %v916
  %v997 = vadd.f32 %v996, 1.0
  %v998 = vmul.f32 %v997, %v916
  %v999 = vand.u32 2147483647, %v916
  %vm1000 = vcmp.lt.f32.partialorder %v999, 0.0004427343
  %v1001 = vsel %vm1000, %v998, %v995
  %v1002 = vadd.f32 %v918, 1.0
  %v1003 = vlog2.pop %v1002
  %v1004 = vmul.f32 %v1003, 0.6931472
  %v1005 = vmul.f32 -0.5, %v918
  %v1006 = vadd.f32 %v1005, 1.0
  %v1007 = vmul.f32 %v1006, %v918
  %v1008 = vand.u32 2147483647, %v918
  %vm1009 = vcmp.lt.f32.partialorder %v1008, 0.0004427343
  %v1010 = vsel %vm1009, %v1007, %v1004
  %v1011 = vadd.f32 %v920, 1.0
  %v1012 = vlog2.pop %v1011
  %v1013 = vmul.f32 %v1012, 0.6931472
  %v1014 = vmul.f32 -0.5, %v920
  %v1015 = vadd.f32 %v1014, 1.0
  %v1016 = vmul.f32 %v1015, %v920
  %v1017 = vand.u32 2147483647, %v920
  %vm1018 = vcmp.lt.f32.partialorder %v1017, 0.0004427343
  %v1019 = vsel %vm1018, %v1016, %v1013
  %v1020 = vadd.f32 %v922, 1.0
  %v1021 = vlog2.pop %v1020
  %v1022 = vmul.f32 %v1021, 0.6931472
  %v1023 = vmul.f32 -0.5, %v922
  %v1024 = vadd.f32 %v1023, 1.0
  %v1025 = vmul.f32 %v1024, %v922
  %v1026 = vand.u32 2147483647, %v922
  %vm1027 = vcmp.lt.f32.partialorder %v1026, 0.0004427343
  %v1028 = vsel %vm1027, %v1025, %v1022
  %v1029 = vadd.f32 %v924, 1.0
  %v1030 = vlog2.pop %v1029
  %v1031 = vmul.f32 %v1030, 0.6931472
  %v1032 = vmul.f32 -0.5, %v924
  %v1033 = vadd.f32 %v1032, 1.0
  %v1034 = vmul.f32 %v1033, %v924
  %v1035 = vand.u32 2147483647, %v924
  %vm1036 = vcmp.lt.f32.partialorder %v1035, 0.0004427343
  %v1037 = vsel %vm1036, %v1034, %v1031
  %v1038 = vadd.f32 %v926, 1.0
  %v1039 = vlog2.pop %v1038
  %v1040 = vmul.f32 %v1039, 0.6931472
  %v1041 = vmul.f32 -0.5, %v926
  %v1042 = vadd.f32 %v1041, 1.0
  %v1043 = vmul.f32 %v1042, %v926
  %v1044 = vand.u32 2147483647, %v926
  %vm1045 = vcmp.lt.f32.partialorder %v1044, 0.0004427343
  %v1046 = vsel %vm1045, %v1043, %v1040
  %v1047 = vadd.f32 %v928, 1.0
  %v1048 = vlog2.pop %v1047
  %v1049 = vmul.f32 %v1048, 0.6931472
  %v1050 = vmul.f32 -0.5, %v928
  %v1051 = vadd.f32 %v1050, 1.0
  %v1052 = vmul.f32 %v1051, %v928
  %v1053 = vand.u32 2147483647, %v928
  %vm1054 = vcmp.lt.f32.partialorder %v1053, 0.0004427343
  %v1055 = vsel %vm1054, %v1052, %v1049
  %v1056 = vadd.f32 %v930, 1.0
  %v1057 = vlog2.pop %v1056
  %v1058 = vmul.f32 %v1057, 0.6931472
  %v1059 = vmul.f32 -0.5, %v930
  %v1060 = vadd.f32 %v1059, 1.0
  %v1061 = vmul.f32 %v1060, %v930
  %v1062 = vand.u32 2147483647, %v930
  %vm1063 = vcmp.lt.f32.partialorder %v1062, 0.0004427343
  %v1064 = vsel %vm1063, %v1061, %v1058
  %v1065 = vadd.f32 %v932, 1.0
  %v1066 = vlog2.pop %v1065
  %v1067 = vmul.f32 %v1066, 0.6931472
  %v1068 = vmul.f32 -0.5, %v932
  %v1069 = vadd.f32 %v1068, 1.0
  %v1070 = vmul.f32 %v1069, %v932
  %v1071 = vand.u32 2147483647, %v932
  %vm1072 = vcmp.lt.f32.partialorder %v1071, 0.0004427343
  %v1073 = vsel %vm1072, %v1070, %v1067
  %v1074 = vadd.f32 %v934, 1.0
  %v1075 = vlog2.pop %v1074
  %v1076 = vmul.f32 %v1075, 0.6931472
  %v1077 = vmul.f32 -0.5, %v934
  %v1078 = vadd.f32 %v1077, 1.0
  %v1079 = vmul.f32 %v1078, %v934
  %v1080 = vand.u32 2147483647, %v934
  %vm1081 = vcmp.lt.f32.partialorder %v1080, 0.0004427343
  %v1082 = vsel %vm1081, %v1079, %v1076
  %v1083 = vadd.f32 %v936, 1.0
  %v1084 = vlog2.pop %v1083
  %v1085 = vmul.f32 %v1084, 0.6931472
  %v1086 = vmul.f32 -0.5, %v936
  %v1087 = vadd.f32 %v1086, 1.0
  %v1088 = vmul.f32 %v1087, %v936
  %v1089 = vand.u32 2147483647, %v936
  %vm1090 = vcmp.lt.f32.partialorder %v1089, 0.0004427343
  %v1091 = vsel %vm1090, %v1088, %v1085
  %v1092 = vadd.f32 %v938, 1.0
  %v1093 = vlog2.pop %v1092
  %v1094 = vmul.f32 %v1093, 0.6931472
  %v1095 = vmul.f32 -0.5, %v938
  %v1096 = vadd.f32 %v1095, 1.0
  %v1097 = vmul.f32 %v1096, %v938
  %v1098 = vand.u32 2147483647, %v938
  %vm1099 = vcmp.lt.f32.partialorder %v1098, 0.0004427343
  %v1100 = vsel %vm1099, %v1097, %v1094
  %v1101 = vadd.f32 %v940, 1.0
  %v1102 = vlog2.pop %v1101
  %v1103 = vmul.f32 %v1102, 0.6931472
  %v1104 = vmul.f32 -0.5, %v940
  %v1105 = vadd.f32 %v1104, 1.0
  %v1106 = vmul.f32 %v1105, %v940
  %v1107 = vand.u32 2147483647, %v940
  %vm1108 = vcmp.lt.f32.partialorder %v1107, 0.0004427343
  %v1109 = vsel %vm1108, %v1106, %v1103
  %v1110 = vadd.f32 %v942, 1.0
  %v1111 = vlog2.pop %v1110
  %v1112 = vmul.f32 %v1111, 0.6931472
  %v1113 = vmul.f32 -0.5, %v942
  %v1114 = vadd.f32 %v1113, 1.0
  %v1115 = vmul.f32 %v1114, %v942
  %v1116 = vand.u32 2147483647, %v942
  %vm1117 = vcmp.lt.f32.partialorder %v1116, 0.0004427343
  %v1118 = vsel %vm1117, %v1115, %v1112
  %v1119 = vadd.f32 %v944, 1.0
  %v1120 = vlog2.pop %v1119
  %v1121 = vmul.f32 %v1120, 0.6931472
  %v1122 = vmul.f32 -0.5, %v944
  %v1123 = vadd.f32 %v1122, 1.0
  %v1124 = vmul.f32 %v1123, %v944
  %v1125 = vand.u32 2147483647, %v944
  %vm1126 = vcmp.lt.f32.partialorder %v1125, 0.0004427343
  %v1127 = vsel %vm1126, %v1124, %v1121
  %v1128 = vadd.f32 %v946, 1.0
  %v1129 = vlog2.pop %v1128
  %v1130 = vmul.f32 %v1129, 0.6931472
  %v1131 = vmul.f32 -0.5, %v946
  %v1132 = vadd.f32 %v1131, 1.0
  %v1133 = vmul.f32 %v1132, %v946
  %v1134 = vand.u32 2147483647, %v946
  %vm1135 = vcmp.lt.f32.partialorder %v1134, 0.0004427343
  %v1136 = vsel %vm1135, %v1133, %v1130
  %v1137 = vadd.f32 %v948, 1.0
  %v1138 = vlog2.pop %v1137
  %v1139 = vmul.f32 %v1138, 0.6931472
  %v1140 = vmul.f32 -0.5, %v948
  %v1141 = vadd.f32 %v1140, 1.0
  %v1142 = vmul.f32 %v1141, %v948
  %v1143 = vand.u32 2147483647, %v948
  %vm1144 = vcmp.lt.f32.partialorder %v1143, 0.0004427343
  %v1145 = vsel %vm1144, %v1142, %v1139
  %v1146 = vadd.f32 %v950, 1.0
  %v1147 = vlog2.pop %v1146
  %v1148 = vmul.f32 %v1147, 0.6931472
  %v1149 = vmul.f32 -0.5, %v950
  %v1150 = vadd.f32 %v1149, 1.0
  %v1151 = vmul.f32 %v1150, %v950
  %v1152 = vand.u32 2147483647, %v950
  %vm1153 = vcmp.lt.f32.partialorder %v1152, 0.0004427343
  %v1154 = vsel %vm1153, %v1151, %v1148
  %v1155 = vadd.f32 %v952, 1.0
  %v1156 = vlog2.pop %v1155
  %v1157 = vmul.f32 %v1156, 0.6931472
  %v1158 = vmul.f32 -0.5, %v952
  %v1159 = vadd.f32 %v1158, 1.0
  %v1160 = vmul.f32 %v1159, %v952
  %v1161 = vand.u32 2147483647, %v952
  %vm1162 = vcmp.lt.f32.partialorder %v1161, 0.0004427343
  %v1163 = vsel %vm1162, %v1160, %v1157
  %v1164 = vadd.f32 %v954, 1.0
  %v1165 = vlog2.pop %v1164
  %v1166 = vmul.f32 %v1165, 0.6931472
  %v1167 = vmul.f32 -0.5, %v954
  %v1168 = vadd.f32 %v1167, 1.0
  %v1169 = vmul.f32 %v1168, %v954
  %v1170 = vand.u32 2147483647, %v954
  %vm1171 = vcmp.lt.f32.partialorder %v1170, 0.0004427343
  %v1172 = vsel %vm1171, %v1169, %v1166
  %v1173 = vadd.f32 %v956, 1.0
  %v1174 = vlog2.pop %v1173
  %v1175 = vmul.f32 %v1174, 0.6931472
  %v1176 = vmul.f32 -0.5, %v956
  %v1177 = vadd.f32 %v1176, 1.0
  %v1178 = vmul.f32 %v1177, %v956
  %v1179 = vand.u32 2147483647, %v956
  %vm1180 = vcmp.lt.f32.partialorder %v1179, 0.0004427343
  %v1181 = vsel %vm1180, %v1178, %v1175
  %v1182 = vadd.f32 %v958, 1.0
  %v1183 = vlog2.pop %v1182
  %v1184 = vmul.f32 %v1183, 0.6931472
  %v1185 = vmul.f32 -0.5, %v958
  %v1186 = vadd.f32 %v1185, 1.0
  %v1187 = vmul.f32 %v1186, %v958
  %v1188 = vand.u32 2147483647, %v958
  %vm1189 = vcmp.lt.f32.partialorder %v1188, 0.0004427343
  %v1190 = vsel %vm1189, %v1187, %v1184
  %v1191 = vadd.f32 %v960, 1.0
  %v1192 = vlog2.pop %v1191
  %v1193 = vmul.f32 %v1192, 0.6931472
  %v1194 = vmul.f32 -0.5, %v960
  %v1195 = vadd.f32 %v1194, 1.0
  %v1196 = vmul.f32 %v1195, %v960
  %v1197 = vand.u32 2147483647, %v960
  %vm1198 = vcmp.lt.f32.partialorder %v1197, 0.0004427343
  %v1199 = vsel %vm1198, %v1196, %v1193
  %v1200 = vadd.f32 %v962, 1.0
  %v1201 = vlog2.pop %v1200
  %v1202 = vmul.f32 %v1201, 0.6931472
  %v1203 = vmul.f32 -0.5, %v962
  %v1204 = vadd.f32 %v1203, 1.0
  %v1205 = vmul.f32 %v1204, %v962
  %v1206 = vand.u32 2147483647, %v962
  %vm1207 = vcmp.lt.f32.partialorder %v1206, 0.0004427343
  %v1208 = vsel %vm1207, %v1205, %v1202
  %v1209 = vadd.f32 %v964, 1.0
  %v1210 = vlog2.pop %v1209
  %v1211 = vmul.f32 %v1210, 0.6931472
  %v1212 = vmul.f32 -0.5, %v964
  %v1213 = vadd.f32 %v1212, 1.0
  %v1214 = vmul.f32 %v1213, %v964
  %v1215 = vand.u32 2147483647, %v964
  %vm1216 = vcmp.lt.f32.partialorder %v1215, 0.0004427343
  %v1217 = vsel %vm1216, %v1214, %v1211
  %v1218 = vadd.f32 %v966, 1.0
  %v1219 = vlog2.pop %v1218
  %v1220 = vmul.f32 %v1219, 0.6931472
  %v1221 = vmul.f32 -0.5, %v966
  %v1222 = vadd.f32 %v1221, 1.0
  %v1223 = vmul.f32 %v1222, %v966
  %v1224 = vand.u32 2147483647, %v966
  %vm1225 = vcmp.lt.f32.partialorder %v1224, 0.0004427343
  %v1226 = vsel %vm1225, %v1223, %v1220
  %v1227 = vadd.f32 %v968, 1.0
  %v1228 = vlog2.pop %v1227
  %v1229 = vmul.f32 %v1228, 0.6931472
  %v1230 = vmul.f32 -0.5, %v968
  %v1231 = vadd.f32 %v1230, 1.0
  %v1232 = vmul.f32 %v1231, %v968
  %v1233 = vand.u32 2147483647, %v968
  %vm1234 = vcmp.lt.f32.partialorder %v1233, 0.0004427343
  %v1235 = vsel %vm1234, %v1232, %v1229
  %v1236 = vadd.f32 %v970, 1.0
  %v1237 = vlog2.pop %v1236
  %v1238 = vmul.f32 %v1237, 0.6931472
  %v1239 = vmul.f32 -0.5, %v970
  %v1240 = vadd.f32 %v1239, 1.0
  %v1241 = vmul.f32 %v1240, %v970
  %v1242 = vand.u32 2147483647, %v970
  %vm1243 = vcmp.lt.f32.partialorder %v1242, 0.0004427343
  %v1244 = vsel %vm1243, %v1241, %v1238
  %v1245 = vadd.f32 %v972, 1.0
  %v1246 = vlog2.pop %v1245
  %v1247 = vmul.f32 %v1246, 0.6931472
  %v1248 = vmul.f32 -0.5, %v972
  %v1249 = vadd.f32 %v1248, 1.0
  %v1250 = vmul.f32 %v1249, %v972
  %v1251 = vand.u32 2147483647, %v972
  %vm1252 = vcmp.lt.f32.partialorder %v1251, 0.0004427343
  %v1253 = vsel %vm1252, %v1250, %v1247
  %v1254 = vadd.f32 %v974, 1.0
  %v1255 = vlog2.pop %v1254
  %v1256 = vmul.f32 %v1255, 0.6931472
  %v1257 = vmul.f32 -0.5, %v974
  %v1258 = vadd.f32 %v1257, 1.0
  %v1259 = vmul.f32 %v1258, %v974
  %v1260 = vand.u32 2147483647, %v974
  %vm1261 = vcmp.lt.f32.partialorder %v1260, 0.0004427343
  %v1262 = vsel %vm1261, %v1259, %v1256
  %v1263 = vadd.f32 %v751, %v983
  %v1264 = vadd.f32 %v752, %v992
  %v1265 = vadd.f32 %v753, %v1001
  %v1266 = vadd.f32 %v754, %v1010
  %v1267 = vadd.f32 %v755, %v1019
  %v1268 = vadd.f32 %v756, %v1028
  %v1269 = vadd.f32 %v757, %v1037
  %v1270 = vadd.f32 %v758, %v1046
  %v1271 = vadd.f32 %v759, %v1055
  %v1272 = vadd.f32 %v760, %v1064
  %v1273 = vadd.f32 %v761, %v1073
  %v1274 = vadd.f32 %v762, %v1082
  %v1275 = vadd.f32 %v763, %v1091
  %v1276 = vadd.f32 %v764, %v1100
  %v1277 = vadd.f32 %v765, %v1109
  %v1278 = vadd.f32 %v766, %v1118
  %v1279 = vadd.f32 %v767, %v1127
  %v1280 = vadd.f32 %v768, %v1136
  %v1281 = vadd.f32 %v769, %v1145
  %v1282 = vadd.f32 %v770, %v1154
  %v1283 = vadd.f32 %v771, %v1163
  %v1284 = vadd.f32 %v772, %v1172
  %v1285 = vadd.f32 %v773, %v1181
  %v1286 = vadd.f32 %v774, %v1190
  %v1287 = vadd.f32 %v775, %v1199
  %v1288 = vadd.f32 %v776, %v1208
  %v1289 = vadd.f32 %v777, %v1217
  %v1290 = vadd.f32 %v778, %v1226
  %v1291 = vadd.f32 %v779, %v1235
  %v1292 = vadd.f32 %v780, %v1244
  %v1293 = vadd.f32 %v781, %v1253
  %v1294 = vadd.f32 %v782, %v1262
  %v1295 = vsel %vm783, %v815, %v1263
  %v1296 = vsel %vm784, %v816, %v1264
  %v1297 = vsel %vm785, %v817, %v1265
  %v1298 = vsel %vm786, %v818, %v1266
  %v1299 = vsel %vm787, %v819, %v1267
  %v1300 = vsel %vm788, %v820, %v1268
  %v1301 = vsel %vm789, %v821, %v1269
  %v1302 = vsel %vm790, %v822, %v1270
  %v1303 = vsel %vm791, %v823, %v1271
  %v1304 = vsel %vm792, %v824, %v1272
  %v1305 = vsel %vm793, %v825, %v1273
  %v1306 = vsel %vm794, %v826, %v1274
  %v1307 = vsel %vm795, %v827, %v1275
  %v1308 = vsel %vm796, %v828, %v1276
  %v1309 = vsel %vm797, %v829, %v1277
  %v1310 = vsel %vm798, %v830, %v1278
  %v1311 = vsel %vm799, %v831, %v1279
  %v1312 = vsel %vm800, %v832, %v1280
  %v1313 = vsel %vm801, %v833, %v1281
  %v1314 = vsel %vm802, %v834, %v1282
  %v1315 = vsel %vm803, %v835, %v1283
  %v1316 = vsel %vm804, %v836, %v1284
  %v1317 = vsel %vm805, %v837, %v1285
  %v1318 = vsel %vm806, %v838, %v1286
  %v1319 = vsel %vm807, %v839, %v1287
  %v1320 = vsel %vm808, %v840, %v1288
  %v1321 = vsel %vm809, %v841, %v1289
  %v1322 = vsel %vm810, %v842, %v1290
  %v1323 = vsel %vm811, %v843, %v1291
  %v1324 = vsel %vm812, %v844, %v1292
  %v1325 = vsel %vm813, %v845, %v1293
  %v1326 = vsel %vm814, %v846, %v1294
  %v1327 = vld [vmem:[%s1] sm:$0xff]
  %v1328 = vld [vmem:[%s1 + $0x8] sm:$0xff]
  %v1329 = vld [vmem:[%s1 + $0x10] sm:$0xff]
  %v1330 = vld [vmem:[%s1 + $0x18] sm:$0xff]
  %v1331 = vld [vmem:[%s1 + $0x20] sm:$0xff]
  %v1332 = vld [vmem:[%s1 + $0x28] sm:$0xff]
  %v1333 = vld [vmem:[%s1 + $0x30] sm:$0xff]
  %v1334 = vld [vmem:[%s1 + $0x38] sm:$0xff]
  %v1335 = vld [vmem:[%s1 + $0x40] sm:$0xff]
  %v1336 = vld [vmem:[%s1 + $0x48] sm:$0xff]
  %v1337 = vld [vmem:[%s1 + $0x50] sm:$0xff]
  %v1338 = vld [vmem:[%s1 + $0x58] sm:$0xff]
  %v1339 = vld [vmem:[%s1 + $0x60] sm:$0xff]
  %v1340 = vld [vmem:[%s1 + $0x68] sm:$0xff]
  %v1341 = vld [vmem:[%s1 + $0x70] sm:$0xff]
  %v1342 = vld [vmem:[%s1 + $0x78] sm:$0xff]
  %v1343 = vld [vmem:[%s1 + $0x80] sm:$0xff]
  %v1344 = vld [vmem:[%s1 + $0x88] sm:$0xff]
  %v1345 = vld [vmem:[%s1 + $0x90] sm:$0xff]
  %v1346 = vld [vmem:[%s1 + $0x98] sm:$0xff]
  %v1347 = vld [vmem:[%s1 + $0xa0] sm:$0xff]
  %v1348 = vld [vmem:[%s1 + $0xa8] sm:$0xff]
  %v1349 = vld [vmem:[%s1 + $0xb0] sm:$0xff]
  %v1350 = vld [vmem:[%s1 + $0xb8] sm:$0xff]
  %v1351 = vld [vmem:[%s1 + $0xc0] sm:$0xff]
  %v1352 = vld [vmem:[%s1 + $0xc8] sm:$0xff]
  %v1353 = vld [vmem:[%s1 + $0xd0] sm:$0xff]
  %v1354 = vld [vmem:[%s1 + $0xd8] sm:$0xff]
  %v1355 = vld [vmem:[%s1 + $0xe0] sm:$0xff]
  %v1356 = vld [vmem:[%s1 + $0xe8] sm:$0xff]
  %v1357 = vld [vmem:[%s1 + $0xf0] sm:$0xff]
  %v1358 = vld [vmem:[%s1 + $0xf8] sm:$0xff]
  %v1359 = vmul.f32 %v1295, %v1327
  %v1360 = vmul.f32 %v1296, %v1328
  %v1361 = vmul.f32 %v1297, %v1329
  %v1362 = vmul.f32 %v1298, %v1330
  %v1363 = vmul.f32 %v1299, %v1331
  %v1364 = vmul.f32 %v1300, %v1332
  %v1365 = vmul.f32 %v1301, %v1333
  %v1366 = vmul.f32 %v1302, %v1334
  %v1367 = vmul.f32 %v1303, %v1335
  %v1368 = vmul.f32 %v1304, %v1336
  %v1369 = vmul.f32 %v1305, %v1337
  %v1370 = vmul.f32 %v1306, %v1338
  %v1371 = vmul.f32 %v1307, %v1339
  %v1372 = vmul.f32 %v1308, %v1340
  %v1373 = vmul.f32 %v1309, %v1341
  %v1374 = vmul.f32 %v1310, %v1342
  %v1375 = vmul.f32 %v1311, %v1343
  %v1376 = vmul.f32 %v1312, %v1344
  %v1377 = vmul.f32 %v1313, %v1345
  %v1378 = vmul.f32 %v1314, %v1346
  %v1379 = vmul.f32 %v1315, %v1347
  %v1380 = vmul.f32 %v1316, %v1348
  %v1381 = vmul.f32 %v1317, %v1349
  %v1382 = vmul.f32 %v1318, %v1350
  %v1383 = vmul.f32 %v1319, %v1351
  %v1384 = vmul.f32 %v1320, %v1352
  %v1385 = vmul.f32 %v1321, %v1353
  %v1386 = vmul.f32 %v1322, %v1354
  %v1387 = vmul.f32 %v1323, %v1355
  %v1388 = vmul.f32 %v1324, %v1356
  %v1389 = vmul.f32 %v1325, %v1357
  %v1390 = vmul.f32 %v1326, %v1358
  %v1391 = vadd.f32 %v593, %v1359
  %v1392 = vadd.f32 %v597, %v1360
  %v1393 = vadd.f32 %v603, %v1361
  %v1394 = vadd.f32 %v607, %v1362
  %v1395 = vadd.f32 %v613, %v1363
  %v1396 = vadd.f32 %v617, %v1364
  %v1397 = vadd.f32 %v623, %v1365
  %v1398 = vadd.f32 %v627, %v1366
  %v1399 = vadd.f32 %v633, %v1367
  %v1400 = vadd.f32 %v637, %v1368
  %v1401 = vadd.f32 %v643, %v1369
  %v1402 = vadd.f32 %v647, %v1370
  %v1403 = vadd.f32 %v653, %v1371
  %v1404 = vadd.f32 %v657, %v1372
  %v1405 = vadd.f32 %v663, %v1373
  %v1406 = vadd.f32 %v667, %v1374
  %v1407 = vadd.f32 %v673, %v1375
  %v1408 = vadd.f32 %v677, %v1376
  %v1409 = vadd.f32 %v683, %v1377
  %v1410 = vadd.f32 %v687, %v1378
  %v1411 = vadd.f32 %v693, %v1379
  %v1412 = vadd.f32 %v697, %v1380
  %v1413 = vadd.f32 %v703, %v1381
  %v1414 = vadd.f32 %v707, %v1382
  %v1415 = vadd.f32 %v713, %v1383
  %v1416 = vadd.f32 %v717, %v1384
  %v1417 = vadd.f32 %v723, %v1385
  %v1418 = vadd.f32 %v727, %v1386
  %v1419 = vadd.f32 %v733, %v1387
  %v1420 = vadd.f32 %v737, %v1388
  %v1421 = vadd.f32 %v743, %v1389
  %v1422 = vadd.f32 %v747, %v1390
  %v1424 = vlaneseq
  %v1425 = vshrl.u32 %v1424, 7
  %v1426 = vsub.s32 0, %v1425
  %v1427 = vrot.slane %v79, %v1426
  %v1429 = vmul.f32 %v419, %v1427
  %v1430 = vmul.f32 %v420, %v1427
  %v1431 = vmul.f32 %v421, %v1427
  %v1432 = vmul.f32 %v422, %v1427
  %v1433 = vmul.f32 %v423, %v1427
  %v1434 = vmul.f32 %v424, %v1427
  %v1435 = vmul.f32 %v425, %v1427
  %v1436 = vmul.f32 %v426, %v1427
  %v1437 = vmul.f32 %v427, %v1427
  %v1438 = vmul.f32 %v428, %v1427
  %v1439 = vmul.f32 %v429, %v1427
  %v1440 = vmul.f32 %v430, %v1427
  %v1441 = vmul.f32 %v431, %v1427
  %v1442 = vmul.f32 %v432, %v1427
  %v1443 = vmul.f32 %v433, %v1427
  %v1444 = vmul.f32 %v434, %v1427
  %v1445 = vmul.f32 %v435, %v1427
  %v1446 = vmul.f32 %v436, %v1427
  %v1447 = vmul.f32 %v437, %v1427
  %v1448 = vmul.f32 %v438, %v1427
  %v1449 = vmul.f32 %v439, %v1427
  %v1450 = vmul.f32 %v440, %v1427
  %v1451 = vmul.f32 %v441, %v1427
  %v1452 = vmul.f32 %v442, %v1427
  %v1453 = vmul.f32 %v443, %v1427
  %v1454 = vmul.f32 %v444, %v1427
  %v1455 = vmul.f32 %v445, %v1427
  %v1456 = vmul.f32 %v446, %v1427
  %v1457 = vmul.f32 %v447, %v1427
  %v1458 = vmul.f32 %v448, %v1427
  %v1459 = vmul.f32 %v449, %v1427
  %v1460 = vmul.f32 %v450, %v1427
  %1461 = vadd.xlane.f32.xlu0 %v1429
  %v1462 = vpop.xlane.xlu0 %1461
  %1463 = vadd.xlane.f32.xlu0 %v1430
  %v1464 = vpop.xlane.xlu0 %1463
  %1465 = vadd.xlane.f32.xlu0 %v1431
  %v1466 = vpop.xlane.xlu0 %1465
  %1467 = vadd.xlane.f32.xlu0 %v1432
  %v1468 = vpop.xlane.xlu0 %1467
  %1469 = vadd.xlane.f32.xlu0 %v1433
  %v1470 = vpop.xlane.xlu0 %1469
  %1471 = vadd.xlane.f32.xlu0 %v1434
  %v1472 = vpop.xlane.xlu0 %1471
  %1473 = vadd.xlane.f32.xlu0 %v1435
  %v1474 = vpop.xlane.xlu0 %1473
  %1475 = vadd.xlane.f32.xlu0 %v1436
  %v1476 = vpop.xlane.xlu0 %1475
  %1477 = vadd.xlane.f32.xlu0 %v1437
  %v1478 = vpop.xlane.xlu0 %1477
  %1479 = vadd.xlane.f32.xlu0 %v1438
  %v1480 = vpop.xlane.xlu0 %1479
  %1481 = vadd.xlane.f32.xlu0 %v1439
  %v1482 = vpop.xlane.xlu0 %1481
  %1483 = vadd.xlane.f32.xlu0 %v1440
  %v1484 = vpop.xlane.xlu0 %1483
  %1485 = vadd.xlane.f32.xlu0 %v1441
  %v1486 = vpop.xlane.xlu0 %1485
  %1487 = vadd.xlane.f32.xlu0 %v1442
  %v1488 = vpop.xlane.xlu0 %1487
  %1489 = vadd.xlane.f32.xlu0 %v1443
  %v1490 = vpop.xlane.xlu0 %1489
  %1491 = vadd.xlane.f32.xlu0 %v1444
  %v1492 = vpop.xlane.xlu0 %1491
  %1493 = vadd.xlane.f32.xlu0 %v1445
  %v1494 = vpop.xlane.xlu0 %1493
  %1495 = vadd.xlane.f32.xlu0 %v1446
  %v1496 = vpop.xlane.xlu0 %1495
  %1497 = vadd.xlane.f32.xlu0 %v1447
  %v1498 = vpop.xlane.xlu0 %1497
  %1499 = vadd.xlane.f32.xlu0 %v1448
  %v1500 = vpop.xlane.xlu0 %1499
  %1501 = vadd.xlane.f32.xlu0 %v1449
  %v1502 = vpop.xlane.xlu0 %1501
  %1503 = vadd.xlane.f32.xlu0 %v1450
  %v1504 = vpop.xlane.xlu0 %1503
  %1505 = vadd.xlane.f32.xlu0 %v1451
  %v1506 = vpop.xlane.xlu0 %1505
  %1507 = vadd.xlane.f32.xlu0 %v1452
  %v1508 = vpop.xlane.xlu0 %1507
  %1509 = vadd.xlane.f32.xlu0 %v1453
  %v1510 = vpop.xlane.xlu0 %1509
  %1511 = vadd.xlane.f32.xlu0 %v1454
  %v1512 = vpop.xlane.xlu0 %1511
  %1513 = vadd.xlane.f32.xlu0 %v1455
  %v1514 = vpop.xlane.xlu0 %1513
  %1515 = vadd.xlane.f32.xlu0 %v1456
  %v1516 = vpop.xlane.xlu0 %1515
  %1517 = vadd.xlane.f32.xlu0 %v1457
  %v1518 = vpop.xlane.xlu0 %1517
  %1519 = vadd.xlane.f32.xlu0 %v1458
  %v1520 = vpop.xlane.xlu0 %1519
  %1521 = vadd.xlane.f32.xlu0 %v1459
  %v1522 = vpop.xlane.xlu0 %1521
  %1523 = vadd.xlane.f32.xlu0 %v1460
  %v1524 = vpop.xlane.xlu0 %1523
  %v1526 = vlaneseq
  %v1527 = vshrl.u32 %v1526, 7
  %v1528 = vsub.s32 0, %v1527
  %v1529 = vrot.slane %v80, %v1528
  %v1531 = vmul.f32 %v1391, %v1529
  %v1532 = vmul.f32 %v1392, %v1529
  %v1533 = vmul.f32 %v1393, %v1529
  %v1534 = vmul.f32 %v1394, %v1529
  %v1535 = vmul.f32 %v1395, %v1529
  %v1536 = vmul.f32 %v1396, %v1529
  %v1537 = vmul.f32 %v1397, %v1529
  %v1538 = vmul.f32 %v1398, %v1529
  %v1539 = vmul.f32 %v1399, %v1529
  %v1540 = vmul.f32 %v1400, %v1529
  %v1541 = vmul.f32 %v1401, %v1529
  %v1542 = vmul.f32 %v1402, %v1529
  %v1543 = vmul.f32 %v1403, %v1529
  %v1544 = vmul.f32 %v1404, %v1529
  %v1545 = vmul.f32 %v1405, %v1529
  %v1546 = vmul.f32 %v1406, %v1529
  %v1547 = vmul.f32 %v1407, %v1529
  %v1548 = vmul.f32 %v1408, %v1529
  %v1549 = vmul.f32 %v1409, %v1529
  %v1550 = vmul.f32 %v1410, %v1529
  %v1551 = vmul.f32 %v1411, %v1529
  %v1552 = vmul.f32 %v1412, %v1529
  %v1553 = vmul.f32 %v1413, %v1529
  %v1554 = vmul.f32 %v1414, %v1529
  %v1555 = vmul.f32 %v1415, %v1529
  %v1556 = vmul.f32 %v1416, %v1529
  %v1557 = vmul.f32 %v1417, %v1529
  %v1558 = vmul.f32 %v1418, %v1529
  %v1559 = vmul.f32 %v1419, %v1529
  %v1560 = vmul.f32 %v1420, %v1529
  %v1561 = vmul.f32 %v1421, %v1529
  %v1562 = vmul.f32 %v1422, %v1529
  %1563 = vadd.xlane.f32.xlu0 %v1531
  %v1564 = vpop.xlane.xlu0 %1563
  %1565 = vadd.xlane.f32.xlu0 %v1532
  %v1566 = vpop.xlane.xlu0 %1565
  %1567 = vadd.xlane.f32.xlu0 %v1533
  %v1568 = vpop.xlane.xlu0 %1567
  %1569 = vadd.xlane.f32.xlu0 %v1534
  %v1570 = vpop.xlane.xlu0 %1569
  %1571 = vadd.xlane.f32.xlu0 %v1535
  %v1572 = vpop.xlane.xlu0 %1571
  %1573 = vadd.xlane.f32.xlu0 %v1536
  %v1574 = vpop.xlane.xlu0 %1573
  %1575 = vadd.xlane.f32.xlu0 %v1537
  %v1576 = vpop.xlane.xlu0 %1575
  %1577 = vadd.xlane.f32.xlu0 %v1538
  %v1578 = vpop.xlane.xlu0 %1577
  %1579 = vadd.xlane.f32.xlu0 %v1539
  %v1580 = vpop.xlane.xlu0 %1579
  %1581 = vadd.xlane.f32.xlu0 %v1540
  %v1582 = vpop.xlane.xlu0 %1581
  %1583 = vadd.xlane.f32.xlu0 %v1541
  %v1584 = vpop.xlane.xlu0 %1583
  %1585 = vadd.xlane.f32.xlu0 %v1542
  %v1586 = vpop.xlane.xlu0 %1585
  %1587 = vadd.xlane.f32.xlu0 %v1543
  %v1588 = vpop.xlane.xlu0 %1587
  %1589 = vadd.xlane.f32.xlu0 %v1544
  %v1590 = vpop.xlane.xlu0 %1589
  %1591 = vadd.xlane.f32.xlu0 %v1545
  %v1592 = vpop.xlane.xlu0 %1591
  %1593 = vadd.xlane.f32.xlu0 %v1546
  %v1594 = vpop.xlane.xlu0 %1593
  %1595 = vadd.xlane.f32.xlu0 %v1547
  %v1596 = vpop.xlane.xlu0 %1595
  %1597 = vadd.xlane.f32.xlu0 %v1548
  %v1598 = vpop.xlane.xlu0 %1597
  %1599 = vadd.xlane.f32.xlu0 %v1549
  %v1600 = vpop.xlane.xlu0 %1599
  %1601 = vadd.xlane.f32.xlu0 %v1550
  %v1602 = vpop.xlane.xlu0 %1601
  %1603 = vadd.xlane.f32.xlu0 %v1551
  %v1604 = vpop.xlane.xlu0 %1603
  %1605 = vadd.xlane.f32.xlu0 %v1552
  %v1606 = vpop.xlane.xlu0 %1605
  %1607 = vadd.xlane.f32.xlu0 %v1553
  %v1608 = vpop.xlane.xlu0 %1607
  %1609 = vadd.xlane.f32.xlu0 %v1554
  %v1610 = vpop.xlane.xlu0 %1609
  %1611 = vadd.xlane.f32.xlu0 %v1555
  %v1612 = vpop.xlane.xlu0 %1611
  %1613 = vadd.xlane.f32.xlu0 %v1556
  %v1614 = vpop.xlane.xlu0 %1613
  %1615 = vadd.xlane.f32.xlu0 %v1557
  %v1616 = vpop.xlane.xlu0 %1615
  %1617 = vadd.xlane.f32.xlu0 %v1558
  %v1618 = vpop.xlane.xlu0 %1617
  %1619 = vadd.xlane.f32.xlu0 %v1559
  %v1620 = vpop.xlane.xlu0 %1619
  %1621 = vadd.xlane.f32.xlu0 %v1560
  %v1622 = vpop.xlane.xlu0 %1621
  %1623 = vadd.xlane.f32.xlu0 %v1561
  %v1624 = vpop.xlane.xlu0 %1623
  %1625 = vadd.xlane.f32.xlu0 %v1562
  %v1626 = vpop.xlane.xlu0 %1625
  %v1627 = vadd.f32 %v1462, %v1564
  %v1628 = vadd.f32 %v1464, %v1566
  %v1629 = vadd.f32 %v1466, %v1568
  %v1630 = vadd.f32 %v1468, %v1570
  %v1631 = vadd.f32 %v1470, %v1572
  %v1632 = vadd.f32 %v1472, %v1574
  %v1633 = vadd.f32 %v1474, %v1576
  %v1634 = vadd.f32 %v1476, %v1578
  %v1635 = vadd.f32 %v1478, %v1580
  %v1636 = vadd.f32 %v1480, %v1582
  %v1637 = vadd.f32 %v1482, %v1584
  %v1638 = vadd.f32 %v1484, %v1586
  %v1639 = vadd.f32 %v1486, %v1588
  %v1640 = vadd.f32 %v1488, %v1590
  %v1641 = vadd.f32 %v1490, %v1592
  %v1642 = vadd.f32 %v1492, %v1594
  %v1643 = vadd.f32 %v1494, %v1596
  %v1644 = vadd.f32 %v1496, %v1598
  %v1645 = vadd.f32 %v1498, %v1600
  %v1646 = vadd.f32 %v1500, %v1602
  %v1647 = vadd.f32 %v1502, %v1604
  %v1648 = vadd.f32 %v1504, %v1606
  %v1649 = vadd.f32 %v1506, %v1608
  %v1650 = vadd.f32 %v1508, %v1610
  %v1651 = vadd.f32 %v1510, %v1612
  %v1652 = vadd.f32 %v1512, %v1614
  %v1653 = vadd.f32 %v1514, %v1616
  %v1654 = vadd.f32 %v1516, %v1618
  %v1655 = vadd.f32 %v1518, %v1620
  %v1656 = vadd.f32 %v1520, %v1622
  %v1657 = vadd.f32 %v1522, %v1624
  %v1658 = vadd.f32 %v1524, %v1626
  %v1659 = vadd.f32 %v1627, 0.0
  %v1660 = vadd.f32 %v1628, 0.0
  %v1661 = vadd.f32 %v1629, 0.0
  %v1662 = vadd.f32 %v1630, 0.0
  %v1663 = vadd.f32 %v1631, 0.0
  %v1664 = vadd.f32 %v1632, 0.0
  %v1665 = vadd.f32 %v1633, 0.0
  %v1666 = vadd.f32 %v1634, 0.0
  %v1667 = vadd.f32 %v1635, 0.0
  %v1668 = vadd.f32 %v1636, 0.0
  %v1669 = vadd.f32 %v1637, 0.0
  %v1670 = vadd.f32 %v1638, 0.0
  %v1671 = vadd.f32 %v1639, 0.0
  %v1672 = vadd.f32 %v1640, 0.0
  %v1673 = vadd.f32 %v1641, 0.0
  %v1674 = vadd.f32 %v1642, 0.0
  %v1675 = vadd.f32 %v1643, 0.0
  %v1676 = vadd.f32 %v1644, 0.0
  %v1677 = vadd.f32 %v1645, 0.0
  %v1678 = vadd.f32 %v1646, 0.0
  %v1679 = vadd.f32 %v1647, 0.0
  %v1680 = vadd.f32 %v1648, 0.0
  %v1681 = vadd.f32 %v1649, 0.0
  %v1682 = vadd.f32 %v1650, 0.0
  %v1683 = vadd.f32 %v1651, 0.0
  %v1684 = vadd.f32 %v1652, 0.0
  %v1685 = vadd.f32 %v1653, 0.0
  %v1686 = vadd.f32 %v1654, 0.0
  %v1687 = vadd.f32 %v1655, 0.0
  %v1688 = vadd.f32 %v1656, 0.0
  %v1689 = vadd.f32 %v1657, 0.0
  %v1690 = vadd.f32 %v1658, 0.0
  %v1691 = vpack.c.bf16 %v1392, %v1391
  %v1692 = vpack.c.bf16 %v1394, %v1393
  %v1693 = vpack.c.bf16 %v1396, %v1395
  %v1694 = vpack.c.bf16 %v1398, %v1397
  %v1695 = vpack.c.bf16 %v1400, %v1399
  %v1696 = vpack.c.bf16 %v1402, %v1401
  %v1697 = vpack.c.bf16 %v1404, %v1403
  %v1698 = vpack.c.bf16 %v1406, %v1405
  %v1699 = vpack.c.bf16 %v1408, %v1407
  %v1700 = vpack.c.bf16 %v1410, %v1409
  %v1701 = vpack.c.bf16 %v1412, %v1411
  %v1702 = vpack.c.bf16 %v1414, %v1413
  %v1703 = vpack.c.bf16 %v1416, %v1415
  %v1704 = vpack.c.bf16 %v1418, %v1417
  %v1705 = vpack.c.bf16 %v1420, %v1419
  %v1706 = vpack.c.bf16 %v1422, %v1421
  %s1707 = scalar_lea.vmem %s0, 256
  %v1708 = vld [vmem:[%s1707] sm:$0xff]
  %v1709 = vld [vmem:[%s1707 + $0x8] sm:$0xff]
  %v1710 = vld [vmem:[%s1707 + $0x10] sm:$0xff]
  %v1711 = vld [vmem:[%s1707 + $0x18] sm:$0xff]
  %v1712 = vld [vmem:[%s1707 + $0x20] sm:$0xff]
  %v1713 = vld [vmem:[%s1707 + $0x28] sm:$0xff]
  %v1714 = vld [vmem:[%s1707 + $0x30] sm:$0xff]
  %v1715 = vld [vmem:[%s1707 + $0x38] sm:$0xff]
  %v1716 = vld [vmem:[%s1707 + $0x40] sm:$0xff]
  %v1717 = vld [vmem:[%s1707 + $0x48] sm:$0xff]
  %v1718 = vld [vmem:[%s1707 + $0x50] sm:$0xff]
  %v1719 = vld [vmem:[%s1707 + $0x58] sm:$0xff]
  %v1720 = vld [vmem:[%s1707 + $0x60] sm:$0xff]
  %v1721 = vld [vmem:[%s1707 + $0x68] sm:$0xff]
  %v1722 = vld [vmem:[%s1707 + $0x70] sm:$0xff]
  %v1723 = vld [vmem:[%s1707 + $0x78] sm:$0xff]
  %v1724 = vld [vmem:[%s1707 + $0x80] sm:$0xff]
  %v1725 = vld [vmem:[%s1707 + $0x88] sm:$0xff]
  %v1726 = vld [vmem:[%s1707 + $0x90] sm:$0xff]
  %v1727 = vld [vmem:[%s1707 + $0x98] sm:$0xff]
  %v1728 = vld [vmem:[%s1707 + $0xa0] sm:$0xff]
  %v1729 = vld [vmem:[%s1707 + $0xa8] sm:$0xff]
  %v1730 = vld [vmem:[%s1707 + $0xb0] sm:$0xff]
  %v1731 = vld [vmem:[%s1707 + $0xb8] sm:$0xff]
  %v1732 = vld [vmem:[%s1707 + $0xc0] sm:$0xff]
  %v1733 = vld [vmem:[%s1707 + $0xc8] sm:$0xff]
  %v1734 = vld [vmem:[%s1707 + $0xd0] sm:$0xff]
  %v1735 = vld [vmem:[%s1707 + $0xd8] sm:$0xff]
  %v1736 = vld [vmem:[%s1707 + $0xe0] sm:$0xff]
  %v1737 = vld [vmem:[%s1707 + $0xe8] sm:$0xff]
  %v1738 = vld [vmem:[%s1707 + $0xf0] sm:$0xff]
  %v1739 = vld [vmem:[%s1707 + $0xf8] sm:$0xff]
  %1740 = vmatprep.subr.bf16.mxu0 0
  %1741 = vmatpush1.bf16.msra.mxu0 %v226
  %1742 = vmatprep.subr.bf16.mxu0 0
  %1743 = vmatpush1.bf16.msra.mxu0 %v227
  %1744 = vmatprep.subr.bf16.mxu0 0
  %1745 = vmatpush1.bf16.msra.mxu0 %v228
  %1746 = vmatprep.subr.bf16.mxu0 0
  %1747 = vmatpush1.bf16.msra.mxu0 %v229
  %1748 = vmatprep.subr.bf16.mxu0 0
  %1749 = vmatpush1.bf16.msra.mxu0 %v230
  %1750 = vmatprep.subr.bf16.mxu0 0
  %1751 = vmatpush1.bf16.msra.mxu0 %v231
  %1752 = vmatprep.subr.bf16.mxu0 0
  %1753 = vmatpush1.bf16.msra.mxu0 %v232
  %1754 = vmatprep.subr.bf16.mxu0 0
  %1755 = vmatpush1.bf16.msra.mxu0 %v233
  %1756 = vmatprep.subr.bf16.mxu0 0
  %1757 = vmatpush1.bf16.msra.mxu0 %v234
  %1758 = vmatprep.subr.bf16.mxu0 0
  %1759 = vmatpush1.bf16.msra.mxu0 %v235
  %1760 = vmatprep.subr.bf16.mxu0 0
  %1761 = vmatpush1.bf16.msra.mxu0 %v236
  %1762 = vmatprep.subr.bf16.mxu0 0
  %1763 = vmatpush1.bf16.msra.mxu0 %v237
  %1764 = vmatprep.subr.bf16.mxu0 0
  %1765 = vmatpush1.bf16.msra.mxu0 %v238
  %1766 = vmatprep.subr.bf16.mxu0 0
  %1767 = vmatpush1.bf16.msra.mxu0 %v239
  %1768 = vmatprep.subr.bf16.mxu0 0
  %1769 = vmatpush1.bf16.msra.mxu0 %v240
  %1770 = vmatprep.subr.bf16.mxu0 0
  %1771 = vmatpush1.bf16.msra.mxu0 %v241
  %1772 = vmatprep.mubr.bf16.mxu0 %v1691
  %1773 = vmatmul.mubr.bf16.gmra.mrb[0].mxu0 %v451
  %v1774 = vpop.f32.mrb[0].mxu0
  %v1775 = vadd.f32 %v1708, %v1774
  %v1776 = vpop.f32.mrb[0].mxu0
  %v1777 = vpop.f32.mrb[0].mxu0
  %v1778 = vadd.f32 %v1709, %v1777
  %v1779 = vpop.f32.mrb[0].mxu0
  %1780 = vmatprep.mubr.bf16.mxu0 %v1692
  %1781 = vmatmul.mubr.bf16.gmra.mrb[0].mxu0 %v452
  %v1782 = vpop.f32.mrb[0].mxu0
  %v1783 = vadd.f32 %v1710, %v1782
  %v1784 = vpop.f32.mrb[0].mxu0
  %v1785 = vpop.f32.mrb[0].mxu0
  %v1786 = vadd.f32 %v1711, %v1785
  %v1787 = vpop.f32.mrb[0].mxu0
  %1788 = vmatprep.mubr.bf16.mxu0 %v1693
  %1789 = vmatmul.mubr.bf16.gmra.mrb[0].mxu0 %v453
  %v1790 = vpop.f32.mrb[0].mxu0
  %v1791 = vadd.f32 %v1712, %v1790
  %v1792 = vpop.f32.mrb[0].mxu0
  %v1793 = vpop.f32.mrb[0].mxu0
  %v1794 = vadd.f32 %v1713, %v1793
  %v1795 = vpop.f32.mrb[0].mxu0
  %1796 = vmatprep.mubr.bf16.mxu0 %v1694
  %1797 = vmatmul.mubr.bf16.gmra.mrb[0].mxu0 %v454
  %v1798 = vpop.f32.mrb[0].mxu0
  %v1799 = vadd.f32 %v1714, %v1798
  %v1800 = vpop.f32.mrb[0].mxu0
  %v1801 = vpop.f32.mrb[0].mxu0
  %v1802 = vadd.f32 %v1715, %v1801
  %v1803 = vpop.f32.mrb[0].mxu0
  %1804 = vmatprep.mubr.bf16.mxu0 %v1695
  %1805 = vmatmul.mubr.bf16.gmra.mrb[0].mxu0 %v455
  %v1806 = vpop.f32.mrb[0].mxu0
  %v1807 = vadd.f32 %v1716, %v1806
  %v1808 = vpop.f32.mrb[0].mxu0
  %v1809 = vpop.f32.mrb[0].mxu0
  %v1810 = vadd.f32 %v1717, %v1809
  %v1811 = vpop.f32.mrb[0].mxu0
  %1812 = vmatprep.mubr.bf16.mxu0 %v1696
  %1813 = vmatmul.mubr.bf16.gmra.mrb[0].mxu0 %v456
  %v1814 = vpop.f32.mrb[0].mxu0
  %v1815 = vadd.f32 %v1718, %v1814
  %v1816 = vpop.f32.mrb[0].mxu0
  %v1817 = vpop.f32.mrb[0].mxu0
  %v1818 = vadd.f32 %v1719, %v1817
  %v1819 = vpop.f32.mrb[0].mxu0
  %1820 = vmatprep.mubr.bf16.mxu0 %v1697
  %1821 = vmatmul.mubr.bf16.gmra.mrb[0].mxu0 %v457
  %v1822 = vpop.f32.mrb[0].mxu0
  %v1823 = vadd.f32 %v1720, %v1822
  %v1824 = vpop.f32.mrb[0].mxu0
  %v1825 = vpop.f32.mrb[0].mxu0
  %v1826 = vadd.f32 %v1721, %v1825
  %v1827 = vpop.f32.mrb[0].mxu0
  %1828 = vmatprep.mubr.bf16.mxu0 %v1698
  %1829 = vmatmul.mubr.bf16.gmra.mrb[0].mxu0 %v458
  %v1830 = vpop.f32.mrb[0].mxu0
  %v1831 = vadd.f32 %v1722, %v1830
  %v1832 = vpop.f32.mrb[0].mxu0
  %v1833 = vpop.f32.mrb[0].mxu0
  %v1834 = vadd.f32 %v1723, %v1833
  %v1835 = vpop.f32.mrb[0].mxu0
  %1836 = vmatprep.mubr.bf16.mxu0 %v1699
  %1837 = vmatmul.mubr.bf16.gmra.mrb[0].mxu0 %v459
  %v1838 = vpop.f32.mrb[0].mxu0
  %v1839 = vadd.f32 %v1724, %v1838
  %v1840 = vpop.f32.mrb[0].mxu0
  %v1841 = vpop.f32.mrb[0].mxu0
  %v1842 = vadd.f32 %v1725, %v1841
  %v1843 = vpop.f32.mrb[0].mxu0
  %1844 = vmatprep.mubr.bf16.mxu0 %v1700
  %1845 = vmatmul.mubr.bf16.gmra.mrb[0].mxu0 %v460
  %v1846 = vpop.f32.mrb[0].mxu0
  %v1847 = vadd.f32 %v1726, %v1846
  %v1848 = vpop.f32.mrb[0].mxu0
  %v1849 = vpop.f32.mrb[0].mxu0
  %v1850 = vadd.f32 %v1727, %v1849
  %v1851 = vpop.f32.mrb[0].mxu0
  %1852 = vmatprep.mubr.bf16.mxu0 %v1701
  %1853 = vmatmul.mubr.bf16.gmra.mrb[0].mxu0 %v461
  %v1854 = vpop.f32.mrb[0].mxu0
  %v1855 = vadd.f32 %v1728, %v1854
  %v1856 = vpop.f32.mrb[0].mxu0
  %v1857 = vpop.f32.mrb[0].mxu0
  %v1858 = vadd.f32 %v1729, %v1857
  %v1859 = vpop.f32.mrb[0].mxu0
  %1860 = vmatprep.mubr.bf16.mxu0 %v1702
  %1861 = vmatmul.mubr.bf16.gmra.mrb[0].mxu0 %v462
  %v1862 = vpop.f32.mrb[0].mxu0
  %v1863 = vadd.f32 %v1730, %v1862
  %v1864 = vpop.f32.mrb[0].mxu0
  %v1865 = vpop.f32.mrb[0].mxu0
  %v1866 = vadd.f32 %v1731, %v1865
  %v1867 = vpop.f32.mrb[0].mxu0
  %1868 = vmatprep.mubr.bf16.mxu0 %v1703
  %1869 = vmatmul.mubr.bf16.gmra.mrb[0].mxu0 %v463
  %v1870 = vpop.f32.mrb[0].mxu0
  %v1871 = vadd.f32 %v1732, %v1870
  %v1872 = vpop.f32.mrb[0].mxu0
  %v1873 = vpop.f32.mrb[0].mxu0
  %v1874 = vadd.f32 %v1733, %v1873
  %v1875 = vpop.f32.mrb[0].mxu0
  %1876 = vmatprep.mubr.bf16.mxu0 %v1704
  %1877 = vmatmul.mubr.bf16.gmra.mrb[0].mxu0 %v464
  %v1878 = vpop.f32.mrb[0].mxu0
  %v1879 = vadd.f32 %v1734, %v1878
  %v1880 = vpop.f32.mrb[0].mxu0
  %v1881 = vpop.f32.mrb[0].mxu0
  %v1882 = vadd.f32 %v1735, %v1881
  %v1883 = vpop.f32.mrb[0].mxu0
  %1884 = vmatprep.mubr.bf16.mxu0 %v1705
  %1885 = vmatmul.mubr.bf16.gmra.mrb[0].mxu0 %v465
  %v1886 = vpop.f32.mrb[0].mxu0
  %v1887 = vadd.f32 %v1736, %v1886
  %v1888 = vpop.f32.mrb[0].mxu0
  %v1889 = vpop.f32.mrb[0].mxu0
  %v1890 = vadd.f32 %v1737, %v1889
  %v1891 = vpop.f32.mrb[0].mxu0
  %1892 = vmatprep.mubr.bf16.mxu0 %v1706
  %1893 = vmatmul.mubr.bf16.gmra.mrb[0].mxu0 %v466
  %v1894 = vpop.f32.mrb[0].mxu0
  %v1895 = vadd.f32 %v1738, %v1894
  %v1896 = vpop.f32.mrb[0].mxu0
  %v1897 = vpop.f32.mrb[0].mxu0
  %v1898 = vadd.f32 %v1739, %v1897
  %v1899 = vpop.f32.mrb[0].mxu0
  %1900 = vdwg.mxu0
  %v1901 = vtanh.pop %v1775
  %v1902 = vtanh.pop %v1778
  %v1903 = vtanh.pop %v1783
  %v1904 = vtanh.pop %v1786
  %v1905 = vtanh.pop %v1791
  %v1906 = vtanh.pop %v1794
  %v1907 = vtanh.pop %v1799
  %v1908 = vtanh.pop %v1802
  %v1909 = vtanh.pop %v1807
  %v1910 = vtanh.pop %v1810
  %v1911 = vtanh.pop %v1815
  %v1912 = vtanh.pop %v1818
  %v1913 = vtanh.pop %v1823
  %v1914 = vtanh.pop %v1826
  %v1915 = vtanh.pop %v1831
  %v1916 = vtanh.pop %v1834
  %v1917 = vtanh.pop %v1839
  %v1918 = vtanh.pop %v1842
  %v1919 = vtanh.pop %v1847
  %v1920 = vtanh.pop %v1850
  %v1921 = vtanh.pop %v1855
  %v1922 = vtanh.pop %v1858
  %v1923 = vtanh.pop %v1863
  %v1924 = vtanh.pop %v1866
  %v1925 = vtanh.pop %v1871
  %v1926 = vtanh.pop %v1874
  %v1927 = vtanh.pop %v1879
  %v1928 = vtanh.pop %v1882
  %v1929 = vtanh.pop %v1887
  %v1930 = vtanh.pop %v1890
  %v1931 = vtanh.pop %v1895
  %v1932 = vtanh.pop %v1898
  %v1933 = vpack.c.bf16 %v1902, %v1901
  %v1934 = vpack.c.bf16 %v1904, %v1903
  %v1935 = vpack.c.bf16 %v1906, %v1905
  %v1936 = vpack.c.bf16 %v1908, %v1907
  %v1937 = vpack.c.bf16 %v1910, %v1909
  %v1938 = vpack.c.bf16 %v1912, %v1911
  %v1939 = vpack.c.bf16 %v1914, %v1913
  %v1940 = vpack.c.bf16 %v1916, %v1915
  %v1941 = vpack.c.bf16 %v1918, %v1917
  %v1942 = vpack.c.bf16 %v1920, %v1919
  %v1943 = vpack.c.bf16 %v1922, %v1921
  %v1944 = vpack.c.bf16 %v1924, %v1923
  %v1945 = vpack.c.bf16 %v1926, %v1925
  %v1946 = vpack.c.bf16 %v1928, %v1927
  %v1947 = vpack.c.bf16 %v1930, %v1929
  %v1948 = vpack.c.bf16 %v1932, %v1931
  %1949 = vmatprep.subr.bf16.mxu0 %v527
  %1950 = vmatpush1.bf16.msra.mxu0 %v526
  %1951 = vmatprep.subr.bf16.mxu0 %v529
  %1952 = vmatpush1.bf16.msra.mxu0 %v528
  %1953 = vmatprep.subr.bf16.mxu0 %v531
  %1954 = vmatpush1.bf16.msra.mxu0 %v530
  %1955 = vmatprep.subr.bf16.mxu0 %v533
  %1956 = vmatpush1.bf16.msra.mxu0 %v532
  %1957 = vmatprep.subr.bf16.mxu0 %v535
  %1958 = vmatpush1.bf16.msra.mxu0 %v534
  %1959 = vmatprep.subr.bf16.mxu0 %v537
  %1960 = vmatpush1.bf16.msra.mxu0 %v536
  %1961 = vmatprep.subr.bf16.mxu0 %v539
  %1962 = vmatpush1.bf16.msra.mxu0 %v538
  %1963 = vmatprep.subr.bf16.mxu0 %v541
  %1964 = vmatpush1.bf16.msra.mxu0 %v540
  %1965 = vmatprep.subr.bf16.mxu0 0
  %1966 = vmatpush1.bf16.msra.mxu0 0
  %1967 = vmatprep.subr.bf16.mxu0 0
  %1968 = vmatpush1.bf16.msra.mxu0 0
  %1969 = vmatprep.subr.bf16.mxu0 0
  %1970 = vmatpush1.bf16.msra.mxu0 0
  %1971 = vmatprep.subr.bf16.mxu0 0
  %1972 = vmatpush1.bf16.msra.mxu0 0
  %1973 = vmatprep.subr.bf16.mxu0 0
  %1974 = vmatpush1.bf16.msra.mxu0 0
  %1975 = vmatprep.subr.bf16.mxu0 0
  %1976 = vmatpush1.bf16.msra.mxu0 0
  %1977 = vmatprep.subr.bf16.mxu0 0
  %1978 = vmatpush1.bf16.msra.mxu0 0
  %1979 = vmatprep.subr.bf16.mxu0 0
  %1980 = vmatpush1.bf16.msra.mxu0 0
  %1981 = vmatprep.mubr.bf16.mxu0 0
  %1982 = vmatmul.mubr.bf16.gmra.mrb[0].mxu0 %v1933
  %v1983 = vpop.f32.mrb[0].mxu0
  %v1984 = vadd.f32 %v471, %v1983
  %v1985 = vpop.f32.mrb[0].mxu0
  %v1986 = vadd.f32 %v475, %v1985
  %v1987 = vpop.f32.mrb[0].mxu0
  %v1988 = vadd.f32 %v471, %v1987
  %v1989 = vpop.f32.mrb[0].mxu0
  %v1990 = vadd.f32 %v475, %v1989
  %1991 = vmatprep.mubr.bf16.mxu0 0
  %1992 = vmatmul.mubr.bf16.gmra.mrb[0].mxu0 %v1934
  %v1993 = vpop.f32.mrb[0].mxu0
  %v1994 = vadd.f32 %v471, %v1993
  %v1995 = vpop.f32.mrb[0].mxu0
  %v1996 = vadd.f32 %v475, %v1995
  %v1997 = vpop.f32.mrb[0].mxu0
  %v1998 = vadd.f32 %v471, %v1997
  %v1999 = vpop.f32.mrb[0].mxu0
  %v2000 = vadd.f32 %v475, %v1999
  %2001 = vmatprep.mubr.bf16.mxu0 0
  %2002 = vmatmul.mubr.bf16.gmra.mrb[0].mxu0 %v1935
  %v2003 = vpop.f32.mrb[0].mxu0
  %v2004 = vadd.f32 %v471, %v2003
  %v2005 = vpop.f32.mrb[0].mxu0
  %v2006 = vadd.f32 %v475, %v2005
  %v2007 = vpop.f32.mrb[0].mxu0
  %v2008 = vadd.f32 %v471, %v2007
  %v2009 = vpop.f32.mrb[0].mxu0
  %v2010 = vadd.f32 %v475, %v2009
  %2011 = vmatprep.mubr.bf16.mxu0 0
  %2012 = vmatmul.mubr.bf16.gmra.mrb[0].mxu0 %v1936
  %v2013 = vpop.f32.mrb[0].mxu0
  %v2014 = vadd.f32 %v471, %v2013
  %v2015 = vpop.f32.mrb[0].mxu0
  %v2016 = vadd.f32 %v475, %v2015
  %v2017 = vpop.f32.mrb[0].mxu0
  %v2018 = vadd.f32 %v471, %v2017
  %v2019 = vpop.f32.mrb[0].mxu0
  %v2020 = vadd.f32 %v475, %v2019
  %2021 = vmatprep.mubr.bf16.mxu0 0
  %2022 = vmatmul.mubr.bf16.gmra.mrb[0].mxu0 %v1937
  %v2023 = vpop.f32.mrb[0].mxu0
  %v2024 = vadd.f32 %v471, %v2023
  %v2025 = vpop.f32.mrb[0].mxu0
  %v2026 = vadd.f32 %v475, %v2025
  %v2027 = vpop.f32.mrb[0].mxu0
  %v2028 = vadd.f32 %v471, %v2027
  %v2029 = vpop.f32.mrb[0].mxu0
  %v2030 = vadd.f32 %v475, %v2029
  %2031 = vmatprep.mubr.bf16.mxu0 0
  %2032 = vmatmul.mubr.bf16.gmra.mrb[0].mxu0 %v1938
  %v2033 = vpop.f32.mrb[0].mxu0
  %v2034 = vadd.f32 %v471, %v2033
  %v2035 = vpop.f32.mrb[0].mxu0
  %v2036 = vadd.f32 %v475, %v2035
  %v2037 = vpop.f32.mrb[0].mxu0
  %v2038 = vadd.f32 %v471, %v2037
  %v2039 = vpop.f32.mrb[0].mxu0
  %v2040 = vadd.f32 %v475, %v2039
  %2041 = vmatprep.mubr.bf16.mxu0 0
  %2042 = vmatmul.mubr.bf16.gmra.mrb[0].mxu0 %v1939
  %v2043 = vpop.f32.mrb[0].mxu0
  %v2044 = vadd.f32 %v471, %v2043
  %v2045 = vpop.f32.mrb[0].mxu0
  %v2046 = vadd.f32 %v475, %v2045
  %v2047 = vpop.f32.mrb[0].mxu0
  %v2048 = vadd.f32 %v471, %v2047
  %v2049 = vpop.f32.mrb[0].mxu0
  %v2050 = vadd.f32 %v475, %v2049
  %2051 = vmatprep.mubr.bf16.mxu0 0
  %2052 = vmatmul.mubr.bf16.gmra.mrb[0].mxu0 %v1940
  %v2053 = vpop.f32.mrb[0].mxu0
  %v2054 = vadd.f32 %v471, %v2053
  %v2055 = vpop.f32.mrb[0].mxu0
  %v2056 = vadd.f32 %v475, %v2055
  %v2057 = vpop.f32.mrb[0].mxu0
  %v2058 = vadd.f32 %v471, %v2057
  %v2059 = vpop.f32.mrb[0].mxu0
  %v2060 = vadd.f32 %v475, %v2059
  %2061 = vmatprep.mubr.bf16.mxu0 0
  %2062 = vmatmul.mubr.bf16.gmra.mrb[0].mxu0 %v1941
  %v2063 = vpop.f32.mrb[0].mxu0
  %v2064 = vadd.f32 %v471, %v2063
  %v2065 = vpop.f32.mrb[0].mxu0
  %v2066 = vadd.f32 %v475, %v2065
  %v2067 = vpop.f32.mrb[0].mxu0
  %v2068 = vadd.f32 %v471, %v2067
  %v2069 = vpop.f32.mrb[0].mxu0
  %v2070 = vadd.f32 %v475, %v2069
  %2071 = vmatprep.mubr.bf16.mxu0 0
  %2072 = vmatmul.mubr.bf16.gmra.mrb[0].mxu0 %v1942
  %v2073 = vpop.f32.mrb[0].mxu0
  %v2074 = vadd.f32 %v471, %v2073
  %v2075 = vpop.f32.mrb[0].mxu0
  %v2076 = vadd.f32 %v475, %v2075
  %v2077 = vpop.f32.mrb[0].mxu0
  %v2078 = vadd.f32 %v471, %v2077
  %v2079 = vpop.f32.mrb[0].mxu0
  %v2080 = vadd.f32 %v475, %v2079
  %2081 = vmatprep.mubr.bf16.mxu0 0
  %2082 = vmatmul.mubr.bf16.gmra.mrb[0].mxu0 %v1943
  %v2083 = vpop.f32.mrb[0].mxu0
  %v2084 = vadd.f32 %v471, %v2083
  %v2085 = vpop.f32.mrb[0].mxu0
  %v2086 = vadd.f32 %v475, %v2085
  %v2087 = vpop.f32.mrb[0].mxu0
  %v2088 = vadd.f32 %v471, %v2087
  %v2089 = vpop.f32.mrb[0].mxu0
  %v2090 = vadd.f32 %v475, %v2089
  %2091 = vmatprep.mubr.bf16.mxu0 0
  %2092 = vmatmul.mubr.bf16.gmra.mrb[0].mxu0 %v1944
  %v2093 = vpop.f32.mrb[0].mxu0
  %v2094 = vadd.f32 %v471, %v2093
  %v2095 = vpop.f32.mrb[0].mxu0
  %v2096 = vadd.f32 %v475, %v2095
  %v2097 = vpop.f32.mrb[0].mxu0
  %v2098 = vadd.f32 %v471, %v2097
  %v2099 = vpop.f32.mrb[0].mxu0
  %v2100 = vadd.f32 %v475, %v2099
  %2101 = vmatprep.mubr.bf16.mxu0 0
  %2102 = vmatmul.mubr.bf16.gmra.mrb[0].mxu0 %v1945
  %v2103 = vpop.f32.mrb[0].mxu0
  %v2104 = vadd.f32 %v471, %v2103
  %v2105 = vpop.f32.mrb[0].mxu0
  %v2106 = vadd.f32 %v475, %v2105
  %v2107 = vpop.f32.mrb[0].mxu0
  %v2108 = vadd.f32 %v471, %v2107
  %v2109 = vpop.f32.mrb[0].mxu0
  %v2110 = vadd.f32 %v475, %v2109
  %2111 = vmatprep.mubr.bf16.mxu0 0
  %2112 = vmatmul.mubr.bf16.gmra.mrb[0].mxu0 %v1946
  %v2113 = vpop.f32.mrb[0].mxu0
  %v2114 = vadd.f32 %v471, %v2113
  %v2115 = vpop.f32.mrb[0].mxu0
  %v2116 = vadd.f32 %v475, %v2115
  %v2117 = vpop.f32.mrb[0].mxu0
  %v2118 = vadd.f32 %v471, %v2117
  %v2119 = vpop.f32.mrb[0].mxu0
  %v2120 = vadd.f32 %v475, %v2119
  %2121 = vmatprep.mubr.bf16.mxu0 0
  %2122 = vmatmul.mubr.bf16.gmra.mrb[0].mxu0 %v1947
  %v2123 = vpop.f32.mrb[0].mxu0
  %v2124 = vadd.f32 %v471, %v2123
  %v2125 = vpop.f32.mrb[0].mxu0
  %v2126 = vadd.f32 %v475, %v2125
  %v2127 = vpop.f32.mrb[0].mxu0
  %v2128 = vadd.f32 %v471, %v2127
  %v2129 = vpop.f32.mrb[0].mxu0
  %v2130 = vadd.f32 %v475, %v2129
  %2131 = vmatprep.mubr.bf16.mxu0 0
  %2132 = vmatmul.mubr.bf16.gmra.mrb[0].mxu0 %v1948
  %v2133 = vpop.f32.mrb[0].mxu0
  %v2134 = vadd.f32 %v471, %v2133
  %v2135 = vpop.f32.mrb[0].mxu0
  %v2136 = vadd.f32 %v475, %v2135
  %v2137 = vpop.f32.mrb[0].mxu0
  %v2138 = vadd.f32 %v471, %v2137
  %v2139 = vpop.f32.mrb[0].mxu0
  %v2140 = vadd.f32 %v475, %v2139
  %2141 = vdwg.mxu0
  %v2142 = vmax.f32 %v1986, 0.0
  %v2143 = vmax.f32 %v1990, 0.0
  %v2144 = vmax.f32 %v1996, 0.0
  %v2145 = vmax.f32 %v2000, 0.0
  %v2146 = vmax.f32 %v2006, 0.0
  %v2147 = vmax.f32 %v2010, 0.0
  %v2148 = vmax.f32 %v2016, 0.0
  %v2149 = vmax.f32 %v2020, 0.0
  %v2150 = vmax.f32 %v2026, 0.0
  %v2151 = vmax.f32 %v2030, 0.0
  %v2152 = vmax.f32 %v2036, 0.0
  %v2153 = vmax.f32 %v2040, 0.0
  %v2154 = vmax.f32 %v2046, 0.0
  %v2155 = vmax.f32 %v2050, 0.0
  %v2156 = vmax.f32 %v2056, 0.0
  %v2157 = vmax.f32 %v2060, 0.0
  %v2158 = vmax.f32 %v2066, 0.0
  %v2159 = vmax.f32 %v2070, 0.0
  %v2160 = vmax.f32 %v2076, 0.0
  %v2161 = vmax.f32 %v2080, 0.0
  %v2162 = vmax.f32 %v2086, 0.0
  %v2163 = vmax.f32 %v2090, 0.0
  %v2164 = vmax.f32 %v2096, 0.0
  %v2165 = vmax.f32 %v2100, 0.0
  %v2166 = vmax.f32 %v2106, 0.0
  %v2167 = vmax.f32 %v2110, 0.0
  %v2168 = vmax.f32 %v2116, 0.0
  %v2169 = vmax.f32 %v2120, 0.0
  %v2170 = vmax.f32 %v2126, 0.0
  %v2171 = vmax.f32 %v2130, 0.0
  %v2172 = vmax.f32 %v2136, 0.0
  %v2173 = vmax.f32 %v2140, 0.0
  %vm2174 = vcmp.ne.f32.partialorder %v1986, %v1986
  %vm2175 = vcmp.ne.f32.partialorder %v1990, %v1990
  %vm2176 = vcmp.ne.f32.partialorder %v1996, %v1996
  %vm2177 = vcmp.ne.f32.partialorder %v2000, %v2000
  %vm2178 = vcmp.ne.f32.partialorder %v2006, %v2006
  %vm2179 = vcmp.ne.f32.partialorder %v2010, %v2010
  %vm2180 = vcmp.ne.f32.partialorder %v2016, %v2016
  %vm2181 = vcmp.ne.f32.partialorder %v2020, %v2020
  %vm2182 = vcmp.ne.f32.partialorder %v2026, %v2026
  %vm2183 = vcmp.ne.f32.partialorder %v2030, %v2030
  %vm2184 = vcmp.ne.f32.partialorder %v2036, %v2036
  %vm2185 = vcmp.ne.f32.partialorder %v2040, %v2040
  %vm2186 = vcmp.ne.f32.partialorder %v2046, %v2046
  %vm2187 = vcmp.ne.f32.partialorder %v2050, %v2050
  %vm2188 = vcmp.ne.f32.partialorder %v2056, %v2056
  %vm2189 = vcmp.ne.f32.partialorder %v2060, %v2060
  %vm2190 = vcmp.ne.f32.partialorder %v2066, %v2066
  %vm2191 = vcmp.ne.f32.partialorder %v2070, %v2070
  %vm2192 = vcmp.ne.f32.partialorder %v2076, %v2076
  %vm2193 = vcmp.ne.f32.partialorder %v2080, %v2080
  %vm2194 = vcmp.ne.f32.partialorder %v2086, %v2086
  %vm2195 = vcmp.ne.f32.partialorder %v2090, %v2090
  %vm2196 = vcmp.ne.f32.partialorder %v2096, %v2096
  %vm2197 = vcmp.ne.f32.partialorder %v2100, %v2100
  %vm2198 = vcmp.ne.f32.partialorder %v2106, %v2106
  %vm2199 = vcmp.ne.f32.partialorder %v2110, %v2110
  %vm2200 = vcmp.ne.f32.partialorder %v2116, %v2116
  %vm2201 = vcmp.ne.f32.partialorder %v2120, %v2120
  %vm2202 = vcmp.ne.f32.partialorder %v2126, %v2126
  %vm2203 = vcmp.ne.f32.partialorder %v2130, %v2130
  %vm2204 = vcmp.ne.f32.partialorder %v2136, %v2136
  %vm2205 = vcmp.ne.f32.partialorder %v2140, %v2140
  %v2206 = vadd.f32 %v1986, 0.0
  %v2207 = vadd.f32 %v1990, 0.0
  %v2208 = vadd.f32 %v1996, 0.0
  %v2209 = vadd.f32 %v2000, 0.0
  %v2210 = vadd.f32 %v2006, 0.0
  %v2211 = vadd.f32 %v2010, 0.0
  %v2212 = vadd.f32 %v2016, 0.0
  %v2213 = vadd.f32 %v2020, 0.0
  %v2214 = vadd.f32 %v2026, 0.0
  %v2215 = vadd.f32 %v2030, 0.0
  %v2216 = vadd.f32 %v2036, 0.0
  %v2217 = vadd.f32 %v2040, 0.0
  %v2218 = vadd.f32 %v2046, 0.0
  %v2219 = vadd.f32 %v2050, 0.0
  %v2220 = vadd.f32 %v2056, 0.0
  %v2221 = vadd.f32 %v2060, 0.0
  %v2222 = vadd.f32 %v2066, 0.0
  %v2223 = vadd.f32 %v2070, 0.0
  %v2224 = vadd.f32 %v2076, 0.0
  %v2225 = vadd.f32 %v2080, 0.0
  %v2226 = vadd.f32 %v2086, 0.0
  %v2227 = vadd.f32 %v2090, 0.0
  %v2228 = vadd.f32 %v2096, 0.0
  %v2229 = vadd.f32 %v2100, 0.0
  %v2230 = vadd.f32 %v2106, 0.0
  %v2231 = vadd.f32 %v2110, 0.0
  %v2232 = vadd.f32 %v2116, 0.0
  %v2233 = vadd.f32 %v2120, 0.0
  %v2234 = vadd.f32 %v2126, 0.0
  %v2235 = vadd.f32 %v2130, 0.0
  %v2236 = vadd.f32 %v2136, 0.0
  %v2237 = vadd.f32 %v2140, 0.0
  %v2238 = vand.u32 2147483647, %v1986
  %v2239 = vand.u32 2147483647, %v1990
  %v2240 = vand.u32 2147483647, %v1996
  %v2241 = vand.u32 2147483647, %v2000
  %v2242 = vand.u32 2147483647, %v2006
  %v2243 = vand.u32 2147483647, %v2010
  %v2244 = vand.u32 2147483647, %v2016
  %v2245 = vand.u32 2147483647, %v2020
  %v2246 = vand.u32 2147483647, %v2026
  %v2247 = vand.u32 2147483647, %v2030
  %v2248 = vand.u32 2147483647, %v2036
  %v2249 = vand.u32 2147483647, %v2040
  %v2250 = vand.u32 2147483647, %v2046
  %v2251 = vand.u32 2147483647, %v2050
  %v2252 = vand.u32 2147483647, %v2056
  %v2253 = vand.u32 2147483647, %v2060
  %v2254 = vand.u32 2147483647, %v2066
  %v2255 = vand.u32 2147483647, %v2070
  %v2256 = vand.u32 2147483647, %v2076
  %v2257 = vand.u32 2147483647, %v2080
  %v2258 = vand.u32 2147483647, %v2086
  %v2259 = vand.u32 2147483647, %v2090
  %v2260 = vand.u32 2147483647, %v2096
  %v2261 = vand.u32 2147483647, %v2100
  %v2262 = vand.u32 2147483647, %v2106
  %v2263 = vand.u32 2147483647, %v2110
  %v2264 = vand.u32 2147483647, %v2116
  %v2265 = vand.u32 2147483647, %v2120
  %v2266 = vand.u32 2147483647, %v2126
  %v2267 = vand.u32 2147483647, %v2130
  %v2268 = vand.u32 2147483647, %v2136
  %v2269 = vand.u32 2147483647, %v2140
  %v2270 = vsub.f32 0.0, %v2238
  %v2271 = vsub.f32 0.0, %v2239
  %v2272 = vsub.f32 0.0, %v2240
  %v2273 = vsub.f32 0.0, %v2241
  %v2274 = vsub.f32 0.0, %v2242
  %v2275 = vsub.f32 0.0, %v2243
  %v2276 = vsub.f32 0.0, %v2244
  %v2277 = vsub.f32 0.0, %v2245
  %v2278 = vsub.f32 0.0, %v2246
  %v2279 = vsub.f32 0.0, %v2247
  %v2280 = vsub.f32 0.0, %v2248
  %v2281 = vsub.f32 0.0, %v2249
  %v2282 = vsub.f32 0.0, %v2250
  %v2283 = vsub.f32 0.0, %v2251
  %v2284 = vsub.f32 0.0, %v2252
  %v2285 = vsub.f32 0.0, %v2253
  %v2286 = vsub.f32 0.0, %v2254
  %v2287 = vsub.f32 0.0, %v2255
  %v2288 = vsub.f32 0.0, %v2256
  %v2289 = vsub.f32 0.0, %v2257
  %v2290 = vsub.f32 0.0, %v2258
  %v2291 = vsub.f32 0.0, %v2259
  %v2292 = vsub.f32 0.0, %v2260
  %v2293 = vsub.f32 0.0, %v2261
  %v2294 = vsub.f32 0.0, %v2262
  %v2295 = vsub.f32 0.0, %v2263
  %v2296 = vsub.f32 0.0, %v2264
  %v2297 = vsub.f32 0.0, %v2265
  %v2298 = vsub.f32 0.0, %v2266
  %v2299 = vsub.f32 0.0, %v2267
  %v2300 = vsub.f32 0.0, %v2268
  %v2301 = vsub.f32 0.0, %v2269
  %v2302 = vmul.f32 %v2270, 1.442695
  %v2303 = vpow.pop %v2302
  %v2304 = vmul.f32 %v2271, 1.442695
  %v2305 = vpow.pop %v2304
  %v2306 = vmul.f32 %v2272, 1.442695
  %v2307 = vpow.pop %v2306
  %v2308 = vmul.f32 %v2273, 1.442695
  %v2309 = vpow.pop %v2308
  %v2310 = vmul.f32 %v2274, 1.442695
  %v2311 = vpow.pop %v2310
  %v2312 = vmul.f32 %v2275, 1.442695
  %v2313 = vpow.pop %v2312
  %v2314 = vmul.f32 %v2276, 1.442695
  %v2315 = vpow.pop %v2314
  %v2316 = vmul.f32 %v2277, 1.442695
  %v2317 = vpow.pop %v2316
  %v2318 = vmul.f32 %v2278, 1.442695
  %v2319 = vpow.pop %v2318
  %v2320 = vmul.f32 %v2279, 1.442695
  %v2321 = vpow.pop %v2320
  %v2322 = vmul.f32 %v2280, 1.442695
  %v2323 = vpow.pop %v2322
  %v2324 = vmul.f32 %v2281, 1.442695
  %v2325 = vpow.pop %v2324
  %v2326 = vmul.f32 %v2282, 1.442695
  %v2327 = vpow.pop %v2326
  %v2328 = vmul.f32 %v2283, 1.442695
  %v2329 = vpow.pop %v2328
  %v2330 = vmul.f32 %v2284, 1.442695
  %v2331 = vpow.pop %v2330
  %v2332 = vmul.f32 %v2285, 1.442695
  %v2333 = vpow.pop %v2332
  %v2334 = vmul.f32 %v2286, 1.442695
  %v2335 = vpow.pop %v2334
  %v2336 = vmul.f32 %v2287, 1.442695
  %v2337 = vpow.pop %v2336
  %v2338 = vmul.f32 %v2288, 1.442695
  %v2339 = vpow.pop %v2338
  %v2340 = vmul.f32 %v2289, 1.442695
  %v2341 = vpow.pop %v2340
  %v2342 = vmul.f32 %v2290, 1.442695
  %v2343 = vpow.pop %v2342
  %v2344 = vmul.f32 %v2291, 1.442695
  %v2345 = vpow.pop %v2344
  %v2346 = vmul.f32 %v2292, 1.442695
  %v2347 = vpow.pop %v2346
  %v2348 = vmul.f32 %v2293, 1.442695
  %v2349 = vpow.pop %v2348
  %v2350 = vmul.f32 %v2294, 1.442695
  %v2351 = vpow.pop %v2350
  %v2352 = vmul.f32 %v2295, 1.442695
  %v2353 = vpow.pop %v2352
  %v2354 = vmul.f32 %v2296, 1.442695
  %v2355 = vpow.pop %v2354
  %v2356 = vmul.f32 %v2297, 1.442695
  %v2357 = vpow.pop %v2356
  %v2358 = vmul.f32 %v2298, 1.442695
  %v2359 = vpow.pop %v2358
  %v2360 = vmul.f32 %v2299, 1.442695
  %v2361 = vpow.pop %v2360
  %v2362 = vmul.f32 %v2300, 1.442695
  %v2363 = vpow.pop %v2362
  %v2364 = vmul.f32 %v2301, 1.442695
  %v2365 = vpow.pop %v2364
  %v2366 = vadd.f32 %v2303, 1.0
  %v2367 = vlog2.pop %v2366
  %v2368 = vmul.f32 %v2367, 0.6931472
  %v2369 = vmul.f32 -0.5, %v2303
  %v2370 = vadd.f32 %v2369, 1.0
  %v2371 = vmul.f32 %v2370, %v2303
  %v2372 = vand.u32 2147483647, %v2303
  %vm2373 = vcmp.lt.f32.partialorder %v2372, 0.0004427343
  %v2374 = vsel %vm2373, %v2371, %v2368
  %v2375 = vadd.f32 %v2305, 1.0
  %v2376 = vlog2.pop %v2375
  %v2377 = vmul.f32 %v2376, 0.6931472
  %v2378 = vmul.f32 -0.5, %v2305
  %v2379 = vadd.f32 %v2378, 1.0
  %v2380 = vmul.f32 %v2379, %v2305
  %v2381 = vand.u32 2147483647, %v2305
  %vm2382 = vcmp.lt.f32.partialorder %v2381, 0.0004427343
  %v2383 = vsel %vm2382, %v2380, %v2377
  %v2384 = vadd.f32 %v2307, 1.0
  %v2385 = vlog2.pop %v2384
  %v2386 = vmul.f32 %v2385, 0.6931472
  %v2387 = vmul.f32 -0.5, %v2307
  %v2388 = vadd.f32 %v2387, 1.0
  %v2389 = vmul.f32 %v2388, %v2307
  %v2390 = vand.u32 2147483647, %v2307
  %vm2391 = vcmp.lt.f32.partialorder %v2390, 0.0004427343
  %v2392 = vsel %vm2391, %v2389, %v2386
  %v2393 = vadd.f32 %v2309, 1.0
  %v2394 = vlog2.pop %v2393
  %v2395 = vmul.f32 %v2394, 0.6931472
  %v2396 = vmul.f32 -0.5, %v2309
  %v2397 = vadd.f32 %v2396, 1.0
  %v2398 = vmul.f32 %v2397, %v2309
  %v2399 = vand.u32 2147483647, %v2309
  %vm2400 = vcmp.lt.f32.partialorder %v2399, 0.0004427343
  %v2401 = vsel %vm2400, %v2398, %v2395
  %v2402 = vadd.f32 %v2311, 1.0
  %v2403 = vlog2.pop %v2402
  %v2404 = vmul.f32 %v2403, 0.6931472
  %v2405 = vmul.f32 -0.5, %v2311
  %v2406 = vadd.f32 %v2405, 1.0
  %v2407 = vmul.f32 %v2406, %v2311
  %v2408 = vand.u32 2147483647, %v2311
  %vm2409 = vcmp.lt.f32.partialorder %v2408, 0.0004427343
  %v2410 = vsel %vm2409, %v2407, %v2404
  %v2411 = vadd.f32 %v2313, 1.0
  %v2412 = vlog2.pop %v2411
  %v2413 = vmul.f32 %v2412, 0.6931472
  %v2414 = vmul.f32 -0.5, %v2313
  %v2415 = vadd.f32 %v2414, 1.0
  %v2416 = vmul.f32 %v2415, %v2313
  %v2417 = vand.u32 2147483647, %v2313
  %vm2418 = vcmp.lt.f32.partialorder %v2417, 0.0004427343
  %v2419 = vsel %vm2418, %v2416, %v2413
  %v2420 = vadd.f32 %v2315, 1.0
  %v2421 = vlog2.pop %v2420
  %v2422 = vmul.f32 %v2421, 0.6931472
  %v2423 = vmul.f32 -0.5, %v2315
  %v2424 = vadd.f32 %v2423, 1.0
  %v2425 = vmul.f32 %v2424, %v2315
  %v2426 = vand.u32 2147483647, %v2315
  %vm2427 = vcmp.lt.f32.partialorder %v2426, 0.0004427343
  %v2428 = vsel %vm2427, %v2425, %v2422
  %v2429 = vadd.f32 %v2317, 1.0
  %v2430 = vlog2.pop %v2429
  %v2431 = vmul.f32 %v2430, 0.6931472
  %v2432 = vmul.f32 -0.5, %v2317
  %v2433 = vadd.f32 %v2432, 1.0
  %v2434 = vmul.f32 %v2433, %v2317
  %v2435 = vand.u32 2147483647, %v2317
  %vm2436 = vcmp.lt.f32.partialorder %v2435, 0.0004427343
  %v2437 = vsel %vm2436, %v2434, %v2431
  %v2438 = vadd.f32 %v2319, 1.0
  %v2439 = vlog2.pop %v2438
  %v2440 = vmul.f32 %v2439, 0.6931472
  %v2441 = vmul.f32 -0.5, %v2319
  %v2442 = vadd.f32 %v2441, 1.0
  %v2443 = vmul.f32 %v2442, %v2319
  %v2444 = vand.u32 2147483647, %v2319
  %vm2445 = vcmp.lt.f32.partialorder %v2444, 0.0004427343
  %v2446 = vsel %vm2445, %v2443, %v2440
  %v2447 = vadd.f32 %v2321, 1.0
  %v2448 = vlog2.pop %v2447
  %v2449 = vmul.f32 %v2448, 0.6931472
  %v2450 = vmul.f32 -0.5, %v2321
  %v2451 = vadd.f32 %v2450, 1.0
  %v2452 = vmul.f32 %v2451, %v2321
  %v2453 = vand.u32 2147483647, %v2321
  %vm2454 = vcmp.lt.f32.partialorder %v2453, 0.0004427343
  %v2455 = vsel %vm2454, %v2452, %v2449
  %v2456 = vadd.f32 %v2323, 1.0
  %v2457 = vlog2.pop %v2456
  %v2458 = vmul.f32 %v2457, 0.6931472
  %v2459 = vmul.f32 -0.5, %v2323
  %v2460 = vadd.f32 %v2459, 1.0
  %v2461 = vmul.f32 %v2460, %v2323
  %v2462 = vand.u32 2147483647, %v2323
  %vm2463 = vcmp.lt.f32.partialorder %v2462, 0.0004427343
  %v2464 = vsel %vm2463, %v2461, %v2458
  %v2465 = vadd.f32 %v2325, 1.0
  %v2466 = vlog2.pop %v2465
  %v2467 = vmul.f32 %v2466, 0.6931472
  %v2468 = vmul.f32 -0.5, %v2325
  %v2469 = vadd.f32 %v2468, 1.0
  %v2470 = vmul.f32 %v2469, %v2325
  %v2471 = vand.u32 2147483647, %v2325
  %vm2472 = vcmp.lt.f32.partialorder %v2471, 0.0004427343
  %v2473 = vsel %vm2472, %v2470, %v2467
  %v2474 = vadd.f32 %v2327, 1.0
  %v2475 = vlog2.pop %v2474
  %v2476 = vmul.f32 %v2475, 0.6931472
  %v2477 = vmul.f32 -0.5, %v2327
  %v2478 = vadd.f32 %v2477, 1.0
  %v2479 = vmul.f32 %v2478, %v2327
  %v2480 = vand.u32 2147483647, %v2327
  %vm2481 = vcmp.lt.f32.partialorder %v2480, 0.0004427343
  %v2482 = vsel %vm2481, %v2479, %v2476
  %v2483 = vadd.f32 %v2329, 1.0
  %v2484 = vlog2.pop %v2483
  %v2485 = vmul.f32 %v2484, 0.6931472
  %v2486 = vmul.f32 -0.5, %v2329
  %v2487 = vadd.f32 %v2486, 1.0
  %v2488 = vmul.f32 %v2487, %v2329
  %v2489 = vand.u32 2147483647, %v2329
  %vm2490 = vcmp.lt.f32.partialorder %v2489, 0.0004427343
  %v2491 = vsel %vm2490, %v2488, %v2485
  %v2492 = vadd.f32 %v2331, 1.0
  %v2493 = vlog2.pop %v2492
  %v2494 = vmul.f32 %v2493, 0.6931472
  %v2495 = vmul.f32 -0.5, %v2331
  %v2496 = vadd.f32 %v2495, 1.0
  %v2497 = vmul.f32 %v2496, %v2331
  %v2498 = vand.u32 2147483647, %v2331
  %vm2499 = vcmp.lt.f32.partialorder %v2498, 0.0004427343
  %v2500 = vsel %vm2499, %v2497, %v2494
  %v2501 = vadd.f32 %v2333, 1.0
  %v2502 = vlog2.pop %v2501
  %v2503 = vmul.f32 %v2502, 0.6931472
  %v2504 = vmul.f32 -0.5, %v2333
  %v2505 = vadd.f32 %v2504, 1.0
  %v2506 = vmul.f32 %v2505, %v2333
  %v2507 = vand.u32 2147483647, %v2333
  %vm2508 = vcmp.lt.f32.partialorder %v2507, 0.0004427343
  %v2509 = vsel %vm2508, %v2506, %v2503
  %v2510 = vadd.f32 %v2335, 1.0
  %v2511 = vlog2.pop %v2510
  %v2512 = vmul.f32 %v2511, 0.6931472
  %v2513 = vmul.f32 -0.5, %v2335
  %v2514 = vadd.f32 %v2513, 1.0
  %v2515 = vmul.f32 %v2514, %v2335
  %v2516 = vand.u32 2147483647, %v2335
  %vm2517 = vcmp.lt.f32.partialorder %v2516, 0.0004427343
  %v2518 = vsel %vm2517, %v2515, %v2512
  %v2519 = vadd.f32 %v2337, 1.0
  %v2520 = vlog2.pop %v2519
  %v2521 = vmul.f32 %v2520, 0.6931472
  %v2522 = vmul.f32 -0.5, %v2337
  %v2523 = vadd.f32 %v2522, 1.0
  %v2524 = vmul.f32 %v2523, %v2337
  %v2525 = vand.u32 2147483647, %v2337
  %vm2526 = vcmp.lt.f32.partialorder %v2525, 0.0004427343
  %v2527 = vsel %vm2526, %v2524, %v2521
  %v2528 = vadd.f32 %v2339, 1.0
  %v2529 = vlog2.pop %v2528
  %v2530 = vmul.f32 %v2529, 0.6931472
  %v2531 = vmul.f32 -0.5, %v2339
  %v2532 = vadd.f32 %v2531, 1.0
  %v2533 = vmul.f32 %v2532, %v2339
  %v2534 = vand.u32 2147483647, %v2339
  %vm2535 = vcmp.lt.f32.partialorder %v2534, 0.0004427343
  %v2536 = vsel %vm2535, %v2533, %v2530
  %v2537 = vadd.f32 %v2341, 1.0
  %v2538 = vlog2.pop %v2537
  %v2539 = vmul.f32 %v2538, 0.6931472
  %v2540 = vmul.f32 -0.5, %v2341
  %v2541 = vadd.f32 %v2540, 1.0
  %v2542 = vmul.f32 %v2541, %v2341
  %v2543 = vand.u32 2147483647, %v2341
  %vm2544 = vcmp.lt.f32.partialorder %v2543, 0.0004427343
  %v2545 = vsel %vm2544, %v2542, %v2539
  %v2546 = vadd.f32 %v2343, 1.0
  %v2547 = vlog2.pop %v2546
  %v2548 = vmul.f32 %v2547, 0.6931472
  %v2549 = vmul.f32 -0.5, %v2343
  %v2550 = vadd.f32 %v2549, 1.0
  %v2551 = vmul.f32 %v2550, %v2343
  %v2552 = vand.u32 2147483647, %v2343
  %vm2553 = vcmp.lt.f32.partialorder %v2552, 0.0004427343
  %v2554 = vsel %vm2553, %v2551, %v2548
  %v2555 = vadd.f32 %v2345, 1.0
  %v2556 = vlog2.pop %v2555
  %v2557 = vmul.f32 %v2556, 0.6931472
  %v2558 = vmul.f32 -0.5, %v2345
  %v2559 = vadd.f32 %v2558, 1.0
  %v2560 = vmul.f32 %v2559, %v2345
  %v2561 = vand.u32 2147483647, %v2345
  %vm2562 = vcmp.lt.f32.partialorder %v2561, 0.0004427343
  %v2563 = vsel %vm2562, %v2560, %v2557
  %v2564 = vadd.f32 %v2347, 1.0
  %v2565 = vlog2.pop %v2564
  %v2566 = vmul.f32 %v2565, 0.6931472
  %v2567 = vmul.f32 -0.5, %v2347
  %v2568 = vadd.f32 %v2567, 1.0
  %v2569 = vmul.f32 %v2568, %v2347
  %v2570 = vand.u32 2147483647, %v2347
  %vm2571 = vcmp.lt.f32.partialorder %v2570, 0.0004427343
  %v2572 = vsel %vm2571, %v2569, %v2566
  %v2573 = vadd.f32 %v2349, 1.0
  %v2574 = vlog2.pop %v2573
  %v2575 = vmul.f32 %v2574, 0.6931472
  %v2576 = vmul.f32 -0.5, %v2349
  %v2577 = vadd.f32 %v2576, 1.0
  %v2578 = vmul.f32 %v2577, %v2349
  %v2579 = vand.u32 2147483647, %v2349
  %vm2580 = vcmp.lt.f32.partialorder %v2579, 0.0004427343
  %v2581 = vsel %vm2580, %v2578, %v2575
  %v2582 = vadd.f32 %v2351, 1.0
  %v2583 = vlog2.pop %v2582
  %v2584 = vmul.f32 %v2583, 0.6931472
  %v2585 = vmul.f32 -0.5, %v2351
  %v2586 = vadd.f32 %v2585, 1.0
  %v2587 = vmul.f32 %v2586, %v2351
  %v2588 = vand.u32 2147483647, %v2351
  %vm2589 = vcmp.lt.f32.partialorder %v2588, 0.0004427343
  %v2590 = vsel %vm2589, %v2587, %v2584
  %v2591 = vadd.f32 %v2353, 1.0
  %v2592 = vlog2.pop %v2591
  %v2593 = vmul.f32 %v2592, 0.6931472
  %v2594 = vmul.f32 -0.5, %v2353
  %v2595 = vadd.f32 %v2594, 1.0
  %v2596 = vmul.f32 %v2595, %v2353
  %v2597 = vand.u32 2147483647, %v2353
  %vm2598 = vcmp.lt.f32.partialorder %v2597, 0.0004427343
  %v2599 = vsel %vm2598, %v2596, %v2593
  %v2600 = vadd.f32 %v2355, 1.0
  %v2601 = vlog2.pop %v2600
  %v2602 = vmul.f32 %v2601, 0.6931472
  %v2603 = vmul.f32 -0.5, %v2355
  %v2604 = vadd.f32 %v2603, 1.0
  %v2605 = vmul.f32 %v2604, %v2355
  %v2606 = vand.u32 2147483647, %v2355
  %vm2607 = vcmp.lt.f32.partialorder %v2606, 0.0004427343
  %v2608 = vsel %vm2607, %v2605, %v2602
  %v2609 = vadd.f32 %v2357, 1.0
  %v2610 = vlog2.pop %v2609
  %v2611 = vmul.f32 %v2610, 0.6931472
  %v2612 = vmul.f32 -0.5, %v2357
  %v2613 = vadd.f32 %v2612, 1.0
  %v2614 = vmul.f32 %v2613, %v2357
  %v2615 = vand.u32 2147483647, %v2357
  %vm2616 = vcmp.lt.f32.partialorder %v2615, 0.0004427343
  %v2617 = vsel %vm2616, %v2614, %v2611
  %v2618 = vadd.f32 %v2359, 1.0
  %v2619 = vlog2.pop %v2618
  %v2620 = vmul.f32 %v2619, 0.6931472
  %v2621 = vmul.f32 -0.5, %v2359
  %v2622 = vadd.f32 %v2621, 1.0
  %v2623 = vmul.f32 %v2622, %v2359
  %v2624 = vand.u32 2147483647, %v2359
  %vm2625 = vcmp.lt.f32.partialorder %v2624, 0.0004427343
  %v2626 = vsel %vm2625, %v2623, %v2620
  %v2627 = vadd.f32 %v2361, 1.0
  %v2628 = vlog2.pop %v2627
  %v2629 = vmul.f32 %v2628, 0.6931472
  %v2630 = vmul.f32 -0.5, %v2361
  %v2631 = vadd.f32 %v2630, 1.0
  %v2632 = vmul.f32 %v2631, %v2361
  %v2633 = vand.u32 2147483647, %v2361
  %vm2634 = vcmp.lt.f32.partialorder %v2633, 0.0004427343
  %v2635 = vsel %vm2634, %v2632, %v2629
  %v2636 = vadd.f32 %v2363, 1.0
  %v2637 = vlog2.pop %v2636
  %v2638 = vmul.f32 %v2637, 0.6931472
  %v2639 = vmul.f32 -0.5, %v2363
  %v2640 = vadd.f32 %v2639, 1.0
  %v2641 = vmul.f32 %v2640, %v2363
  %v2642 = vand.u32 2147483647, %v2363
  %vm2643 = vcmp.lt.f32.partialorder %v2642, 0.0004427343
  %v2644 = vsel %vm2643, %v2641, %v2638
  %v2645 = vadd.f32 %v2365, 1.0
  %v2646 = vlog2.pop %v2645
  %v2647 = vmul.f32 %v2646, 0.6931472
  %v2648 = vmul.f32 -0.5, %v2365
  %v2649 = vadd.f32 %v2648, 1.0
  %v2650 = vmul.f32 %v2649, %v2365
  %v2651 = vand.u32 2147483647, %v2365
  %vm2652 = vcmp.lt.f32.partialorder %v2651, 0.0004427343
  %v2653 = vsel %vm2652, %v2650, %v2647
  %v2654 = vadd.f32 %v2142, %v2374
  %v2655 = vadd.f32 %v2143, %v2383
  %v2656 = vadd.f32 %v2144, %v2392
  %v2657 = vadd.f32 %v2145, %v2401
  %v2658 = vadd.f32 %v2146, %v2410
  %v2659 = vadd.f32 %v2147, %v2419
  %v2660 = vadd.f32 %v2148, %v2428
  %v2661 = vadd.f32 %v2149, %v2437
  %v2662 = vadd.f32 %v2150, %v2446
  %v2663 = vadd.f32 %v2151, %v2455
  %v2664 = vadd.f32 %v2152, %v2464
  %v2665 = vadd.f32 %v2153, %v2473
  %v2666 = vadd.f32 %v2154, %v2482
  %v2667 = vadd.f32 %v2155, %v2491
  %v2668 = vadd.f32 %v2156, %v2500
  %v2669 = vadd.f32 %v2157, %v2509
  %v2670 = vadd.f32 %v2158, %v2518
  %v2671 = vadd.f32 %v2159, %v2527
  %v2672 = vadd.f32 %v2160, %v2536
  %v2673 = vadd.f32 %v2161, %v2545
  %v2674 = vadd.f32 %v2162, %v2554
  %v2675 = vadd.f32 %v2163, %v2563
  %v2676 = vadd.f32 %v2164, %v2572
  %v2677 = vadd.f32 %v2165, %v2581
  %v2678 = vadd.f32 %v2166, %v2590
  %v2679 = vadd.f32 %v2167, %v2599
  %v2680 = vadd.f32 %v2168, %v2608
  %v2681 = vadd.f32 %v2169, %v2617
  %v2682 = vadd.f32 %v2170, %v2626
  %v2683 = vadd.f32 %v2171, %v2635
  %v2684 = vadd.f32 %v2172, %v2644
  %v2685 = vadd.f32 %v2173, %v2653
  %v2686 = vsel %vm2174, %v2206, %v2654
  %v2687 = vsel %vm2175, %v2207, %v2655
  %v2688 = vsel %vm2176, %v2208, %v2656
  %v2689 = vsel %vm2177, %v2209, %v2657
  %v2690 = vsel %vm2178, %v2210, %v2658
  %v2691 = vsel %vm2179, %v2211, %v2659
  %v2692 = vsel %vm2180, %v2212, %v2660
  %v2693 = vsel %vm2181, %v2213, %v2661
  %v2694 = vsel %vm2182, %v2214, %v2662
  %v2695 = vsel %vm2183, %v2215, %v2663
  %v2696 = vsel %vm2184, %v2216, %v2664
  %v2697 = vsel %vm2185, %v2217, %v2665
  %v2698 = vsel %vm2186, %v2218, %v2666
  %v2699 = vsel %vm2187, %v2219, %v2667
  %v2700 = vsel %vm2188, %v2220, %v2668
  %v2701 = vsel %vm2189, %v2221, %v2669
  %v2702 = vsel %vm2190, %v2222, %v2670
  %v2703 = vsel %vm2191, %v2223, %v2671
  %v2704 = vsel %vm2192, %v2224, %v2672
  %v2705 = vsel %vm2193, %v2225, %v2673
  %v2706 = vsel %vm2194, %v2226, %v2674
  %v2707 = vsel %vm2195, %v2227, %v2675
  %v2708 = vsel %vm2196, %v2228, %v2676
  %v2709 = vsel %vm2197, %v2229, %v2677
  %v2710 = vsel %vm2198, %v2230, %v2678
  %v2711 = vsel %vm2199, %v2231, %v2679
  %v2712 = vsel %vm2200, %v2232, %v2680
  %v2713 = vsel %vm2201, %v2233, %v2681
  %v2714 = vsel %vm2202, %v2234, %v2682
  %v2715 = vsel %vm2203, %v2235, %v2683
  %v2716 = vsel %vm2204, %v2236, %v2684
  %v2717 = vsel %vm2205, %v2237, %v2685
  %s2718 = scalar_lea.vmem %s1, 256
  %v2719 = vld [vmem:[%s2718] sm:$0xff]
  %v2720 = vld [vmem:[%s2718 + $0x8] sm:$0xff]
  %v2721 = vld [vmem:[%s2718 + $0x10] sm:$0xff]
  %v2722 = vld [vmem:[%s2718 + $0x18] sm:$0xff]
  %v2723 = vld [vmem:[%s2718 + $0x20] sm:$0xff]
  %v2724 = vld [vmem:[%s2718 + $0x28] sm:$0xff]
  %v2725 = vld [vmem:[%s2718 + $0x30] sm:$0xff]
  %v2726 = vld [vmem:[%s2718 + $0x38] sm:$0xff]
  %v2727 = vld [vmem:[%s2718 + $0x40] sm:$0xff]
  %v2728 = vld [vmem:[%s2718 + $0x48] sm:$0xff]
  %v2729 = vld [vmem:[%s2718 + $0x50] sm:$0xff]
  %v2730 = vld [vmem:[%s2718 + $0x58] sm:$0xff]
  %v2731 = vld [vmem:[%s2718 + $0x60] sm:$0xff]
  %v2732 = vld [vmem:[%s2718 + $0x68] sm:$0xff]
  %v2733 = vld [vmem:[%s2718 + $0x70] sm:$0xff]
  %v2734 = vld [vmem:[%s2718 + $0x78] sm:$0xff]
  %v2735 = vld [vmem:[%s2718 + $0x80] sm:$0xff]
  %v2736 = vld [vmem:[%s2718 + $0x88] sm:$0xff]
  %v2737 = vld [vmem:[%s2718 + $0x90] sm:$0xff]
  %v2738 = vld [vmem:[%s2718 + $0x98] sm:$0xff]
  %v2739 = vld [vmem:[%s2718 + $0xa0] sm:$0xff]
  %v2740 = vld [vmem:[%s2718 + $0xa8] sm:$0xff]
  %v2741 = vld [vmem:[%s2718 + $0xb0] sm:$0xff]
  %v2742 = vld [vmem:[%s2718 + $0xb8] sm:$0xff]
  %v2743 = vld [vmem:[%s2718 + $0xc0] sm:$0xff]
  %v2744 = vld [vmem:[%s2718 + $0xc8] sm:$0xff]
  %v2745 = vld [vmem:[%s2718 + $0xd0] sm:$0xff]
  %v2746 = vld [vmem:[%s2718 + $0xd8] sm:$0xff]
  %v2747 = vld [vmem:[%s2718 + $0xe0] sm:$0xff]
  %v2748 = vld [vmem:[%s2718 + $0xe8] sm:$0xff]
  %v2749 = vld [vmem:[%s2718 + $0xf0] sm:$0xff]
  %v2750 = vld [vmem:[%s2718 + $0xf8] sm:$0xff]
  %v2751 = vmul.f32 %v2686, %v2719
  %v2752 = vmul.f32 %v2687, %v2720
  %v2753 = vmul.f32 %v2688, %v2721
  %v2754 = vmul.f32 %v2689, %v2722
  %v2755 = vmul.f32 %v2690, %v2723
  %v2756 = vmul.f32 %v2691, %v2724
  %v2757 = vmul.f32 %v2692, %v2725
  %v2758 = vmul.f32 %v2693, %v2726
  %v2759 = vmul.f32 %v2694, %v2727
  %v2760 = vmul.f32 %v2695, %v2728
  %v2761 = vmul.f32 %v2696, %v2729
  %v2762 = vmul.f32 %v2697, %v2730
  %v2763 = vmul.f32 %v2698, %v2731
  %v2764 = vmul.f32 %v2699, %v2732
  %v2765 = vmul.f32 %v2700, %v2733
  %v2766 = vmul.f32 %v2701, %v2734
  %v2767 = vmul.f32 %v2702, %v2735
  %v2768 = vmul.f32 %v2703, %v2736
  %v2769 = vmul.f32 %v2704, %v2737
  %v2770 = vmul.f32 %v2705, %v2738
  %v2771 = vmul.f32 %v2706, %v2739
  %v2772 = vmul.f32 %v2707, %v2740
  %v2773 = vmul.f32 %v2708, %v2741
  %v2774 = vmul.f32 %v2709, %v2742
  %v2775 = vmul.f32 %v2710, %v2743
  %v2776 = vmul.f32 %v2711, %v2744
  %v2777 = vmul.f32 %v2712, %v2745
  %v2778 = vmul.f32 %v2713, %v2746
  %v2779 = vmul.f32 %v2714, %v2747
  %v2780 = vmul.f32 %v2715, %v2748
  %v2781 = vmul.f32 %v2716, %v2749
  %v2782 = vmul.f32 %v2717, %v2750
  %v2783 = vadd.f32 %v1984, %v2751
  %v2784 = vadd.f32 %v1988, %v2752
  %v2785 = vadd.f32 %v1994, %v2753
  %v2786 = vadd.f32 %v1998, %v2754
  %v2787 = vadd.f32 %v2004, %v2755
  %v2788 = vadd.f32 %v2008, %v2756
  %v2789 = vadd.f32 %v2014, %v2757
  %v2790 = vadd.f32 %v2018, %v2758
  %v2791 = vadd.f32 %v2024, %v2759
  %v2792 = vadd.f32 %v2028, %v2760
  %v2793 = vadd.f32 %v2034, %v2761
  %v2794 = vadd.f32 %v2038, %v2762
  %v2795 = vadd.f32 %v2044, %v2763
  %v2796 = vadd.f32 %v2048, %v2764
  %v2797 = vadd.f32 %v2054, %v2765
  %v2798 = vadd.f32 %v2058, %v2766
  %v2799 = vadd.f32 %v2064, %v2767
  %v2800 = vadd.f32 %v2068, %v2768
  %v2801 = vadd.f32 %v2074, %v2769
  %v2802 = vadd.f32 %v2078, %v2770
  %v2803 = vadd.f32 %v2084, %v2771
  %v2804 = vadd.f32 %v2088, %v2772
  %v2805 = vadd.f32 %v2094, %v2773
  %v2806 = vadd.f32 %v2098, %v2774
  %v2807 = vadd.f32 %v2104, %v2775
  %v2808 = vadd.f32 %v2108, %v2776
  %v2809 = vadd.f32 %v2114, %v2777
  %v2810 = vadd.f32 %v2118, %v2778
  %v2811 = vadd.f32 %v2124, %v2779
  %v2812 = vadd.f32 %v2128, %v2780
  %v2813 = vadd.f32 %v2134, %v2781
  %v2814 = vadd.f32 %v2138, %v2782
  %v2815 = vmul.f32 %v1901, %v1427
  %v2816 = vmul.f32 %v1902, %v1427
  %v2817 = vmul.f32 %v1903, %v1427
  %v2818 = vmul.f32 %v1904, %v1427
  %v2819 = vmul.f32 %v1905, %v1427
  %v2820 = vmul.f32 %v1906, %v1427
  %v2821 = vmul.f32 %v1907, %v1427
  %v2822 = vmul.f32 %v1908, %v1427
  %v2823 = vmul.f32 %v1909, %v1427
  %v2824 = vmul.f32 %v1910, %v1427
  %v2825 = vmul.f32 %v1911, %v1427
  %v2826 = vmul.f32 %v1912, %v1427
  %v2827 = vmul.f32 %v1913, %v1427
  %v2828 = vmul.f32 %v1914, %v1427
  %v2829 = vmul.f32 %v1915, %v1427
  %v2830 = vmul.f32 %v1916, %v1427
  %v2831 = vmul.f32 %v1917, %v1427
  %v2832 = vmul.f32 %v1918, %v1427
  %v2833 = vmul.f32 %v1919, %v1427
  %v2834 = vmul.f32 %v1920, %v1427
  %v2835 = vmul.f32 %v1921, %v1427
  %v2836 = vmul.f32 %v1922, %v1427
  %v2837 = vmul.f32 %v1923, %v1427
  %v2838 = vmul.f32 %v1924, %v1427
  %v2839 = vmul.f32 %v1925, %v1427
  %v2840 = vmul.f32 %v1926, %v1427
  %v2841 = vmul.f32 %v1927, %v1427
  %v2842 = vmul.f32 %v1928, %v1427
  %v2843 = vmul.f32 %v1929, %v1427
  %v2844 = vmul.f32 %v1930, %v1427
  %v2845 = vmul.f32 %v1931, %v1427
  %v2846 = vmul.f32 %v1932, %v1427
  %2847 = vadd.xlane.f32.xlu0 %v2815
  %v2848 = vpop.xlane.xlu0 %2847
  %2849 = vadd.xlane.f32.xlu0 %v2816
  %v2850 = vpop.xlane.xlu0 %2849
  %2851 = vadd.xlane.f32.xlu0 %v2817
  %v2852 = vpop.xlane.xlu0 %2851
  %2853 = vadd.xlane.f32.xlu0 %v2818
  %v2854 = vpop.xlane.xlu0 %2853
  %2855 = vadd.xlane.f32.xlu0 %v2819
  %v2856 = vpop.xlane.xlu0 %2855
  %2857 = vadd.xlane.f32.xlu0 %v2820
  %v2858 = vpop.xlane.xlu0 %2857
  %2859 = vadd.xlane.f32.xlu0 %v2821
  %v2860 = vpop.xlane.xlu0 %2859
  %2861 = vadd.xlane.f32.xlu0 %v2822
  %v2862 = vpop.xlane.xlu0 %2861
  %2863 = vadd.xlane.f32.xlu0 %v2823
  %v2864 = vpop.xlane.xlu0 %2863
  %2865 = vadd.xlane.f32.xlu0 %v2824
  %v2866 = vpop.xlane.xlu0 %2865
  %2867 = vadd.xlane.f32.xlu0 %v2825
  %v2868 = vpop.xlane.xlu0 %2867
  %2869 = vadd.xlane.f32.xlu0 %v2826
  %v2870 = vpop.xlane.xlu0 %2869
  %2871 = vadd.xlane.f32.xlu0 %v2827
  %v2872 = vpop.xlane.xlu0 %2871
  %2873 = vadd.xlane.f32.xlu0 %v2828
  %v2874 = vpop.xlane.xlu0 %2873
  %2875 = vadd.xlane.f32.xlu0 %v2829
  %v2876 = vpop.xlane.xlu0 %2875
  %2877 = vadd.xlane.f32.xlu0 %v2830
  %v2878 = vpop.xlane.xlu0 %2877
  %2879 = vadd.xlane.f32.xlu0 %v2831
  %v2880 = vpop.xlane.xlu0 %2879
  %2881 = vadd.xlane.f32.xlu0 %v2832
  %v2882 = vpop.xlane.xlu0 %2881
  %2883 = vadd.xlane.f32.xlu0 %v2833
  %v2884 = vpop.xlane.xlu0 %2883
  %2885 = vadd.xlane.f32.xlu0 %v2834
  %v2886 = vpop.xlane.xlu0 %2885
  %2887 = vadd.xlane.f32.xlu0 %v2835
  %v2888 = vpop.xlane.xlu0 %2887
  %2889 = vadd.xlane.f32.xlu0 %v2836
  %v2890 = vpop.xlane.xlu0 %2889
  %2891 = vadd.xlane.f32.xlu0 %v2837
  %v2892 = vpop.xlane.xlu0 %2891
  %2893 = vadd.xlane.f32.xlu0 %v2838
  %v2894 = vpop.xlane.xlu0 %2893
  %2895 = vadd.xlane.f32.xlu0 %v2839
  %v2896 = vpop.xlane.xlu0 %2895
  %2897 = vadd.xlane.f32.xlu0 %v2840
  %v2898 = vpop.xlane.xlu0 %2897
  %2899 = vadd.xlane.f32.xlu0 %v2841
  %v2900 = vpop.xlane.xlu0 %2899
  %2901 = vadd.xlane.f32.xlu0 %v2842
  %v2902 = vpop.xlane.xlu0 %2901
  %2903 = vadd.xlane.f32.xlu0 %v2843
  %v2904 = vpop.xlane.xlu0 %2903
  %2905 = vadd.xlane.f32.xlu0 %v2844
  %v2906 = vpop.xlane.xlu0 %2905
  %2907 = vadd.xlane.f32.xlu0 %v2845
  %v2908 = vpop.xlane.xlu0 %2907
  %2909 = vadd.xlane.f32.xlu0 %v2846
  %v2910 = vpop.xlane.xlu0 %2909
  %v2911 = vmul.f32 %v2783, %v1529
  %v2912 = vmul.f32 %v2784, %v1529
  %v2913 = vmul.f32 %v2785, %v1529
  %v2914 = vmul.f32 %v2786, %v1529
  %v2915 = vmul.f32 %v2787, %v1529
  %v2916 = vmul.f32 %v2788, %v1529
  %v2917 = vmul.f32 %v2789, %v1529
  %v2918 = vmul.f32 %v2790, %v1529
  %v2919 = vmul.f32 %v2791, %v1529
  %v2920 = vmul.f32 %v2792, %v1529
  %v2921 = vmul.f32 %v2793, %v1529
  %v2922 = vmul.f32 %v2794, %v1529
  %v2923 = vmul.f32 %v2795, %v1529
  %v2924 = vmul.f32 %v2796, %v1529
  %v2925 = vmul.f32 %v2797, %v1529
  %v2926 = vmul.f32 %v2798, %v1529
  %v2927 = vmul.f32 %v2799, %v1529
  %v2928 = vmul.f32 %v2800, %v1529
  %v2929 = vmul.f32 %v2801, %v1529
  %v2930 = vmul.f32 %v2802, %v1529
  %v2931 = vmul.f32 %v2803, %v1529
  %v2932 = vmul.f32 %v2804, %v1529
  %v2933 = vmul.f32 %v2805, %v1529
  %v2934 = vmul.f32 %v2806, %v1529
  %v2935 = vmul.f32 %v2807, %v1529
  %v2936 = vmul.f32 %v2808, %v1529
  %v2937 = vmul.f32 %v2809, %v1529
  %v2938 = vmul.f32 %v2810, %v1529
  %v2939 = vmul.f32 %v2811, %v1529
  %v2940 = vmul.f32 %v2812, %v1529
  %v2941 = vmul.f32 %v2813, %v1529
  %v2942 = vmul.f32 %v2814, %v1529
  %2943 = vadd.xlane.f32.xlu0 %v2911
  %v2944 = vpop.xlane.xlu0 %2943
  %2945 = vadd.xlane.f32.xlu0 %v2912
  %v2946 = vpop.xlane.xlu0 %2945
  %2947 = vadd.xlane.f32.xlu0 %v2913
  %v2948 = vpop.xlane.xlu0 %2947
  %2949 = vadd.xlane.f32.xlu0 %v2914
  %v2950 = vpop.xlane.xlu0 %2949
  %2951 = vadd.xlane.f32.xlu0 %v2915
  %v2952 = vpop.xlane.xlu0 %2951
  %2953 = vadd.xlane.f32.xlu0 %v2916
  %v2954 = vpop.xlane.xlu0 %2953
  %2955 = vadd.xlane.f32.xlu0 %v2917
  %v2956 = vpop.xlane.xlu0 %2955
  %2957 = vadd.xlane.f32.xlu0 %v2918
  %v2958 = vpop.xlane.xlu0 %2957
  %2959 = vadd.xlane.f32.xlu0 %v2919
  %v2960 = vpop.xlane.xlu0 %2959
  %2961 = vadd.xlane.f32.xlu0 %v2920
  %v2962 = vpop.xlane.xlu0 %2961
  %2963 = vadd.xlane.f32.xlu0 %v2921
  %v2964 = vpop.xlane.xlu0 %2963
  %2965 = vadd.xlane.f32.xlu0 %v2922
  %v2966 = vpop.xlane.xlu0 %2965
  %2967 = vadd.xlane.f32.xlu0 %v2923
  %v2968 = vpop.xlane.xlu0 %2967
  %2969 = vadd.xlane.f32.xlu0 %v2924
  %v2970 = vpop.xlane.xlu0 %2969
  %2971 = vadd.xlane.f32.xlu0 %v2925
  %v2972 = vpop.xlane.xlu0 %2971
  %2973 = vadd.xlane.f32.xlu0 %v2926
  %v2974 = vpop.xlane.xlu0 %2973
  %2975 = vadd.xlane.f32.xlu0 %v2927
  %v2976 = vpop.xlane.xlu0 %2975
  %2977 = vadd.xlane.f32.xlu0 %v2928
  %v2978 = vpop.xlane.xlu0 %2977
  %2979 = vadd.xlane.f32.xlu0 %v2929
  %v2980 = vpop.xlane.xlu0 %2979
  %2981 = vadd.xlane.f32.xlu0 %v2930
  %v2982 = vpop.xlane.xlu0 %2981
  %2983 = vadd.xlane.f32.xlu0 %v2931
  %v2984 = vpop.xlane.xlu0 %2983
  %2985 = vadd.xlane.f32.xlu0 %v2932
  %v2986 = vpop.xlane.xlu0 %2985
  %2987 = vadd.xlane.f32.xlu0 %v2933
  %v2988 = vpop.xlane.xlu0 %2987
  %2989 = vadd.xlane.f32.xlu0 %v2934
  %v2990 = vpop.xlane.xlu0 %2989
  %2991 = vadd.xlane.f32.xlu0 %v2935
  %v2992 = vpop.xlane.xlu0 %2991
  %2993 = vadd.xlane.f32.xlu0 %v2936
  %v2994 = vpop.xlane.xlu0 %2993
  %2995 = vadd.xlane.f32.xlu0 %v2937
  %v2996 = vpop.xlane.xlu0 %2995
  %2997 = vadd.xlane.f32.xlu0 %v2938
  %v2998 = vpop.xlane.xlu0 %2997
  %2999 = vadd.xlane.f32.xlu0 %v2939
  %v3000 = vpop.xlane.xlu0 %2999
  %3001 = vadd.xlane.f32.xlu0 %v2940
  %v3002 = vpop.xlane.xlu0 %3001
  %3003 = vadd.xlane.f32.xlu0 %v2941
  %v3004 = vpop.xlane.xlu0 %3003
  %3005 = vadd.xlane.f32.xlu0 %v2942
  %v3006 = vpop.xlane.xlu0 %3005
  %v3007 = vadd.f32 %v2848, %v2944
  %v3008 = vadd.f32 %v2850, %v2946
  %v3009 = vadd.f32 %v2852, %v2948
  %v3010 = vadd.f32 %v2854, %v2950
  %v3011 = vadd.f32 %v2856, %v2952
  %v3012 = vadd.f32 %v2858, %v2954
  %v3013 = vadd.f32 %v2860, %v2956
  %v3014 = vadd.f32 %v2862, %v2958
  %v3015 = vadd.f32 %v2864, %v2960
  %v3016 = vadd.f32 %v2866, %v2962
  %v3017 = vadd.f32 %v2868, %v2964
  %v3018 = vadd.f32 %v2870, %v2966
  %v3019 = vadd.f32 %v2872, %v2968
  %v3020 = vadd.f32 %v2874, %v2970
  %v3021 = vadd.f32 %v2876, %v2972
  %v3022 = vadd.f32 %v2878, %v2974
  %v3023 = vadd.f32 %v2880, %v2976
  %v3024 = vadd.f32 %v2882, %v2978
  %v3025 = vadd.f32 %v2884, %v2980
  %v3026 = vadd.f32 %v2886, %v2982
  %v3027 = vadd.f32 %v2888, %v2984
  %v3028 = vadd.f32 %v2890, %v2986
  %v3029 = vadd.f32 %v2892, %v2988
  %v3030 = vadd.f32 %v2894, %v2990
  %v3031 = vadd.f32 %v2896, %v2992
  %v3032 = vadd.f32 %v2898, %v2994
  %v3033 = vadd.f32 %v2900, %v2996
  %v3034 = vadd.f32 %v2902, %v2998
  %v3035 = vadd.f32 %v2904, %v3000
  %v3036 = vadd.f32 %v2906, %v3002
  %v3037 = vadd.f32 %v2908, %v3004
  %v3038 = vadd.f32 %v2910, %v3006
  %v3039 = vadd.f32 %v1659, %v3007
  %v3040 = vadd.f32 %v1660, %v3008
  %v3041 = vadd.f32 %v1661, %v3009
  %v3042 = vadd.f32 %v1662, %v3010
  %v3043 = vadd.f32 %v1663, %v3011
  %v3044 = vadd.f32 %v1664, %v3012
  %v3045 = vadd.f32 %v1665, %v3013
  %v3046 = vadd.f32 %v1666, %v3014
  %v3047 = vadd.f32 %v1667, %v3015
  %v3048 = vadd.f32 %v1668, %v3016
  %v3049 = vadd.f32 %v1669, %v3017
  %v3050 = vadd.f32 %v1670, %v3018
  %v3051 = vadd.f32 %v1671, %v3019
  %v3052 = vadd.f32 %v1672, %v3020
  %v3053 = vadd.f32 %v1673, %v3021
  %v3054 = vadd.f32 %v1674, %v3022
  %v3055 = vadd.f32 %v1675, %v3023
  %v3056 = vadd.f32 %v1676, %v3024
  %v3057 = vadd.f32 %v1677, %v3025
  %v3058 = vadd.f32 %v1678, %v3026
  %v3059 = vadd.f32 %v1679, %v3027
  %v3060 = vadd.f32 %v1680, %v3028
  %v3061 = vadd.f32 %v1681, %v3029
  %v3062 = vadd.f32 %v1682, %v3030
  %v3063 = vadd.f32 %v1683, %v3031
  %v3064 = vadd.f32 %v1684, %v3032
  %v3065 = vadd.f32 %v1685, %v3033
  %v3066 = vadd.f32 %v1686, %v3034
  %v3067 = vadd.f32 %v1687, %v3035
  %v3068 = vadd.f32 %v1688, %v3036
  %v3069 = vadd.f32 %v1689, %v3037
  %v3070 = vadd.f32 %v1690, %v3038
  %v3071 = vpack.c.bf16 %v2784, %v2783
  %v3072 = vpack.c.bf16 %v2786, %v2785
  %v3073 = vpack.c.bf16 %v2788, %v2787
  %v3074 = vpack.c.bf16 %v2790, %v2789
  %v3075 = vpack.c.bf16 %v2792, %v2791
  %v3076 = vpack.c.bf16 %v2794, %v2793
  %v3077 = vpack.c.bf16 %v2796, %v2795
  %v3078 = vpack.c.bf16 %v2798, %v2797
  %v3079 = vpack.c.bf16 %v2800, %v2799
  %v3080 = vpack.c.bf16 %v2802, %v2801
  %v3081 = vpack.c.bf16 %v2804, %v2803
  %v3082 = vpack.c.bf16 %v2806, %v2805
  %v3083 = vpack.c.bf16 %v2808, %v2807
  %v3084 = vpack.c.bf16 %v2810, %v2809
  %v3085 = vpack.c.bf16 %v2812, %v2811
  %v3086 = vpack.c.bf16 %v2814, %v2813
  %s3087 = scalar_lea.vmem %s0, 512
  %v3088 = vld [vmem:[%s3087] sm:$0xff]
  %v3089 = vld [vmem:[%s3087 + $0x8] sm:$0xff]
  %v3090 = vld [vmem:[%s3087 + $0x10] sm:$0xff]
  %v3091 = vld [vmem:[%s3087 + $0x18] sm:$0xff]
  %v3092 = vld [vmem:[%s3087 + $0x20] sm:$0xff]
  %v3093 = vld [vmem:[%s3087 + $0x28] sm:$0xff]
  %v3094 = vld [vmem:[%s3087 + $0x30] sm:$0xff]
  %v3095 = vld [vmem:[%s3087 + $0x38] sm:$0xff]
  %v3096 = vld [vmem:[%s3087 + $0x40] sm:$0xff]
  %v3097 = vld [vmem:[%s3087 + $0x48] sm:$0xff]
  %v3098 = vld [vmem:[%s3087 + $0x50] sm:$0xff]
  %v3099 = vld [vmem:[%s3087 + $0x58] sm:$0xff]
  %v3100 = vld [vmem:[%s3087 + $0x60] sm:$0xff]
  %v3101 = vld [vmem:[%s3087 + $0x68] sm:$0xff]
  %v3102 = vld [vmem:[%s3087 + $0x70] sm:$0xff]
  %v3103 = vld [vmem:[%s3087 + $0x78] sm:$0xff]
  %v3104 = vld [vmem:[%s3087 + $0x80] sm:$0xff]
  %v3105 = vld [vmem:[%s3087 + $0x88] sm:$0xff]
  %v3106 = vld [vmem:[%s3087 + $0x90] sm:$0xff]
  %v3107 = vld [vmem:[%s3087 + $0x98] sm:$0xff]
  %v3108 = vld [vmem:[%s3087 + $0xa0] sm:$0xff]
  %v3109 = vld [vmem:[%s3087 + $0xa8] sm:$0xff]
  %v3110 = vld [vmem:[%s3087 + $0xb0] sm:$0xff]
  %v3111 = vld [vmem:[%s3087 + $0xb8] sm:$0xff]
  %v3112 = vld [vmem:[%s3087 + $0xc0] sm:$0xff]
  %v3113 = vld [vmem:[%s3087 + $0xc8] sm:$0xff]
  %v3114 = vld [vmem:[%s3087 + $0xd0] sm:$0xff]
  %v3115 = vld [vmem:[%s3087 + $0xd8] sm:$0xff]
  %v3116 = vld [vmem:[%s3087 + $0xe0] sm:$0xff]
  %v3117 = vld [vmem:[%s3087 + $0xe8] sm:$0xff]
  %v3118 = vld [vmem:[%s3087 + $0xf0] sm:$0xff]
  %v3119 = vld [vmem:[%s3087 + $0xf8] sm:$0xff]
  %3120 = vmatprep.subr.bf16.mxu0 0
  %3121 = vmatpush1.bf16.msra.mxu0 %v226
  %3122 = vmatprep.subr.bf16.mxu0 0
  %3123 = vmatpush1.bf16.msra.mxu0 %v227
  %3124 = vmatprep.subr.bf16.mxu0 0
  %3125 = vmatpush1.bf16.msra.mxu0 %v228
  %3126 = vmatprep.subr.bf16.mxu0 0
  %3127 = vmatpush1.bf16.msra.mxu0 %v229
  %3128 = vmatprep.subr.bf16.mxu0 0
  %3129 = vmatpush1.bf16.msra.mxu0 %v230
  %3130 = vmatprep.subr.bf16.mxu0 0
  %3131 = vmatpush1.bf16.msra.mxu0 %v231
  %3132 = vmatprep.subr.bf16.mxu0 0
  %3133 = vmatpush1.bf16.msra.mxu0 %v232
  %3134 = vmatprep.subr.bf16.mxu0 0
  %3135 = vmatpush1.bf16.msra.mxu0 %v233
  %3136 = vmatprep.subr.bf16.mxu0 0
  %3137 = vmatpush1.bf16.msra.mxu0 %v234
  %3138 = vmatprep.subr.bf16.mxu0 0
  %3139 = vmatpush1.bf16.msra.mxu0 %v235
  %3140 = vmatprep.subr.bf16.mxu0 0
  %3141 = vmatpush1.bf16.msra.mxu0 %v236
  %3142 = vmatprep.subr.bf16.mxu0 0
  %3143 = vmatpush1.bf16.msra.mxu0 %v237
  %3144 = vmatprep.subr.bf16.mxu0 0
  %3145 = vmatpush1.bf16.msra.mxu0 %v238
  %3146 = vmatprep.subr.bf16.mxu0 0
  %3147 = vmatpush1.bf16.msra.mxu0 %v239
  %3148 = vmatprep.subr.bf16.mxu0 0
  %3149 = vmatpush1.bf16.msra.mxu0 %v240
  %3150 = vmatprep.subr.bf16.mxu0 0
  %3151 = vmatpush1.bf16.msra.mxu0 %v241
  %3152 = vmatprep.mubr.bf16.mxu0 %v3071
  %3153 = vmatmul.mubr.bf16.gmra.mrb[0].mxu0 %v1933
  %v3154 = vpop.f32.mrb[0].mxu0
  %v3155 = vadd.f32 %v3088, %v3154
  %v3156 = vpop.f32.mrb[0].mxu0
  %v3157 = vpop.f32.mrb[0].mxu0
  %v3158 = vadd.f32 %v3089, %v3157
  %v3159 = vpop.f32.mrb[0].mxu0
  %3160 = vmatprep.mubr.bf16.mxu0 %v3072
  %3161 = vmatmul.mubr.bf16.gmra.mrb[0].mxu0 %v1934
  %v3162 = vpop.f32.mrb[0].mxu0
  %v3163 = vadd.f32 %v3090, %v3162
  %v3164 = vpop.f32.mrb[0].mxu0
  %v3165 = vpop.f32.mrb[0].mxu0
  %v3166 = vadd.f32 %v3091, %v3165
  %v3167 = vpop.f32.mrb[0].mxu0
  %3168 = vmatprep.mubr.bf16.mxu0 %v3073
  %3169 = vmatmul.mubr.bf16.gmra.mrb[0].mxu0 %v1935
  %v3170 = vpop.f32.mrb[0].mxu0
  %v3171 = vadd.f32 %v3092, %v3170
  %v3172 = vpop.f32.mrb[0].mxu0
  %v3173 = vpop.f32.mrb[0].mxu0
  %v3174 = vadd.f32 %v3093, %v3173
  %v3175 = vpop.f32.mrb[0].mxu0
  %3176 = vmatprep.mubr.bf16.mxu0 %v3074
  %3177 = vmatmul.mubr.bf16.gmra.mrb[0].mxu0 %v1936
  %v3178 = vpop.f32.mrb[0].mxu0
  %v3179 = vadd.f32 %v3094, %v3178
  %v3180 = vpop.f32.mrb[0].mxu0
  %v3181 = vpop.f32.mrb[0].mxu0
  %v3182 = vadd.f32 %v3095, %v3181
  %v3183 = vpop.f32.mrb[0].mxu0
  %3184 = vmatprep.mubr.bf16.mxu0 %v3075
  %3185 = vmatmul.mubr.bf16.gmra.mrb[0].mxu0 %v1937
  %v3186 = vpop.f32.mrb[0].mxu0
  %v3187 = vadd.f32 %v3096, %v3186
  %v3188 = vpop.f32.mrb[0].mxu0
  %v3189 = vpop.f32.mrb[0].mxu0
  %v3190 = vadd.f32 %v3097, %v3189
  %v3191 = vpop.f32.mrb[0].mxu0
  %3192 = vmatprep.mubr.bf16.mxu0 %v3076
  %3193 = vmatmul.mubr.bf16.gmra.mrb[0].mxu0 %v1938
  %v3194 = vpop.f32.mrb[0].mxu0
  %v3195 = vadd.f32 %v3098, %v3194
  %v3196 = vpop.f32.mrb[0].mxu0
  %v3197 = vpop.f32.mrb[0].mxu0
  %v3198 = vadd.f32 %v3099, %v3197
  %v3199 = vpop.f32.mrb[0].mxu0
  %3200 = vmatprep.mubr.bf16.mxu0 %v3077
  %3201 = vmatmul.mubr.bf16.gmra.mrb[0].mxu0 %v1939
  %v3202 = vpop.f32.mrb[0].mxu0
  %v3203 = vadd.f32 %v3100, %v3202
  %v3204 = vpop.f32.mrb[0].mxu0
  %v3205 = vpop.f32.mrb[0].mxu0
  %v3206 = vadd.f32 %v3101, %v3205
  %v3207 = vpop.f32.mrb[0].mxu0
  %3208 = vmatprep.mubr.bf16.mxu0 %v3078
  %3209 = vmatmul.mubr.bf16.gmra.mrb[0].mxu0 %v1940
  %v3210 = vpop.f32.mrb[0].mxu0
  %v3211 = vadd.f32 %v3102, %v3210
  %v3212 = vpop.f32.mrb[0].mxu0
  %v3213 = vpop.f32.mrb[0].mxu0
  %v3214 = vadd.f32 %v3103, %v3213
  %v3215 = vpop.f32.mrb[0].mxu0
  %3216 = vmatprep.mubr.bf16.mxu0 %v3079
  %3217 = vmatmul.mubr.bf16.gmra.mrb[0].mxu0 %v1941
  %v3218 = vpop.f32.mrb[0].mxu0
  %v3219 = vadd.f32 %v3104, %v3218
  %v3220 = vpop.f32.mrb[0].mxu0
  %v3221 = vpop.f32.mrb[0].mxu0
  %v3222 = vadd.f32 %v3105, %v3221
  %v3223 = vpop.f32.mrb[0].mxu0
  %3224 = vmatprep.mubr.bf16.mxu0 %v3080
  %3225 = vmatmul.mubr.bf16.gmra.mrb[0].mxu0 %v1942
  %v3226 = vpop.f32.mrb[0].mxu0
  %v3227 = vadd.f32 %v3106, %v3226
  %v3228 = vpop.f32.mrb[0].mxu0
  %v3229 = vpop.f32.mrb[0].mxu0
  %v3230 = vadd.f32 %v3107, %v3229
  %v3231 = vpop.f32.mrb[0].mxu0
  %3232 = vmatprep.mubr.bf16.mxu0 %v3081
  %3233 = vmatmul.mubr.bf16.gmra.mrb[0].mxu0 %v1943
  %v3234 = vpop.f32.mrb[0].mxu0
  %v3235 = vadd.f32 %v3108, %v3234
  %v3236 = vpop.f32.mrb[0].mxu0
  %v3237 = vpop.f32.mrb[0].mxu0
  %v3238 = vadd.f32 %v3109, %v3237
  %v3239 = vpop.f32.mrb[0].mxu0
  %3240 = vmatprep.mubr.bf16.mxu0 %v3082
  %3241 = vmatmul.mubr.bf16.gmra.mrb[0].mxu0 %v1944
  %v3242 = vpop.f32.mrb[0].mxu0
  %v3243 = vadd.f32 %v3110, %v3242
  %v3244 = vpop.f32.mrb[0].mxu0
  %v3245 = vpop.f32.mrb[0].mxu0
  %v3246 = vadd.f32 %v3111, %v3245
  %v3247 = vpop.f32.mrb[0].mxu0
  %3248 = vmatprep.mubr.bf16.mxu0 %v3083
  %3249 = vmatmul.mubr.bf16.gmra.mrb[0].mxu0 %v1945
  %v3250 = vpop.f32.mrb[0].mxu0
  %v3251 = vadd.f32 %v3112, %v3250
  %v3252 = vpop.f32.mrb[0].mxu0
  %v3253 = vpop.f32.mrb[0].mxu0
  %v3254 = vadd.f32 %v3113, %v3253
  %v3255 = vpop.f32.mrb[0].mxu0
  %3256 = vmatprep.mubr.bf16.mxu0 %v3084
  %3257 = vmatmul.mubr.bf16.gmra.mrb[0].mxu0 %v1946
  %v3258 = vpop.f32.mrb[0].mxu0
  %v3259 = vadd.f32 %v3114, %v3258
  %v3260 = vpop.f32.mrb[0].mxu0
  %v3261 = vpop.f32.mrb[0].mxu0
  %v3262 = vadd.f32 %v3115, %v3261
  %v3263 = vpop.f32.mrb[0].mxu0
  %3264 = vmatprep.mubr.bf16.mxu0 %v3085
  %3265 = vmatmul.mubr.bf16.gmra.mrb[0].mxu0 %v1947
  %v3266 = vpop.f32.mrb[0].mxu0
  %v3267 = vadd.f32 %v3116, %v3266
  %v3268 = vpop.f32.mrb[0].mxu0
  %v3269 = vpop.f32.mrb[0].mxu0
  %v3270 = vadd.f32 %v3117, %v3269
  %v3271 = vpop.f32.mrb[0].mxu0
  %3272 = vmatprep.mubr.bf16.mxu0 %v3086
  %3273 = vmatmul.mubr.bf16.gmra.mrb[0].mxu0 %v1948
  %v3274 = vpop.f32.mrb[0].mxu0
  %v3275 = vadd.f32 %v3118, %v3274
  %v3276 = vpop.f32.mrb[0].mxu0
  %v3277 = vpop.f32.mrb[0].mxu0
  %v3278 = vadd.f32 %v3119, %v3277
  %v3279 = vpop.f32.mrb[0].mxu0
  %3280 = vdwg.mxu0
  %v3281 = vtanh.pop %v3155
  %v3282 = vtanh.pop %v3158
  %v3283 = vtanh.pop %v3163
  %v3284 = vtanh.pop %v3166
  %v3285 = vtanh.pop %v3171
  %v3286 = vtanh.pop %v3174
  %v3287 = vtanh.pop %v3179
  %v3288 = vtanh.pop %v3182
  %v3289 = vtanh.pop %v3187
  %v3290 = vtanh.pop %v3190
  %v3291 = vtanh.pop %v3195
  %v3292 = vtanh.pop %v3198
  %v3293 = vtanh.pop %v3203
  %v3294 = vtanh.pop %v3206
  %v3295 = vtanh.pop %v3211
  %v3296 = vtanh.pop %v3214
  %v3297 = vtanh.pop %v3219
  %v3298 = vtanh.pop %v3222
  %v3299 = vtanh.pop %v3227
  %v3300 = vtanh.pop %v3230
  %v3301 = vtanh.pop %v3235
  %v3302 = vtanh.pop %v3238
  %v3303 = vtanh.pop %v3243
  %v3304 = vtanh.pop %v3246
  %v3305 = vtanh.pop %v3251
  %v3306 = vtanh.pop %v3254
  %v3307 = vtanh.pop %v3259
  %v3308 = vtanh.pop %v3262
  %v3309 = vtanh.pop %v3267
  %v3310 = vtanh.pop %v3270
  %v3311 = vtanh.pop %v3275
  %v3312 = vtanh.pop %v3278
  %v3313 = vpack.c.bf16 %v3282, %v3281
  %v3314 = vpack.c.bf16 %v3284, %v3283
  %v3315 = vpack.c.bf16 %v3286, %v3285
  %v3316 = vpack.c.bf16 %v3288, %v3287
  %v3317 = vpack.c.bf16 %v3290, %v3289
  %v3318 = vpack.c.bf16 %v3292, %v3291
  %v3319 = vpack.c.bf16 %v3294, %v3293
  %v3320 = vpack.c.bf16 %v3296, %v3295
  %v3321 = vpack.c.bf16 %v3298, %v3297
  %v3322 = vpack.c.bf16 %v3300, %v3299
  %v3323 = vpack.c.bf16 %v3302, %v3301
  %v3324 = vpack.c.bf16 %v3304, %v3303
  %v3325 = vpack.c.bf16 %v3306, %v3305
  %v3326 = vpack.c.bf16 %v3308, %v3307
  %v3327 = vpack.c.bf16 %v3310, %v3309
  %v3328 = vpack.c.bf16 %v3312, %v3311
  %3329 = vmatprep.subr.bf16.mxu0 %v527
  %3330 = vmatpush1.bf16.msra.mxu0 %v526
  %3331 = vmatprep.subr.bf16.mxu0 %v529
  %3332 = vmatpush1.bf16.msra.mxu0 %v528
  %3333 = vmatprep.subr.bf16.mxu0 %v531
  %3334 = vmatpush1.bf16.msra.mxu0 %v530
  %3335 = vmatprep.subr.bf16.mxu0 %v533
  %3336 = vmatpush1.bf16.msra.mxu0 %v532
  %3337 = vmatprep.subr.bf16.mxu0 %v535
  %3338 = vmatpush1.bf16.msra.mxu0 %v534
  %3339 = vmatprep.subr.bf16.mxu0 %v537
  %3340 = vmatpush1.bf16.msra.mxu0 %v536
  %3341 = vmatprep.subr.bf16.mxu0 %v539
  %3342 = vmatpush1.bf16.msra.mxu0 %v538
  %3343 = vmatprep.subr.bf16.mxu0 %v541
  %3344 = vmatpush1.bf16.msra.mxu0 %v540
  %3345 = vmatprep.subr.bf16.mxu0 0
  %3346 = vmatpush1.bf16.msra.mxu0 0
  %3347 = vmatprep.subr.bf16.mxu0 0
  %3348 = vmatpush1.bf16.msra.mxu0 0
  %3349 = vmatprep.subr.bf16.mxu0 0
  %3350 = vmatpush1.bf16.msra.mxu0 0
  %3351 = vmatprep.subr.bf16.mxu0 0
  %3352 = vmatpush1.bf16.msra.mxu0 0
  %3353 = vmatprep.subr.bf16.mxu0 0
  %3354 = vmatpush1.bf16.msra.mxu0 0
  %3355 = vmatprep.subr.bf16.mxu0 0
  %3356 = vmatpush1.bf16.msra.mxu0 0
  %3357 = vmatprep.subr.bf16.mxu0 0
  %3358 = vmatpush1.bf16.msra.mxu0 0
  %3359 = vmatprep.subr.bf16.mxu0 0
  %3360 = vmatpush1.bf16.msra.mxu0 0
  %3361 = vmatprep.mubr.bf16.mxu0 0
  %3362 = vmatmul.mubr.bf16.gmra.mrb[0].mxu0 %v3313
  %v3363 = vpop.f32.mrb[0].mxu0
  %v3364 = vadd.f32 %v471, %v3363
  %v3365 = vpop.f32.mrb[0].mxu0
  %v3366 = vadd.f32 %v475, %v3365
  %v3367 = vpop.f32.mrb[0].mxu0
  %v3368 = vadd.f32 %v471, %v3367
  %v3369 = vpop.f32.mrb[0].mxu0
  %v3370 = vadd.f32 %v475, %v3369
  %3371 = vmatprep.mubr.bf16.mxu0 0
  %3372 = vmatmul.mubr.bf16.gmra.mrb[0].mxu0 %v3314
  %v3373 = vpop.f32.mrb[0].mxu0
  %v3374 = vadd.f32 %v471, %v3373
  %v3375 = vpop.f32.mrb[0].mxu0
  %v3376 = vadd.f32 %v475, %v3375
  %v3377 = vpop.f32.mrb[0].mxu0
  %v3378 = vadd.f32 %v471, %v3377
  %v3379 = vpop.f32.mrb[0].mxu0
  %v3380 = vadd.f32 %v475, %v3379
  %3381 = vmatprep.mubr.bf16.mxu0 0
  %3382 = vmatmul.mubr.bf16.gmra.mrb[0].mxu0 %v3315
  %v3383 = vpop.f32.mrb[0].mxu0
  %v3384 = vadd.f32 %v471, %v3383
  %v3385 = vpop.f32.mrb[0].mxu0
  %v3386 = vadd.f32 %v475, %v3385
  %v3387 = vpop.f32.mrb[0].mxu0
  %v3388 = vadd.f32 %v471, %v3387
  %v3389 = vpop.f32.mrb[0].mxu0
  %v3390 = vadd.f32 %v475, %v3389
  %3391 = vmatprep.mubr.bf16.mxu0 0
  %3392 = vmatmul.mubr.bf16.gmra.mrb[0].mxu0 %v3316
  %v3393 = vpop.f32.mrb[0].mxu0
  %v3394 = vadd.f32 %v471, %v3393
  %v3395 = vpop.f32.mrb[0].mxu0
  %v3396 = vadd.f32 %v475, %v3395
  %v3397 = vpop.f32.mrb[0].mxu0
  %v3398 = vadd.f32 %v471, %v3397
  %v3399 = vpop.f32.mrb[0].mxu0
  %v3400 = vadd.f32 %v475, %v3399
  %3401 = vmatprep.mubr.bf16.mxu0 0
  %3402 = vmatmul.mubr.bf16.gmra.mrb[0].mxu0 %v3317
  %v3403 = vpop.f32.mrb[0].mxu0
  %v3404 = vadd.f32 %v471, %v3403
  %v3405 = vpop.f32.mrb[0].mxu0
  %v3406 = vadd.f32 %v475, %v3405
  %v3407 = vpop.f32.mrb[0].mxu0
  %v3408 = vadd.f32 %v471, %v3407
  %v3409 = vpop.f32.mrb[0].mxu0
  %v3410 = vadd.f32 %v475, %v3409
  %3411 = vmatprep.mubr.bf16.mxu0 0
  %3412 = vmatmul.mubr.bf16.gmra.mrb[0].mxu0 %v3318
  %v3413 = vpop.f32.mrb[0].mxu0
  %v3414 = vadd.f32 %v471, %v3413
  %v3415 = vpop.f32.mrb[0].mxu0
  %v3416 = vadd.f32 %v475, %v3415
  %v3417 = vpop.f32.mrb[0].mxu0
  %v3418 = vadd.f32 %v471, %v3417
  %v3419 = vpop.f32.mrb[0].mxu0
  %v3420 = vadd.f32 %v475, %v3419
  %3421 = vmatprep.mubr.bf16.mxu0 0
  %3422 = vmatmul.mubr.bf16.gmra.mrb[0].mxu0 %v3319
  %v3423 = vpop.f32.mrb[0].mxu0
  %v3424 = vadd.f32 %v471, %v3423
  %v3425 = vpop.f32.mrb[0].mxu0
  %v3426 = vadd.f32 %v475, %v3425
  %v3427 = vpop.f32.mrb[0].mxu0
  %v3428 = vadd.f32 %v471, %v3427
  %v3429 = vpop.f32.mrb[0].mxu0
  %v3430 = vadd.f32 %v475, %v3429
  %3431 = vmatprep.mubr.bf16.mxu0 0
  %3432 = vmatmul.mubr.bf16.gmra.mrb[0].mxu0 %v3320
  %v3433 = vpop.f32.mrb[0].mxu0
  %v3434 = vadd.f32 %v471, %v3433
  %v3435 = vpop.f32.mrb[0].mxu0
  %v3436 = vadd.f32 %v475, %v3435
  %v3437 = vpop.f32.mrb[0].mxu0
  %v3438 = vadd.f32 %v471, %v3437
  %v3439 = vpop.f32.mrb[0].mxu0
  %v3440 = vadd.f32 %v475, %v3439
  %3441 = vmatprep.mubr.bf16.mxu0 0
  %3442 = vmatmul.mubr.bf16.gmra.mrb[0].mxu0 %v3321
  %v3443 = vpop.f32.mrb[0].mxu0
  %v3444 = vadd.f32 %v471, %v3443
  %v3445 = vpop.f32.mrb[0].mxu0
  %v3446 = vadd.f32 %v475, %v3445
  %v3447 = vpop.f32.mrb[0].mxu0
  %v3448 = vadd.f32 %v471, %v3447
  %v3449 = vpop.f32.mrb[0].mxu0
  %v3450 = vadd.f32 %v475, %v3449
  %3451 = vmatprep.mubr.bf16.mxu0 0
  %3452 = vmatmul.mubr.bf16.gmra.mrb[0].mxu0 %v3322
  %v3453 = vpop.f32.mrb[0].mxu0
  %v3454 = vadd.f32 %v471, %v3453
  %v3455 = vpop.f32.mrb[0].mxu0
  %v3456 = vadd.f32 %v475, %v3455
  %v3457 = vpop.f32.mrb[0].mxu0
  %v3458 = vadd.f32 %v471, %v3457
  %v3459 = vpop.f32.mrb[0].mxu0
  %v3460 = vadd.f32 %v475, %v3459
  %3461 = vmatprep.mubr.bf16.mxu0 0
  %3462 = vmatmul.mubr.bf16.gmra.mrb[0].mxu0 %v3323
  %v3463 = vpop.f32.mrb[0].mxu0
  %v3464 = vadd.f32 %v471, %v3463
  %v3465 = vpop.f32.mrb[0].mxu0
  %v3466 = vadd.f32 %v475, %v3465
  %v3467 = vpop.f32.mrb[0].mxu0
  %v3468 = vadd.f32 %v471, %v3467
  %v3469 = vpop.f32.mrb[0].mxu0
  %v3470 = vadd.f32 %v475, %v3469
  %3471 = vmatprep.mubr.bf16.mxu0 0
  %3472 = vmatmul.mubr.bf16.gmra.mrb[0].mxu0 %v3324
  %v3473 = vpop.f32.mrb[0].mxu0
  %v3474 = vadd.f32 %v471, %v3473
  %v3475 = vpop.f32.mrb[0].mxu0
  %v3476 = vadd.f32 %v475, %v3475
  %v3477 = vpop.f32.mrb[0].mxu0
  %v3478 = vadd.f32 %v471, %v3477
  %v3479 = vpop.f32.mrb[0].mxu0
  %v3480 = vadd.f32 %v475, %v3479
  %3481 = vmatprep.mubr.bf16.mxu0 0
  %3482 = vmatmul.mubr.bf16.gmra.mrb[0].mxu0 %v3325
  %v3483 = vpop.f32.mrb[0].mxu0
  %v3484 = vadd.f32 %v471, %v3483
  %v3485 = vpop.f32.mrb[0].mxu0
  %v3486 = vadd.f32 %v475, %v3485
  %v3487 = vpop.f32.mrb[0].mxu0
  %v3488 = vadd.f32 %v471, %v3487
  %v3489 = vpop.f32.mrb[0].mxu0
  %v3490 = vadd.f32 %v475, %v3489
  %3491 = vmatprep.mubr.bf16.mxu0 0
  %3492 = vmatmul.mubr.bf16.gmra.mrb[0].mxu0 %v3326
  %v3493 = vpop.f32.mrb[0].mxu0
  %v3494 = vadd.f32 %v471, %v3493
  %v3495 = vpop.f32.mrb[0].mxu0
  %v3496 = vadd.f32 %v475, %v3495
  %v3497 = vpop.f32.mrb[0].mxu0
  %v3498 = vadd.f32 %v471, %v3497
  %v3499 = vpop.f32.mrb[0].mxu0
  %v3500 = vadd.f32 %v475, %v3499
  %3501 = vmatprep.mubr.bf16.mxu0 0
  %3502 = vmatmul.mubr.bf16.gmra.mrb[0].mxu0 %v3327
  %v3503 = vpop.f32.mrb[0].mxu0
  %v3504 = vadd.f32 %v471, %v3503
  %v3505 = vpop.f32.mrb[0].mxu0
  %v3506 = vadd.f32 %v475, %v3505
  %v3507 = vpop.f32.mrb[0].mxu0
  %v3508 = vadd.f32 %v471, %v3507
  %v3509 = vpop.f32.mrb[0].mxu0
  %v3510 = vadd.f32 %v475, %v3509
  %3511 = vmatprep.mubr.bf16.mxu0 0
  %3512 = vmatmul.mubr.bf16.gmra.mrb[0].mxu0 %v3328
  %v3513 = vpop.f32.mrb[0].mxu0
  %v3514 = vadd.f32 %v471, %v3513
  %v3515 = vpop.f32.mrb[0].mxu0
  %v3516 = vadd.f32 %v475, %v3515
  %v3517 = vpop.f32.mrb[0].mxu0
  %v3518 = vadd.f32 %v471, %v3517
  %v3519 = vpop.f32.mrb[0].mxu0
  %v3520 = vadd.f32 %v475, %v3519
  %3521 = vdwg.mxu0
  %v3522 = vmax.f32 %v3366, 0.0
  %v3523 = vmax.f32 %v3370, 0.0
  %v3524 = vmax.f32 %v3376, 0.0
  %v3525 = vmax.f32 %v3380, 0.0
  %v3526 = vmax.f32 %v3386, 0.0
  %v3527 = vmax.f32 %v3390, 0.0
  %v3528 = vmax.f32 %v3396, 0.0
  %v3529 = vmax.f32 %v3400, 0.0
  %v3530 = vmax.f32 %v3406, 0.0
  %v3531 = vmax.f32 %v3410, 0.0
  %v3532 = vmax.f32 %v3416, 0.0
  %v3533 = vmax.f32 %v3420, 0.0
  %v3534 = vmax.f32 %v3426, 0.0
  %v3535 = vmax.f32 %v3430, 0.0
  %v3536 = vmax.f32 %v3436, 0.0
  %v3537 = vmax.f32 %v3440, 0.0
  %v3538 = vmax.f32 %v3446, 0.0
  %v3539 = vmax.f32 %v3450, 0.0
  %v3540 = vmax.f32 %v3456, 0.0
  %v3541 = vmax.f32 %v3460, 0.0
  %v3542 = vmax.f32 %v3466, 0.0
  %v3543 = vmax.f32 %v3470, 0.0
  %v3544 = vmax.f32 %v3476, 0.0
  %v3545 = vmax.f32 %v3480, 0.0
  %v3546 = vmax.f32 %v3486, 0.0
  %v3547 = vmax.f32 %v3490, 0.0
  %v3548 = vmax.f32 %v3496, 0.0
  %v3549 = vmax.f32 %v3500, 0.0
  %v3550 = vmax.f32 %v3506, 0.0
  %v3551 = vmax.f32 %v3510, 0.0
  %v3552 = vmax.f32 %v3516, 0.0
  %v3553 = vmax.f32 %v3520, 0.0
  %vm3554 = vcmp.ne.f32.partialorder %v3366, %v3366
  %vm3555 = vcmp.ne.f32.partialorder %v3370, %v3370
  %vm3556 = vcmp.ne.f32.partialorder %v3376, %v3376
  %vm3557 = vcmp.ne.f32.partialorder %v3380, %v3380
  %vm3558 = vcmp.ne.f32.partialorder %v3386, %v3386
  %vm3559 = vcmp.ne.f32.partialorder %v3390, %v3390
  %vm3560 = vcmp.ne.f32.partialorder %v3396, %v3396
  %vm3561 = vcmp.ne.f32.partialorder %v3400, %v3400
  %vm3562 = vcmp.ne.f32.partialorder %v3406, %v3406
  %vm3563 = vcmp.ne.f32.partialorder %v3410, %v3410
  %vm3564 = vcmp.ne.f32.partialorder %v3416, %v3416
  %vm3565 = vcmp.ne.f32.partialorder %v3420, %v3420
  %vm3566 = vcmp.ne.f32.partialorder %v3426, %v3426
  %vm3567 = vcmp.ne.f32.partialorder %v3430, %v3430
  %vm3568 = vcmp.ne.f32.partialorder %v3436, %v3436
  %vm3569 = vcmp.ne.f32.partialorder %v3440, %v3440
  %vm3570 = vcmp.ne.f32.partialorder %v3446, %v3446
  %vm3571 = vcmp.ne.f32.partialorder %v3450, %v3450
  %vm3572 = vcmp.ne.f32.partialorder %v3456, %v3456
  %vm3573 = vcmp.ne.f32.partialorder %v3460, %v3460
  %vm3574 = vcmp.ne.f32.partialorder %v3466, %v3466
  %vm3575 = vcmp.ne.f32.partialorder %v3470, %v3470
  %vm3576 = vcmp.ne.f32.partialorder %v3476, %v3476
  %vm3577 = vcmp.ne.f32.partialorder %v3480, %v3480
  %vm3578 = vcmp.ne.f32.partialorder %v3486, %v3486
  %vm3579 = vcmp.ne.f32.partialorder %v3490, %v3490
  %vm3580 = vcmp.ne.f32.partialorder %v3496, %v3496
  %vm3581 = vcmp.ne.f32.partialorder %v3500, %v3500
  %vm3582 = vcmp.ne.f32.partialorder %v3506, %v3506
  %vm3583 = vcmp.ne.f32.partialorder %v3510, %v3510
  %vm3584 = vcmp.ne.f32.partialorder %v3516, %v3516
  %vm3585 = vcmp.ne.f32.partialorder %v3520, %v3520
  %v3586 = vadd.f32 %v3366, 0.0
  %v3587 = vadd.f32 %v3370, 0.0
  %v3588 = vadd.f32 %v3376, 0.0
  %v3589 = vadd.f32 %v3380, 0.0
  %v3590 = vadd.f32 %v3386, 0.0
  %v3591 = vadd.f32 %v3390, 0.0
  %v3592 = vadd.f32 %v3396, 0.0
  %v3593 = vadd.f32 %v3400, 0.0
  %v3594 = vadd.f32 %v3406, 0.0
  %v3595 = vadd.f32 %v3410, 0.0
  %v3596 = vadd.f32 %v3416, 0.0
  %v3597 = vadd.f32 %v3420, 0.0
  %v3598 = vadd.f32 %v3426, 0.0
  %v3599 = vadd.f32 %v3430, 0.0
  %v3600 = vadd.f32 %v3436, 0.0
  %v3601 = vadd.f32 %v3440, 0.0
  %v3602 = vadd.f32 %v3446, 0.0
  %v3603 = vadd.f32 %v3450, 0.0
  %v3604 = vadd.f32 %v3456, 0.0
  %v3605 = vadd.f32 %v3460, 0.0
  %v3606 = vadd.f32 %v3466, 0.0
  %v3607 = vadd.f32 %v3470, 0.0
  %v3608 = vadd.f32 %v3476, 0.0
  %v3609 = vadd.f32 %v3480, 0.0
  %v3610 = vadd.f32 %v3486, 0.0
  %v3611 = vadd.f32 %v3490, 0.0
  %v3612 = vadd.f32 %v3496, 0.0
  %v3613 = vadd.f32 %v3500, 0.0
  %v3614 = vadd.f32 %v3506, 0.0
  %v3615 = vadd.f32 %v3510, 0.0
  %v3616 = vadd.f32 %v3516, 0.0
  %v3617 = vadd.f32 %v3520, 0.0
  %v3618 = vand.u32 2147483647, %v3366
  %v3619 = vand.u32 2147483647, %v3370
  %v3620 = vand.u32 2147483647, %v3376
  %v3621 = vand.u32 2147483647, %v3380
  %v3622 = vand.u32 2147483647, %v3386
  %v3623 = vand.u32 2147483647, %v3390
  %v3624 = vand.u32 2147483647, %v3396
  %v3625 = vand.u32 2147483647, %v3400
  %v3626 = vand.u32 2147483647, %v3406
  %v3627 = vand.u32 2147483647, %v3410
  %v3628 = vand.u32 2147483647, %v3416
  %v3629 = vand.u32 2147483647, %v3420
  %v3630 = vand.u32 2147483647, %v3426
  %v3631 = vand.u32 2147483647, %v3430
  %v3632 = vand.u32 2147483647, %v3436
  %v3633 = vand.u32 2147483647, %v3440
  %v3634 = vand.u32 2147483647, %v3446
  %v3635 = vand.u32 2147483647, %v3450
  %v3636 = vand.u32 2147483647, %v3456
  %v3637 = vand.u32 2147483647, %v3460
  %v3638 = vand.u32 2147483647, %v3466
  %v3639 = vand.u32 2147483647, %v3470
  %v3640 = vand.u32 2147483647, %v3476
  %v3641 = vand.u32 2147483647, %v3480
  %v3642 = vand.u32 2147483647, %v3486
  %v3643 = vand.u32 2147483647, %v3490
  %v3644 = vand.u32 2147483647, %v3496
  %v3645 = vand.u32 2147483647, %v3500
  %v3646 = vand.u32 2147483647, %v3506
  %v3647 = vand.u32 2147483647, %v3510
  %v3648 = vand.u32 2147483647, %v3516
  %v3649 = vand.u32 2147483647, %v3520
  %v3650 = vsub.f32 0.0, %v3618
  %v3651 = vsub.f32 0.0, %v3619
  %v3652 = vsub.f32 0.0, %v3620
  %v3653 = vsub.f32 0.0, %v3621
  %v3654 = vsub.f32 0.0, %v3622
  %v3655 = vsub.f32 0.0, %v3623
  %v3656 = vsub.f32 0.0, %v3624
  %v3657 = vsub.f32 0.0, %v3625
  %v3658 = vsub.f32 0.0, %v3626
  %v3659 = vsub.f32 0.0, %v3627
  %v3660 = vsub.f32 0.0, %v3628
  %v3661 = vsub.f32 0.0, %v3629
  %v3662 = vsub.f32 0.0, %v3630
  %v3663 = vsub.f32 0.0, %v3631
  %v3664 = vsub.f32 0.0, %v3632
  %v3665 = vsub.f32 0.0, %v3633
  %v3666 = vsub.f32 0.0, %v3634
  %v3667 = vsub.f32 0.0, %v3635
  %v3668 = vsub.f32 0.0, %v3636
  %v3669 = vsub.f32 0.0, %v3637
  %v3670 = vsub.f32 0.0, %v3638
  %v3671 = vsub.f32 0.0, %v3639
  %v3672 = vsub.f32 0.0, %v3640
  %v3673 = vsub.f32 0.0, %v3641
  %v3674 = vsub.f32 0.0, %v3642
  %v3675 = vsub.f32 0.0, %v3643
  %v3676 = vsub.f32 0.0, %v3644
  %v3677 = vsub.f32 0.0, %v3645
  %v3678 = vsub.f32 0.0, %v3646
  %v3679 = vsub.f32 0.0, %v3647
  %v3680 = vsub.f32 0.0, %v3648
  %v3681 = vsub.f32 0.0, %v3649
  %v3682 = vmul.f32 %v3650, 1.442695
  %v3683 = vpow.pop %v3682
  %v3684 = vmul.f32 %v3651, 1.442695
  %v3685 = vpow.pop %v3684
  %v3686 = vmul.f32 %v3652, 1.442695
  %v3687 = vpow.pop %v3686
  %v3688 = vmul.f32 %v3653, 1.442695
  %v3689 = vpow.pop %v3688
  %v3690 = vmul.f32 %v3654, 1.442695
  %v3691 = vpow.pop %v3690
  %v3692 = vmul.f32 %v3655, 1.442695
  %v3693 = vpow.pop %v3692
  %v3694 = vmul.f32 %v3656, 1.442695
  %v3695 = vpow.pop %v3694
  %v3696 = vmul.f32 %v3657, 1.442695
  %v3697 = vpow.pop %v3696
  %v3698 = vmul.f32 %v3658, 1.442695
  %v3699 = vpow.pop %v3698
  %v3700 = vmul.f32 %v3659, 1.442695
  %v3701 = vpow.pop %v3700
  %v3702 = vmul.f32 %v3660, 1.442695
  %v3703 = vpow.pop %v3702
  %v3704 = vmul.f32 %v3661, 1.442695
  %v3705 = vpow.pop %v3704
  %v3706 = vmul.f32 %v3662, 1.442695
  %v3707 = vpow.pop %v3706
  %v3708 = vmul.f32 %v3663, 1.442695
  %v3709 = vpow.pop %v3708
  %v3710 = vmul.f32 %v3664, 1.442695
  %v3711 = vpow.pop %v3710
  %v3712 = vmul.f32 %v3665, 1.442695
  %v3713 = vpow.pop %v3712
  %v3714 = vmul.f32 %v3666, 1.442695
  %v3715 = vpow.pop %v3714
  %v3716 = vmul.f32 %v3667, 1.442695
  %v3717 = vpow.pop %v3716
  %v3718 = vmul.f32 %v3668, 1.442695
  %v3719 = vpow.pop %v3718
  %v3720 = vmul.f32 %v3669, 1.442695
  %v3721 = vpow.pop %v3720
  %v3722 = vmul.f32 %v3670, 1.442695
  %v3723 = vpow.pop %v3722
  %v3724 = vmul.f32 %v3671, 1.442695
  %v3725 = vpow.pop %v3724
  %v3726 = vmul.f32 %v3672, 1.442695
  %v3727 = vpow.pop %v3726
  %v3728 = vmul.f32 %v3673, 1.442695
  %v3729 = vpow.pop %v3728
  %v3730 = vmul.f32 %v3674, 1.442695
  %v3731 = vpow.pop %v3730
  %v3732 = vmul.f32 %v3675, 1.442695
  %v3733 = vpow.pop %v3732
  %v3734 = vmul.f32 %v3676, 1.442695
  %v3735 = vpow.pop %v3734
  %v3736 = vmul.f32 %v3677, 1.442695
  %v3737 = vpow.pop %v3736
  %v3738 = vmul.f32 %v3678, 1.442695
  %v3739 = vpow.pop %v3738
  %v3740 = vmul.f32 %v3679, 1.442695
  %v3741 = vpow.pop %v3740
  %v3742 = vmul.f32 %v3680, 1.442695
  %v3743 = vpow.pop %v3742
  %v3744 = vmul.f32 %v3681, 1.442695
  %v3745 = vpow.pop %v3744
  %v3746 = vadd.f32 %v3683, 1.0
  %v3747 = vlog2.pop %v3746
  %v3748 = vmul.f32 %v3747, 0.6931472
  %v3749 = vmul.f32 -0.5, %v3683
  %v3750 = vadd.f32 %v3749, 1.0
  %v3751 = vmul.f32 %v3750, %v3683
  %v3752 = vand.u32 2147483647, %v3683
  %vm3753 = vcmp.lt.f32.partialorder %v3752, 0.0004427343
  %v3754 = vsel %vm3753, %v3751, %v3748
  %v3755 = vadd.f32 %v3685, 1.0
  %v3756 = vlog2.pop %v3755
  %v3757 = vmul.f32 %v3756, 0.6931472
  %v3758 = vmul.f32 -0.5, %v3685
  %v3759 = vadd.f32 %v3758, 1.0
  %v3760 = vmul.f32 %v3759, %v3685
  %v3761 = vand.u32 2147483647, %v3685
  %vm3762 = vcmp.lt.f32.partialorder %v3761, 0.0004427343
  %v3763 = vsel %vm3762, %v3760, %v3757
  %v3764 = vadd.f32 %v3687, 1.0
  %v3765 = vlog2.pop %v3764
  %v3766 = vmul.f32 %v3765, 0.6931472
  %v3767 = vmul.f32 -0.5, %v3687
  %v3768 = vadd.f32 %v3767, 1.0
  %v3769 = vmul.f32 %v3768, %v3687
  %v3770 = vand.u32 2147483647, %v3687
  %vm3771 = vcmp.lt.f32.partialorder %v3770, 0.0004427343
  %v3772 = vsel %vm3771, %v3769, %v3766
  %v3773 = vadd.f32 %v3689, 1.0
  %v3774 = vlog2.pop %v3773
  %v3775 = vmul.f32 %v3774, 0.6931472
  %v3776 = vmul.f32 -0.5, %v3689
  %v3777 = vadd.f32 %v3776, 1.0
  %v3778 = vmul.f32 %v3777, %v3689
  %v3779 = vand.u32 2147483647, %v3689
  %vm3780 = vcmp.lt.f32.partialorder %v3779, 0.0004427343
  %v3781 = vsel %vm3780, %v3778, %v3775
  %v3782 = vadd.f32 %v3691, 1.0
  %v3783 = vlog2.pop %v3782
  %v3784 = vmul.f32 %v3783, 0.6931472
  %v3785 = vmul.f32 -0.5, %v3691
  %v3786 = vadd.f32 %v3785, 1.0
  %v3787 = vmul.f32 %v3786, %v3691
  %v3788 = vand.u32 2147483647, %v3691
  %vm3789 = vcmp.lt.f32.partialorder %v3788, 0.0004427343
  %v3790 = vsel %vm3789, %v3787, %v3784
  %v3791 = vadd.f32 %v3693, 1.0
  %v3792 = vlog2.pop %v3791
  %v3793 = vmul.f32 %v3792, 0.6931472
  %v3794 = vmul.f32 -0.5, %v3693
  %v3795 = vadd.f32 %v3794, 1.0
  %v3796 = vmul.f32 %v3795, %v3693
  %v3797 = vand.u32 2147483647, %v3693
  %vm3798 = vcmp.lt.f32.partialorder %v3797, 0.0004427343
  %v3799 = vsel %vm3798, %v3796, %v3793
  %v3800 = vadd.f32 %v3695, 1.0
  %v3801 = vlog2.pop %v3800
  %v3802 = vmul.f32 %v3801, 0.6931472
  %v3803 = vmul.f32 -0.5, %v3695
  %v3804 = vadd.f32 %v3803, 1.0
  %v3805 = vmul.f32 %v3804, %v3695
  %v3806 = vand.u32 2147483647, %v3695
  %vm3807 = vcmp.lt.f32.partialorder %v3806, 0.0004427343
  %v3808 = vsel %vm3807, %v3805, %v3802
  %v3809 = vadd.f32 %v3697, 1.0
  %v3810 = vlog2.pop %v3809
  %v3811 = vmul.f32 %v3810, 0.6931472
  %v3812 = vmul.f32 -0.5, %v3697
  %v3813 = vadd.f32 %v3812, 1.0
  %v3814 = vmul.f32 %v3813, %v3697
  %v3815 = vand.u32 2147483647, %v3697
  %vm3816 = vcmp.lt.f32.partialorder %v3815, 0.0004427343
  %v3817 = vsel %vm3816, %v3814, %v3811
  %v3818 = vadd.f32 %v3699, 1.0
  %v3819 = vlog2.pop %v3818
  %v3820 = vmul.f32 %v3819, 0.6931472
  %v3821 = vmul.f32 -0.5, %v3699
  %v3822 = vadd.f32 %v3821, 1.0
  %v3823 = vmul.f32 %v3822, %v3699
  %v3824 = vand.u32 2147483647, %v3699
  %vm3825 = vcmp.lt.f32.partialorder %v3824, 0.0004427343
  %v3826 = vsel %vm3825, %v3823, %v3820
  %v3827 = vadd.f32 %v3701, 1.0
  %v3828 = vlog2.pop %v3827
  %v3829 = vmul.f32 %v3828, 0.6931472
  %v3830 = vmul.f32 -0.5, %v3701
  %v3831 = vadd.f32 %v3830, 1.0
  %v3832 = vmul.f32 %v3831, %v3701
  %v3833 = vand.u32 2147483647, %v3701
  %vm3834 = vcmp.lt.f32.partialorder %v3833, 0.0004427343
  %v3835 = vsel %vm3834, %v3832, %v3829
  %v3836 = vadd.f32 %v3703, 1.0
  %v3837 = vlog2.pop %v3836
  %v3838 = vmul.f32 %v3837, 0.6931472
  %v3839 = vmul.f32 -0.5, %v3703
  %v3840 = vadd.f32 %v3839, 1.0
  %v3841 = vmul.f32 %v3840, %v3703
  %v3842 = vand.u32 2147483647, %v3703
  %vm3843 = vcmp.lt.f32.partialorder %v3842, 0.0004427343
  %v3844 = vsel %vm3843, %v3841, %v3838
  %v3845 = vadd.f32 %v3705, 1.0
  %v3846 = vlog2.pop %v3845
  %v3847 = vmul.f32 %v3846, 0.6931472
  %v3848 = vmul.f32 -0.5, %v3705
  %v3849 = vadd.f32 %v3848, 1.0
  %v3850 = vmul.f32 %v3849, %v3705
  %v3851 = vand.u32 2147483647, %v3705
  %vm3852 = vcmp.lt.f32.partialorder %v3851, 0.0004427343
  %v3853 = vsel %vm3852, %v3850, %v3847
  %v3854 = vadd.f32 %v3707, 1.0
  %v3855 = vlog2.pop %v3854
  %v3856 = vmul.f32 %v3855, 0.6931472
  %v3857 = vmul.f32 -0.5, %v3707
  %v3858 = vadd.f32 %v3857, 1.0
  %v3859 = vmul.f32 %v3858, %v3707
  %v3860 = vand.u32 2147483647, %v3707
  %vm3861 = vcmp.lt.f32.partialorder %v3860, 0.0004427343
  %v3862 = vsel %vm3861, %v3859, %v3856
  %v3863 = vadd.f32 %v3709, 1.0
  %v3864 = vlog2.pop %v3863
  %v3865 = vmul.f32 %v3864, 0.6931472
  %v3866 = vmul.f32 -0.5, %v3709
  %v3867 = vadd.f32 %v3866, 1.0
  %v3868 = vmul.f32 %v3867, %v3709
  %v3869 = vand.u32 2147483647, %v3709
  %vm3870 = vcmp.lt.f32.partialorder %v3869, 0.0004427343
  %v3871 = vsel %vm3870, %v3868, %v3865
  %v3872 = vadd.f32 %v3711, 1.0
  %v3873 = vlog2.pop %v3872
  %v3874 = vmul.f32 %v3873, 0.6931472
  %v3875 = vmul.f32 -0.5, %v3711
  %v3876 = vadd.f32 %v3875, 1.0
  %v3877 = vmul.f32 %v3876, %v3711
  %v3878 = vand.u32 2147483647, %v3711
  %vm3879 = vcmp.lt.f32.partialorder %v3878, 0.0004427343
  %v3880 = vsel %vm3879, %v3877, %v3874
  %v3881 = vadd.f32 %v3713, 1.0
  %v3882 = vlog2.pop %v3881
  %v3883 = vmul.f32 %v3882, 0.6931472
  %v3884 = vmul.f32 -0.5, %v3713
  %v3885 = vadd.f32 %v3884, 1.0
  %v3886 = vmul.f32 %v3885, %v3713
  %v3887 = vand.u32 2147483647, %v3713
  %vm3888 = vcmp.lt.f32.partialorder %v3887, 0.0004427343
  %v3889 = vsel %vm3888, %v3886, %v3883
  %v3890 = vadd.f32 %v3715, 1.0
  %v3891 = vlog2.pop %v3890
  %v3892 = vmul.f32 %v3891, 0.6931472
  %v3893 = vmul.f32 -0.5, %v3715
  %v3894 = vadd.f32 %v3893, 1.0
  %v3895 = vmul.f32 %v3894, %v3715
  %v3896 = vand.u32 2147483647, %v3715
  %vm3897 = vcmp.lt.f32.partialorder %v3896, 0.0004427343
  %v3898 = vsel %vm3897, %v3895, %v3892
  %v3899 = vadd.f32 %v3717, 1.0
  %v3900 = vlog2.pop %v3899
  %v3901 = vmul.f32 %v3900, 0.6931472
  %v3902 = vmul.f32 -0.5, %v3717
  %v3903 = vadd.f32 %v3902, 1.0
  %v3904 = vmul.f32 %v3903, %v3717
  %v3905 = vand.u32 2147483647, %v3717
  %vm3906 = vcmp.lt.f32.partialorder %v3905, 0.0004427343
  %v3907 = vsel %vm3906, %v3904, %v3901
  %v3908 = vadd.f32 %v3719, 1.0
  %v3909 = vlog2.pop %v3908
  %v3910 = vmul.f32 %v3909, 0.6931472
  %v3911 = vmul.f32 -0.5, %v3719
  %v3912 = vadd.f32 %v3911, 1.0
  %v3913 = vmul.f32 %v3912, %v3719
  %v3914 = vand.u32 2147483647, %v3719
  %vm3915 = vcmp.lt.f32.partialorder %v3914, 0.0004427343
  %v3916 = vsel %vm3915, %v3913, %v3910
  %v3917 = vadd.f32 %v3721, 1.0
  %v3918 = vlog2.pop %v3917
  %v3919 = vmul.f32 %v3918, 0.6931472
  %v3920 = vmul.f32 -0.5, %v3721
  %v3921 = vadd.f32 %v3920, 1.0
  %v3922 = vmul.f32 %v3921, %v3721
  %v3923 = vand.u32 2147483647, %v3721
  %vm3924 = vcmp.lt.f32.partialorder %v3923, 0.0004427343
  %v3925 = vsel %vm3924, %v3922, %v3919
  %v3926 = vadd.f32 %v3723, 1.0
  %v3927 = vlog2.pop %v3926
  %v3928 = vmul.f32 %v3927, 0.6931472
  %v3929 = vmul.f32 -0.5, %v3723
  %v3930 = vadd.f32 %v3929, 1.0
  %v3931 = vmul.f32 %v3930, %v3723
  %v3932 = vand.u32 2147483647, %v3723
  %vm3933 = vcmp.lt.f32.partialorder %v3932, 0.0004427343
  %v3934 = vsel %vm3933, %v3931, %v3928
  %v3935 = vadd.f32 %v3725, 1.0
  %v3936 = vlog2.pop %v3935
  %v3937 = vmul.f32 %v3936, 0.6931472
  %v3938 = vmul.f32 -0.5, %v3725
  %v3939 = vadd.f32 %v3938, 1.0
  %v3940 = vmul.f32 %v3939, %v3725
  %v3941 = vand.u32 2147483647, %v3725
  %vm3942 = vcmp.lt.f32.partialorder %v3941, 0.0004427343
  %v3943 = vsel %vm3942, %v3940, %v3937
  %v3944 = vadd.f32 %v3727, 1.0
  %v3945 = vlog2.pop %v3944
  %v3946 = vmul.f32 %v3945, 0.6931472
  %v3947 = vmul.f32 -0.5, %v3727
  %v3948 = vadd.f32 %v3947, 1.0
  %v3949 = vmul.f32 %v3948, %v3727
  %v3950 = vand.u32 2147483647, %v3727
  %vm3951 = vcmp.lt.f32.partialorder %v3950, 0.0004427343
  %v3952 = vsel %vm3951, %v3949, %v3946
  %v3953 = vadd.f32 %v3729, 1.0
  %v3954 = vlog2.pop %v3953
  %v3955 = vmul.f32 %v3954, 0.6931472
  %v3956 = vmul.f32 -0.5, %v3729
  %v3957 = vadd.f32 %v3956, 1.0
  %v3958 = vmul.f32 %v3957, %v3729
  %v3959 = vand.u32 2147483647, %v3729
  %vm3960 = vcmp.lt.f32.partialorder %v3959, 0.0004427343
  %v3961 = vsel %vm3960, %v3958, %v3955
  %v3962 = vadd.f32 %v3731, 1.0
  %v3963 = vlog2.pop %v3962
  %v3964 = vmul.f32 %v3963, 0.6931472
  %v3965 = vmul.f32 -0.5, %v3731
  %v3966 = vadd.f32 %v3965, 1.0
  %v3967 = vmul.f32 %v3966, %v3731
  %v3968 = vand.u32 2147483647, %v3731
  %vm3969 = vcmp.lt.f32.partialorder %v3968, 0.0004427343
  %v3970 = vsel %vm3969, %v3967, %v3964
  %v3971 = vadd.f32 %v3733, 1.0
  %v3972 = vlog2.pop %v3971
  %v3973 = vmul.f32 %v3972, 0.6931472
  %v3974 = vmul.f32 -0.5, %v3733
  %v3975 = vadd.f32 %v3974, 1.0
  %v3976 = vmul.f32 %v3975, %v3733
  %v3977 = vand.u32 2147483647, %v3733
  %vm3978 = vcmp.lt.f32.partialorder %v3977, 0.0004427343
  %v3979 = vsel %vm3978, %v3976, %v3973
  %v3980 = vadd.f32 %v3735, 1.0
  %v3981 = vlog2.pop %v3980
  %v3982 = vmul.f32 %v3981, 0.6931472
  %v3983 = vmul.f32 -0.5, %v3735
  %v3984 = vadd.f32 %v3983, 1.0
  %v3985 = vmul.f32 %v3984, %v3735
  %v3986 = vand.u32 2147483647, %v3735
  %vm3987 = vcmp.lt.f32.partialorder %v3986, 0.0004427343
  %v3988 = vsel %vm3987, %v3985, %v3982
  %v3989 = vadd.f32 %v3737, 1.0
  %v3990 = vlog2.pop %v3989
  %v3991 = vmul.f32 %v3990, 0.6931472
  %v3992 = vmul.f32 -0.5, %v3737
  %v3993 = vadd.f32 %v3992, 1.0
  %v3994 = vmul.f32 %v3993, %v3737
  %v3995 = vand.u32 2147483647, %v3737
  %vm3996 = vcmp.lt.f32.partialorder %v3995, 0.0004427343
  %v3997 = vsel %vm3996, %v3994, %v3991
  %v3998 = vadd.f32 %v3739, 1.0
  %v3999 = vlog2.pop %v3998
  %v4000 = vmul.f32 %v3999, 0.6931472
  %v4001 = vmul.f32 -0.5, %v3739
  %v4002 = vadd.f32 %v4001, 1.0
  %v4003 = vmul.f32 %v4002, %v3739
  %v4004 = vand.u32 2147483647, %v3739
  %vm4005 = vcmp.lt.f32.partialorder %v4004, 0.0004427343
  %v4006 = vsel %vm4005, %v4003, %v4000
  %v4007 = vadd.f32 %v3741, 1.0
  %v4008 = vlog2.pop %v4007
  %v4009 = vmul.f32 %v4008, 0.6931472
  %v4010 = vmul.f32 -0.5, %v3741
  %v4011 = vadd.f32 %v4010, 1.0
  %v4012 = vmul.f32 %v4011, %v3741
  %v4013 = vand.u32 2147483647, %v3741
  %vm4014 = vcmp.lt.f32.partialorder %v4013, 0.0004427343
  %v4015 = vsel %vm4014, %v4012, %v4009
  %v4016 = vadd.f32 %v3743, 1.0
  %v4017 = vlog2.pop %v4016
  %v4018 = vmul.f32 %v4017, 0.6931472
  %v4019 = vmul.f32 -0.5, %v3743
  %v4020 = vadd.f32 %v4019, 1.0
  %v4021 = vmul.f32 %v4020, %v3743
  %v4022 = vand.u32 2147483647, %v3743
  %vm4023 = vcmp.lt.f32.partialorder %v4022, 0.0004427343
  %v4024 = vsel %vm4023, %v4021, %v4018
  %v4025 = vadd.f32 %v3745, 1.0
  %v4026 = vlog2.pop %v4025
  %v4027 = vmul.f32 %v4026, 0.6931472
  %v4028 = vmul.f32 -0.5, %v3745
  %v4029 = vadd.f32 %v4028, 1.0
  %v4030 = vmul.f32 %v4029, %v3745
  %v4031 = vand.u32 2147483647, %v3745
  %vm4032 = vcmp.lt.f32.partialorder %v4031, 0.0004427343
  %v4033 = vsel %vm4032, %v4030, %v4027
  %v4034 = vadd.f32 %v3522, %v3754
  %v4035 = vadd.f32 %v3523, %v3763
  %v4036 = vadd.f32 %v3524, %v3772
  %v4037 = vadd.f32 %v3525, %v3781
  %v4038 = vadd.f32 %v3526, %v3790
  %v4039 = vadd.f32 %v3527, %v3799
  %v4040 = vadd.f32 %v3528, %v3808
  %v4041 = vadd.f32 %v3529, %v3817
  %v4042 = vadd.f32 %v3530, %v3826
  %v4043 = vadd.f32 %v3531, %v3835
  %v4044 = vadd.f32 %v3532, %v3844
  %v4045 = vadd.f32 %v3533, %v3853
  %v4046 = vadd.f32 %v3534, %v3862
  %v4047 = vadd.f32 %v3535, %v3871
  %v4048 = vadd.f32 %v3536, %v3880
  %v4049 = vadd.f32 %v3537, %v3889
  %v4050 = vadd.f32 %v3538, %v3898
  %v4051 = vadd.f32 %v3539, %v3907
  %v4052 = vadd.f32 %v3540, %v3916
  %v4053 = vadd.f32 %v3541, %v3925
  %v4054 = vadd.f32 %v3542, %v3934
  %v4055 = vadd.f32 %v3543, %v3943
  %v4056 = vadd.f32 %v3544, %v3952
  %v4057 = vadd.f32 %v3545, %v3961
  %v4058 = vadd.f32 %v3546, %v3970
  %v4059 = vadd.f32 %v3547, %v3979
  %v4060 = vadd.f32 %v3548, %v3988
  %v4061 = vadd.f32 %v3549, %v3997
  %v4062 = vadd.f32 %v3550, %v4006
  %v4063 = vadd.f32 %v3551, %v4015
  %v4064 = vadd.f32 %v3552, %v4024
  %v4065 = vadd.f32 %v3553, %v4033
  %v4066 = vsel %vm3554, %v3586, %v4034
  %v4067 = vsel %vm3555, %v3587, %v4035
  %v4068 = vsel %vm3556, %v3588, %v4036
  %v4069 = vsel %vm3557, %v3589, %v4037
  %v4070 = vsel %vm3558, %v3590, %v4038
  %v4071 = vsel %vm3559, %v3591, %v4039
  %v4072 = vsel %vm3560, %v3592, %v4040
  %v4073 = vsel %vm3561, %v3593, %v4041
  %v4074 = vsel %vm3562, %v3594, %v4042
  %v4075 = vsel %vm3563, %v3595, %v4043
  %v4076 = vsel %vm3564, %v3596, %v4044
  %v4077 = vsel %vm3565, %v3597, %v4045
  %v4078 = vsel %vm3566, %v3598, %v4046
  %v4079 = vsel %vm3567, %v3599, %v4047
  %v4080 = vsel %vm3568, %v3600, %v4048
  %v4081 = vsel %vm3569, %v3601, %v4049
  %v4082 = vsel %vm3570, %v3602, %v4050
  %v4083 = vsel %vm3571, %v3603, %v4051
  %v4084 = vsel %vm3572, %v3604, %v4052
  %v4085 = vsel %vm3573, %v3605, %v4053
  %v4086 = vsel %vm3574, %v3606, %v4054
  %v4087 = vsel %vm3575, %v3607, %v4055
  %v4088 = vsel %vm3576, %v3608, %v4056
  %v4089 = vsel %vm3577, %v3609, %v4057
  %v4090 = vsel %vm3578, %v3610, %v4058
  %v4091 = vsel %vm3579, %v3611, %v4059
  %v4092 = vsel %vm3580, %v3612, %v4060
  %v4093 = vsel %vm3581, %v3613, %v4061
  %v4094 = vsel %vm3582, %v3614, %v4062
  %v4095 = vsel %vm3583, %v3615, %v4063
  %v4096 = vsel %vm3584, %v3616, %v4064
  %v4097 = vsel %vm3585, %v3617, %v4065
  %s4098 = scalar_lea.vmem %s1, 512
  %v4099 = vld [vmem:[%s4098] sm:$0xff]
  %v4100 = vld [vmem:[%s4098 + $0x8] sm:$0xff]
  %v4101 = vld [vmem:[%s4098 + $0x10] sm:$0xff]
  %v4102 = vld [vmem:[%s4098 + $0x18] sm:$0xff]
  %v4103 = vld [vmem:[%s4098 + $0x20] sm:$0xff]
  %v4104 = vld [vmem:[%s4098 + $0x28] sm:$0xff]
  %v4105 = vld [vmem:[%s4098 + $0x30] sm:$0xff]
  %v4106 = vld [vmem:[%s4098 + $0x38] sm:$0xff]
  %v4107 = vld [vmem:[%s4098 + $0x40] sm:$0xff]
  %v4108 = vld [vmem:[%s4098 + $0x48] sm:$0xff]
  %v4109 = vld [vmem:[%s4098 + $0x50] sm:$0xff]
  %v4110 = vld [vmem:[%s4098 + $0x58] sm:$0xff]
  %v4111 = vld [vmem:[%s4098 + $0x60] sm:$0xff]
  %v4112 = vld [vmem:[%s4098 + $0x68] sm:$0xff]
  %v4113 = vld [vmem:[%s4098 + $0x70] sm:$0xff]
  %v4114 = vld [vmem:[%s4098 + $0x78] sm:$0xff]
  %v4115 = vld [vmem:[%s4098 + $0x80] sm:$0xff]
  %v4116 = vld [vmem:[%s4098 + $0x88] sm:$0xff]
  %v4117 = vld [vmem:[%s4098 + $0x90] sm:$0xff]
  %v4118 = vld [vmem:[%s4098 + $0x98] sm:$0xff]
  %v4119 = vld [vmem:[%s4098 + $0xa0] sm:$0xff]
  %v4120 = vld [vmem:[%s4098 + $0xa8] sm:$0xff]
  %v4121 = vld [vmem:[%s4098 + $0xb0] sm:$0xff]
  %v4122 = vld [vmem:[%s4098 + $0xb8] sm:$0xff]
  %v4123 = vld [vmem:[%s4098 + $0xc0] sm:$0xff]
  %v4124 = vld [vmem:[%s4098 + $0xc8] sm:$0xff]
  %v4125 = vld [vmem:[%s4098 + $0xd0] sm:$0xff]
  %v4126 = vld [vmem:[%s4098 + $0xd8] sm:$0xff]
  %v4127 = vld [vmem:[%s4098 + $0xe0] sm:$0xff]
  %v4128 = vld [vmem:[%s4098 + $0xe8] sm:$0xff]
  %v4129 = vld [vmem:[%s4098 + $0xf0] sm:$0xff]
  %v4130 = vld [vmem:[%s4098 + $0xf8] sm:$0xff]
  %v4131 = vmul.f32 %v4066, %v4099
  %v4132 = vmul.f32 %v4067, %v4100
  %v4133 = vmul.f32 %v4068, %v4101
  %v4134 = vmul.f32 %v4069, %v4102
  %v4135 = vmul.f32 %v4070, %v4103
  %v4136 = vmul.f32 %v4071, %v4104
  %v4137 = vmul.f32 %v4072, %v4105
  %v4138 = vmul.f32 %v4073, %v4106
  %v4139 = vmul.f32 %v4074, %v4107
  %v4140 = vmul.f32 %v4075, %v4108
  %v4141 = vmul.f32 %v4076, %v4109
  %v4142 = vmul.f32 %v4077, %v4110
  %v4143 = vmul.f32 %v4078, %v4111
  %v4144 = vmul.f32 %v4079, %v4112
  %v4145 = vmul.f32 %v4080, %v4113
  %v4146 = vmul.f32 %v4081, %v4114
  %v4147 = vmul.f32 %v4082, %v4115
  %v4148 = vmul.f32 %v4083, %v4116
  %v4149 = vmul.f32 %v4084, %v4117
  %v4150 = vmul.f32 %v4085, %v4118
  %v4151 = vmul.f32 %v4086, %v4119
  %v4152 = vmul.f32 %v4087, %v4120
  %v4153 = vmul.f32 %v4088, %v4121
  %v4154 = vmul.f32 %v4089, %v4122
  %v4155 = vmul.f32 %v4090, %v4123
  %v4156 = vmul.f32 %v4091, %v4124
  %v4157 = vmul.f32 %v4092, %v4125
  %v4158 = vmul.f32 %v4093, %v4126
  %v4159 = vmul.f32 %v4094, %v4127
  %v4160 = vmul.f32 %v4095, %v4128
  %v4161 = vmul.f32 %v4096, %v4129
  %v4162 = vmul.f32 %v4097, %v4130
  %v4163 = vadd.f32 %v3364, %v4131
  %v4164 = vadd.f32 %v3368, %v4132
  %v4165 = vadd.f32 %v3374, %v4133
  %v4166 = vadd.f32 %v3378, %v4134
  %v4167 = vadd.f32 %v3384, %v4135
  %v4168 = vadd.f32 %v3388, %v4136
  %v4169 = vadd.f32 %v3394, %v4137
  %v4170 = vadd.f32 %v3398, %v4138
  %v4171 = vadd.f32 %v3404, %v4139
  %v4172 = vadd.f32 %v3408, %v4140
  %v4173 = vadd.f32 %v3414, %v4141
  %v4174 = vadd.f32 %v3418, %v4142
  %v4175 = vadd.f32 %v3424, %v4143
  %v4176 = vadd.f32 %v3428, %v4144
  %v4177 = vadd.f32 %v3434, %v4145
  %v4178 = vadd.f32 %v3438, %v4146
  %v4179 = vadd.f32 %v3444, %v4147
  %v4180 = vadd.f32 %v3448, %v4148
  %v4181 = vadd.f32 %v3454, %v4149
  %v4182 = vadd.f32 %v3458, %v4150
  %v4183 = vadd.f32 %v3464, %v4151
  %v4184 = vadd.f32 %v3468, %v4152
  %v4185 = vadd.f32 %v3474, %v4153
  %v4186 = vadd.f32 %v3478, %v4154
  %v4187 = vadd.f32 %v3484, %v4155
  %v4188 = vadd.f32 %v3488, %v4156
  %v4189 = vadd.f32 %v3494, %v4157
  %v4190 = vadd.f32 %v3498, %v4158
  %v4191 = vadd.f32 %v3504, %v4159
  %v4192 = vadd.f32 %v3508, %v4160
  %v4193 = vadd.f32 %v3514, %v4161
  %v4194 = vadd.f32 %v3518, %v4162
  %v4195 = vmul.f32 %v3281, %v1427
  %v4196 = vmul.f32 %v3282, %v1427
  %v4197 = vmul.f32 %v3283, %v1427
  %v4198 = vmul.f32 %v3284, %v1427
  %v4199 = vmul.f32 %v3285, %v1427
  %v4200 = vmul.f32 %v3286, %v1427
  %v4201 = vmul.f32 %v3287, %v1427
  %v4202 = vmul.f32 %v3288, %v1427
  %v4203 = vmul.f32 %v3289, %v1427
  %v4204 = vmul.f32 %v3290, %v1427
  %v4205 = vmul.f32 %v3291, %v1427
  %v4206 = vmul.f32 %v3292, %v1427
  %v4207 = vmul.f32 %v3293, %v1427
  %v4208 = vmul.f32 %v3294, %v1427
  %v4209 = vmul.f32 %v3295, %v1427
  %v4210 = vmul.f32 %v3296, %v1427
  %v4211 = vmul.f32 %v3297, %v1427
  %v4212 = vmul.f32 %v3298, %v1427
  %v4213 = vmul.f32 %v3299, %v1427
  %v4214 = vmul.f32 %v3300, %v1427
  %v4215 = vmul.f32 %v3301, %v1427
  %v4216 = vmul.f32 %v3302, %v1427
  %v4217 = vmul.f32 %v3303, %v1427
  %v4218 = vmul.f32 %v3304, %v1427
  %v4219 = vmul.f32 %v3305, %v1427
  %v4220 = vmul.f32 %v3306, %v1427
  %v4221 = vmul.f32 %v3307, %v1427
  %v4222 = vmul.f32 %v3308, %v1427
  %v4223 = vmul.f32 %v3309, %v1427
  %v4224 = vmul.f32 %v3310, %v1427
  %v4225 = vmul.f32 %v3311, %v1427
  %v4226 = vmul.f32 %v3312, %v1427
  %4227 = vadd.xlane.f32.xlu0 %v4195
  %v4228 = vpop.xlane.xlu0 %4227
  %4229 = vadd.xlane.f32.xlu0 %v4196
  %v4230 = vpop.xlane.xlu0 %4229
  %4231 = vadd.xlane.f32.xlu0 %v4197
  %v4232 = vpop.xlane.xlu0 %4231
  %4233 = vadd.xlane.f32.xlu0 %v4198
  %v4234 = vpop.xlane.xlu0 %4233
  %4235 = vadd.xlane.f32.xlu0 %v4199
  %v4236 = vpop.xlane.xlu0 %4235
  %4237 = vadd.xlane.f32.xlu0 %v4200
  %v4238 = vpop.xlane.xlu0 %4237
  %4239 = vadd.xlane.f32.xlu0 %v4201
  %v4240 = vpop.xlane.xlu0 %4239
  %4241 = vadd.xlane.f32.xlu0 %v4202
  %v4242 = vpop.xlane.xlu0 %4241
  %4243 = vadd.xlane.f32.xlu0 %v4203
  %v4244 = vpop.xlane.xlu0 %4243
  %4245 = vadd.xlane.f32.xlu0 %v4204
  %v4246 = vpop.xlane.xlu0 %4245
  %4247 = vadd.xlane.f32.xlu0 %v4205
  %v4248 = vpop.xlane.xlu0 %4247
  %4249 = vadd.xlane.f32.xlu0 %v4206
  %v4250 = vpop.xlane.xlu0 %4249
  %4251 = vadd.xlane.f32.xlu0 %v4207
  %v4252 = vpop.xlane.xlu0 %4251
  %4253 = vadd.xlane.f32.xlu0 %v4208
  %v4254 = vpop.xlane.xlu0 %4253
  %4255 = vadd.xlane.f32.xlu0 %v4209
  %v4256 = vpop.xlane.xlu0 %4255
  %4257 = vadd.xlane.f32.xlu0 %v4210
  %v4258 = vpop.xlane.xlu0 %4257
  %4259 = vadd.xlane.f32.xlu0 %v4211
  %v4260 = vpop.xlane.xlu0 %4259
  %4261 = vadd.xlane.f32.xlu0 %v4212
  %v4262 = vpop.xlane.xlu0 %4261
  %4263 = vadd.xlane.f32.xlu0 %v4213
  %v4264 = vpop.xlane.xlu0 %4263
  %4265 = vadd.xlane.f32.xlu0 %v4214
  %v4266 = vpop.xlane.xlu0 %4265
  %4267 = vadd.xlane.f32.xlu0 %v4215
  %v4268 = vpop.xlane.xlu0 %4267
  %4269 = vadd.xlane.f32.xlu0 %v4216
  %v4270 = vpop.xlane.xlu0 %4269
  %4271 = vadd.xlane.f32.xlu0 %v4217
  %v4272 = vpop.xlane.xlu0 %4271
  %4273 = vadd.xlane.f32.xlu0 %v4218
  %v4274 = vpop.xlane.xlu0 %4273
  %4275 = vadd.xlane.f32.xlu0 %v4219
  %v4276 = vpop.xlane.xlu0 %4275
  %4277 = vadd.xlane.f32.xlu0 %v4220
  %v4278 = vpop.xlane.xlu0 %4277
  %4279 = vadd.xlane.f32.xlu0 %v4221
  %v4280 = vpop.xlane.xlu0 %4279
  %4281 = vadd.xlane.f32.xlu0 %v4222
  %v4282 = vpop.xlane.xlu0 %4281
  %4283 = vadd.xlane.f32.xlu0 %v4223
  %v4284 = vpop.xlane.xlu0 %4283
  %4285 = vadd.xlane.f32.xlu0 %v4224
  %v4286 = vpop.xlane.xlu0 %4285
  %4287 = vadd.xlane.f32.xlu0 %v4225
  %v4288 = vpop.xlane.xlu0 %4287
  %4289 = vadd.xlane.f32.xlu0 %v4226
  %v4290 = vpop.xlane.xlu0 %4289
  %v4291 = vmul.f32 %v4163, %v1529
  %v4292 = vmul.f32 %v4164, %v1529
  %v4293 = vmul.f32 %v4165, %v1529
  %v4294 = vmul.f32 %v4166, %v1529
  %v4295 = vmul.f32 %v4167, %v1529
  %v4296 = vmul.f32 %v4168, %v1529
  %v4297 = vmul.f32 %v4169, %v1529
  %v4298 = vmul.f32 %v4170, %v1529
  %v4299 = vmul.f32 %v4171, %v1529
  %v4300 = vmul.f32 %v4172, %v1529
  %v4301 = vmul.f32 %v4173, %v1529
  %v4302 = vmul.f32 %v4174, %v1529
  %v4303 = vmul.f32 %v4175, %v1529
  %v4304 = vmul.f32 %v4176, %v1529
  %v4305 = vmul.f32 %v4177, %v1529
  %v4306 = vmul.f32 %v4178, %v1529
  %v4307 = vmul.f32 %v4179, %v1529
  %v4308 = vmul.f32 %v4180, %v1529
  %v4309 = vmul.f32 %v4181, %v1529
  %v4310 = vmul.f32 %v4182, %v1529
  %v4311 = vmul.f32 %v4183, %v1529
  %v4312 = vmul.f32 %v4184, %v1529
  %v4313 = vmul.f32 %v4185, %v1529
  %v4314 = vmul.f32 %v4186, %v1529
  %v4315 = vmul.f32 %v4187, %v1529
  %v4316 = vmul.f32 %v4188, %v1529
  %v4317 = vmul.f32 %v4189, %v1529
  %v4318 = vmul.f32 %v4190, %v1529
  %v4319 = vmul.f32 %v4191, %v1529
  %v4320 = vmul.f32 %v4192, %v1529
  %v4321 = vmul.f32 %v4193, %v1529
  %v4322 = vmul.f32 %v4194, %v1529
  %4323 = vadd.xlane.f32.xlu0 %v4291
  %v4324 = vpop.xlane.xlu0 %4323
  %4325 = vadd.xlane.f32.xlu0 %v4292
  %v4326 = vpop.xlane.xlu0 %4325
  %4327 = vadd.xlane.f32.xlu0 %v4293
  %v4328 = vpop.xlane.xlu0 %4327
  %4329 = vadd.xlane.f32.xlu0 %v4294
  %v4330 = vpop.xlane.xlu0 %4329
  %4331 = vadd.xlane.f32.xlu0 %v4295
  %v4332 = vpop.xlane.xlu0 %4331
  %4333 = vadd.xlane.f32.xlu0 %v4296
  %v4334 = vpop.xlane.xlu0 %4333
  %4335 = vadd.xlane.f32.xlu0 %v4297
  %v4336 = vpop.xlane.xlu0 %4335
  %4337 = vadd.xlane.f32.xlu0 %v4298
  %v4338 = vpop.xlane.xlu0 %4337
  %4339 = vadd.xlane.f32.xlu0 %v4299
  %v4340 = vpop.xlane.xlu0 %4339
  %4341 = vadd.xlane.f32.xlu0 %v4300
  %v4342 = vpop.xlane.xlu0 %4341
  %4343 = vadd.xlane.f32.xlu0 %v4301
  %v4344 = vpop.xlane.xlu0 %4343
  %4345 = vadd.xlane.f32.xlu0 %v4302
  %v4346 = vpop.xlane.xlu0 %4345
  %4347 = vadd.xlane.f32.xlu0 %v4303
  %v4348 = vpop.xlane.xlu0 %4347
  %4349 = vadd.xlane.f32.xlu0 %v4304
  %v4350 = vpop.xlane.xlu0 %4349
  %4351 = vadd.xlane.f32.xlu0 %v4305
  %v4352 = vpop.xlane.xlu0 %4351
  %4353 = vadd.xlane.f32.xlu0 %v4306
  %v4354 = vpop.xlane.xlu0 %4353
  %4355 = vadd.xlane.f32.xlu0 %v4307
  %v4356 = vpop.xlane.xlu0 %4355
  %4357 = vadd.xlane.f32.xlu0 %v4308
  %v4358 = vpop.xlane.xlu0 %4357
  %4359 = vadd.xlane.f32.xlu0 %v4309
  %v4360 = vpop.xlane.xlu0 %4359
  %4361 = vadd.xlane.f32.xlu0 %v4310
  %v4362 = vpop.xlane.xlu0 %4361
  %4363 = vadd.xlane.f32.xlu0 %v4311
  %v4364 = vpop.xlane.xlu0 %4363
  %4365 = vadd.xlane.f32.xlu0 %v4312
  %v4366 = vpop.xlane.xlu0 %4365
  %4367 = vadd.xlane.f32.xlu0 %v4313
  %v4368 = vpop.xlane.xlu0 %4367
  %4369 = vadd.xlane.f32.xlu0 %v4314
  %v4370 = vpop.xlane.xlu0 %4369
  %4371 = vadd.xlane.f32.xlu0 %v4315
  %v4372 = vpop.xlane.xlu0 %4371
  %4373 = vadd.xlane.f32.xlu0 %v4316
  %v4374 = vpop.xlane.xlu0 %4373
  %4375 = vadd.xlane.f32.xlu0 %v4317
  %v4376 = vpop.xlane.xlu0 %4375
  %4377 = vadd.xlane.f32.xlu0 %v4318
  %v4378 = vpop.xlane.xlu0 %4377
  %4379 = vadd.xlane.f32.xlu0 %v4319
  %v4380 = vpop.xlane.xlu0 %4379
  %4381 = vadd.xlane.f32.xlu0 %v4320
  %v4382 = vpop.xlane.xlu0 %4381
  %4383 = vadd.xlane.f32.xlu0 %v4321
  %v4384 = vpop.xlane.xlu0 %4383
  %4385 = vadd.xlane.f32.xlu0 %v4322
  %v4386 = vpop.xlane.xlu0 %4385
  %v4387 = vadd.f32 %v4228, %v4324
  %v4388 = vadd.f32 %v4230, %v4326
  %v4389 = vadd.f32 %v4232, %v4328
  %v4390 = vadd.f32 %v4234, %v4330
  %v4391 = vadd.f32 %v4236, %v4332
  %v4392 = vadd.f32 %v4238, %v4334
  %v4393 = vadd.f32 %v4240, %v4336
  %v4394 = vadd.f32 %v4242, %v4338
  %v4395 = vadd.f32 %v4244, %v4340
  %v4396 = vadd.f32 %v4246, %v4342
  %v4397 = vadd.f32 %v4248, %v4344
  %v4398 = vadd.f32 %v4250, %v4346
  %v4399 = vadd.f32 %v4252, %v4348
  %v4400 = vadd.f32 %v4254, %v4350
  %v4401 = vadd.f32 %v4256, %v4352
  %v4402 = vadd.f32 %v4258, %v4354
  %v4403 = vadd.f32 %v4260, %v4356
  %v4404 = vadd.f32 %v4262, %v4358
  %v4405 = vadd.f32 %v4264, %v4360
  %v4406 = vadd.f32 %v4266, %v4362
  %v4407 = vadd.f32 %v4268, %v4364
  %v4408 = vadd.f32 %v4270, %v4366
  %v4409 = vadd.f32 %v4272, %v4368
  %v4410 = vadd.f32 %v4274, %v4370
  %v4411 = vadd.f32 %v4276, %v4372
  %v4412 = vadd.f32 %v4278, %v4374
  %v4413 = vadd.f32 %v4280, %v4376
  %v4414 = vadd.f32 %v4282, %v4378
  %v4415 = vadd.f32 %v4284, %v4380
  %v4416 = vadd.f32 %v4286, %v4382
  %v4417 = vadd.f32 %v4288, %v4384
  %v4418 = vadd.f32 %v4290, %v4386
  %v4419 = vadd.f32 %v3039, %v4387
  %v4420 = vadd.f32 %v3040, %v4388
  %v4421 = vadd.f32 %v3041, %v4389
  %v4422 = vadd.f32 %v3042, %v4390
  %v4423 = vadd.f32 %v3043, %v4391
  %v4424 = vadd.f32 %v3044, %v4392
  %v4425 = vadd.f32 %v3045, %v4393
  %v4426 = vadd.f32 %v3046, %v4394
  %v4427 = vadd.f32 %v3047, %v4395
  %v4428 = vadd.f32 %v3048, %v4396
  %v4429 = vadd.f32 %v3049, %v4397
  %v4430 = vadd.f32 %v3050, %v4398
  %v4431 = vadd.f32 %v3051, %v4399
  %v4432 = vadd.f32 %v3052, %v4400
  %v4433 = vadd.f32 %v3053, %v4401
  %v4434 = vadd.f32 %v3054, %v4402
  %v4435 = vadd.f32 %v3055, %v4403
  %v4436 = vadd.f32 %v3056, %v4404
  %v4437 = vadd.f32 %v3057, %v4405
  %v4438 = vadd.f32 %v3058, %v4406
  %v4439 = vadd.f32 %v3059, %v4407
  %v4440 = vadd.f32 %v3060, %v4408
  %v4441 = vadd.f32 %v3061, %v4409
  %v4442 = vadd.f32 %v3062, %v4410
  %v4443 = vadd.f32 %v3063, %v4411
  %v4444 = vadd.f32 %v3064, %v4412
  %v4445 = vadd.f32 %v3065, %v4413
  %v4446 = vadd.f32 %v3066, %v4414
  %v4447 = vadd.f32 %v3067, %v4415
  %v4448 = vadd.f32 %v3068, %v4416
  %v4449 = vadd.f32 %v3069, %v4417
  %v4450 = vadd.f32 %v3070, %v4418
  %v4451 = vpack.c.bf16 %v4164, %v4163
  %v4452 = vpack.c.bf16 %v4166, %v4165
  %v4453 = vpack.c.bf16 %v4168, %v4167
  %v4454 = vpack.c.bf16 %v4170, %v4169
  %v4455 = vpack.c.bf16 %v4172, %v4171
  %v4456 = vpack.c.bf16 %v4174, %v4173
  %v4457 = vpack.c.bf16 %v4176, %v4175
  %v4458 = vpack.c.bf16 %v4178, %v4177
  %v4459 = vpack.c.bf16 %v4180, %v4179
  %v4460 = vpack.c.bf16 %v4182, %v4181
  %v4461 = vpack.c.bf16 %v4184, %v4183
  %v4462 = vpack.c.bf16 %v4186, %v4185
  %v4463 = vpack.c.bf16 %v4188, %v4187
  %v4464 = vpack.c.bf16 %v4190, %v4189
  %v4465 = vpack.c.bf16 %v4192, %v4191
  %v4466 = vpack.c.bf16 %v4194, %v4193
  %s4467 = scalar_lea.vmem %s0, 768
  %v4468 = vld [vmem:[%s4467] sm:$0xff]
  %v4469 = vld [vmem:[%s4467 + $0x8] sm:$0xff]
  %v4470 = vld [vmem:[%s4467 + $0x10] sm:$0xff]
  %v4471 = vld [vmem:[%s4467 + $0x18] sm:$0xff]
  %v4472 = vld [vmem:[%s4467 + $0x20] sm:$0xff]
  %v4473 = vld [vmem:[%s4467 + $0x28] sm:$0xff]
  %v4474 = vld [vmem:[%s4467 + $0x30] sm:$0xff]
  %v4475 = vld [vmem:[%s4467 + $0x38] sm:$0xff]
  %v4476 = vld [vmem:[%s4467 + $0x40] sm:$0xff]
  %v4477 = vld [vmem:[%s4467 + $0x48] sm:$0xff]
  %v4478 = vld [vmem:[%s4467 + $0x50] sm:$0xff]
  %v4479 = vld [vmem:[%s4467 + $0x58] sm:$0xff]
  %v4480 = vld [vmem:[%s4467 + $0x60] sm:$0xff]
  %v4481 = vld [vmem:[%s4467 + $0x68] sm:$0xff]
  %v4482 = vld [vmem:[%s4467 + $0x70] sm:$0xff]
  %v4483 = vld [vmem:[%s4467 + $0x78] sm:$0xff]
  %v4484 = vld [vmem:[%s4467 + $0x80] sm:$0xff]
  %v4485 = vld [vmem:[%s4467 + $0x88] sm:$0xff]
  %v4486 = vld [vmem:[%s4467 + $0x90] sm:$0xff]
  %v4487 = vld [vmem:[%s4467 + $0x98] sm:$0xff]
  %v4488 = vld [vmem:[%s4467 + $0xa0] sm:$0xff]
  %v4489 = vld [vmem:[%s4467 + $0xa8] sm:$0xff]
  %v4490 = vld [vmem:[%s4467 + $0xb0] sm:$0xff]
  %v4491 = vld [vmem:[%s4467 + $0xb8] sm:$0xff]
  %v4492 = vld [vmem:[%s4467 + $0xc0] sm:$0xff]
  %v4493 = vld [vmem:[%s4467 + $0xc8] sm:$0xff]
  %v4494 = vld [vmem:[%s4467 + $0xd0] sm:$0xff]
  %v4495 = vld [vmem:[%s4467 + $0xd8] sm:$0xff]
  %v4496 = vld [vmem:[%s4467 + $0xe0] sm:$0xff]
  %v4497 = vld [vmem:[%s4467 + $0xe8] sm:$0xff]
  %v4498 = vld [vmem:[%s4467 + $0xf0] sm:$0xff]
  %v4499 = vld [vmem:[%s4467 + $0xf8] sm:$0xff]
  %4500 = vmatprep.subr.bf16.mxu0 0
  %4501 = vmatpush1.bf16.msra.mxu0 %v226
  %4502 = vmatprep.subr.bf16.mxu0 0
  %4503 = vmatpush1.bf16.msra.mxu0 %v227
  %4504 = vmatprep.subr.bf16.mxu0 0
  %4505 = vmatpush1.bf16.msra.mxu0 %v228
  %4506 = vmatprep.subr.bf16.mxu0 0
  %4507 = vmatpush1.bf16.msra.mxu0 %v229
  %4508 = vmatprep.subr.bf16.mxu0 0
  %4509 = vmatpush1.bf16.msra.mxu0 %v230
  %4510 = vmatprep.subr.bf16.mxu0 0
  %4511 = vmatpush1.bf16.msra.mxu0 %v231
  %4512 = vmatprep.subr.bf16.mxu0 0
  %4513 = vmatpush1.bf16.msra.mxu0 %v232
  %4514 = vmatprep.subr.bf16.mxu0 0
  %4515 = vmatpush1.bf16.msra.mxu0 %v233
  %4516 = vmatprep.subr.bf16.mxu0 0
  %4517 = vmatpush1.bf16.msra.mxu0 %v234
  %4518 = vmatprep.subr.bf16.mxu0 0
  %4519 = vmatpush1.bf16.msra.mxu0 %v235
  %4520 = vmatprep.subr.bf16.mxu0 0
  %4521 = vmatpush1.bf16.msra.mxu0 %v236
  %4522 = vmatprep.subr.bf16.mxu0 0
  %4523 = vmatpush1.bf16.msra.mxu0 %v237
  %4524 = vmatprep.subr.bf16.mxu0 0
  %4525 = vmatpush1.bf16.msra.mxu0 %v238
  %4526 = vmatprep.subr.bf16.mxu0 0
  %4527 = vmatpush1.bf16.msra.mxu0 %v239
  %4528 = vmatprep.subr.bf16.mxu0 0
  %4529 = vmatpush1.bf16.msra.mxu0 %v240
  %4530 = vmatprep.subr.bf16.mxu0 0
  %4531 = vmatpush1.bf16.msra.mxu0 %v241
  %4532 = vmatprep.mubr.bf16.mxu0 %v4451
  %4533 = vmatmul.mubr.bf16.gmra.mrb[0].mxu0 %v3313
  %v4534 = vpop.f32.mrb[0].mxu0
  %v4535 = vadd.f32 %v4468, %v4534
  %v4536 = vpop.f32.mrb[0].mxu0
  %v4537 = vpop.f32.mrb[0].mxu0
  %v4538 = vadd.f32 %v4469, %v4537
  %v4539 = vpop.f32.mrb[0].mxu0
  %4540 = vmatprep.mubr.bf16.mxu0 %v4452
  %4541 = vmatmul.mubr.bf16.gmra.mrb[0].mxu0 %v3314
  %v4542 = vpop.f32.mrb[0].mxu0
  %v4543 = vadd.f32 %v4470, %v4542
  %v4544 = vpop.f32.mrb[0].mxu0
  %v4545 = vpop.f32.mrb[0].mxu0
  %v4546 = vadd.f32 %v4471, %v4545
  %v4547 = vpop.f32.mrb[0].mxu0
  %4548 = vmatprep.mubr.bf16.mxu0 %v4453
  %4549 = vmatmul.mubr.bf16.gmra.mrb[0].mxu0 %v3315
  %v4550 = vpop.f32.mrb[0].mxu0
  %v4551 = vadd.f32 %v4472, %v4550
  %v4552 = vpop.f32.mrb[0].mxu0
  %v4553 = vpop.f32.mrb[0].mxu0
  %v4554 = vadd.f32 %v4473, %v4553
  %v4555 = vpop.f32.mrb[0].mxu0
  %4556 = vmatprep.mubr.bf16.mxu0 %v4454
  %4557 = vmatmul.mubr.bf16.gmra.mrb[0].mxu0 %v3316
  %v4558 = vpop.f32.mrb[0].mxu0
  %v4559 = vadd.f32 %v4474, %v4558
  %v4560 = vpop.f32.mrb[0].mxu0
  %v4561 = vpop.f32.mrb[0].mxu0
  %v4562 = vadd.f32 %v4475, %v4561
  %v4563 = vpop.f32.mrb[0].mxu0
  %4564 = vmatprep.mubr.bf16.mxu0 %v4455
  %4565 = vmatmul.mubr.bf16.gmra.mrb[0].mxu0 %v3317
  %v4566 = vpop.f32.mrb[0].mxu0
  %v4567 = vadd.f32 %v4476, %v4566
  %v4568 = vpop.f32.mrb[0].mxu0
  %v4569 = vpop.f32.mrb[0].mxu0
  %v4570 = vadd.f32 %v4477, %v4569
  %v4571 = vpop.f32.mrb[0].mxu0
  %4572 = vmatprep.mubr.bf16.mxu0 %v4456
  %4573 = vmatmul.mubr.bf16.gmra.mrb[0].mxu0 %v3318
  %v4574 = vpop.f32.mrb[0].mxu0
  %v4575 = vadd.f32 %v4478, %v4574
  %v4576 = vpop.f32.mrb[0].mxu0
  %v4577 = vpop.f32.mrb[0].mxu0
  %v4578 = vadd.f32 %v4479, %v4577
  %v4579 = vpop.f32.mrb[0].mxu0
  %4580 = vmatprep.mubr.bf16.mxu0 %v4457
  %4581 = vmatmul.mubr.bf16.gmra.mrb[0].mxu0 %v3319
  %v4582 = vpop.f32.mrb[0].mxu0
  %v4583 = vadd.f32 %v4480, %v4582
  %v4584 = vpop.f32.mrb[0].mxu0
  %v4585 = vpop.f32.mrb[0].mxu0
  %v4586 = vadd.f32 %v4481, %v4585
  %v4587 = vpop.f32.mrb[0].mxu0
  %4588 = vmatprep.mubr.bf16.mxu0 %v4458
  %4589 = vmatmul.mubr.bf16.gmra.mrb[0].mxu0 %v3320
  %v4590 = vpop.f32.mrb[0].mxu0
  %v4591 = vadd.f32 %v4482, %v4590
  %v4592 = vpop.f32.mrb[0].mxu0
  %v4593 = vpop.f32.mrb[0].mxu0
  %v4594 = vadd.f32 %v4483, %v4593
  %v4595 = vpop.f32.mrb[0].mxu0
  %4596 = vmatprep.mubr.bf16.mxu0 %v4459
  %4597 = vmatmul.mubr.bf16.gmra.mrb[0].mxu0 %v3321
  %v4598 = vpop.f32.mrb[0].mxu0
  %v4599 = vadd.f32 %v4484, %v4598
  %v4600 = vpop.f32.mrb[0].mxu0
  %v4601 = vpop.f32.mrb[0].mxu0
  %v4602 = vadd.f32 %v4485, %v4601
  %v4603 = vpop.f32.mrb[0].mxu0
  %4604 = vmatprep.mubr.bf16.mxu0 %v4460
  %4605 = vmatmul.mubr.bf16.gmra.mrb[0].mxu0 %v3322
  %v4606 = vpop.f32.mrb[0].mxu0
  %v4607 = vadd.f32 %v4486, %v4606
  %v4608 = vpop.f32.mrb[0].mxu0
  %v4609 = vpop.f32.mrb[0].mxu0
  %v4610 = vadd.f32 %v4487, %v4609
  %v4611 = vpop.f32.mrb[0].mxu0
  %4612 = vmatprep.mubr.bf16.mxu0 %v4461
  %4613 = vmatmul.mubr.bf16.gmra.mrb[0].mxu0 %v3323
  %v4614 = vpop.f32.mrb[0].mxu0
  %v4615 = vadd.f32 %v4488, %v4614
  %v4616 = vpop.f32.mrb[0].mxu0
  %v4617 = vpop.f32.mrb[0].mxu0
  %v4618 = vadd.f32 %v4489, %v4617
  %v4619 = vpop.f32.mrb[0].mxu0
  %4620 = vmatprep.mubr.bf16.mxu0 %v4462
  %4621 = vmatmul.mubr.bf16.gmra.mrb[0].mxu0 %v3324
  %v4622 = vpop.f32.mrb[0].mxu0
  %v4623 = vadd.f32 %v4490, %v4622
  %v4624 = vpop.f32.mrb[0].mxu0
  %v4625 = vpop.f32.mrb[0].mxu0
  %v4626 = vadd.f32 %v4491, %v4625
  %v4627 = vpop.f32.mrb[0].mxu0
  %4628 = vmatprep.mubr.bf16.mxu0 %v4463
  %4629 = vmatmul.mubr.bf16.gmra.mrb[0].mxu0 %v3325
  %v4630 = vpop.f32.mrb[0].mxu0
  %v4631 = vadd.f32 %v4492, %v4630
  %v4632 = vpop.f32.mrb[0].mxu0
  %v4633 = vpop.f32.mrb[0].mxu0
  %v4634 = vadd.f32 %v4493, %v4633
  %v4635 = vpop.f32.mrb[0].mxu0
  %4636 = vmatprep.mubr.bf16.mxu0 %v4464
  %4637 = vmatmul.mubr.bf16.gmra.mrb[0].mxu0 %v3326
  %v4638 = vpop.f32.mrb[0].mxu0
  %v4639 = vadd.f32 %v4494, %v4638
  %v4640 = vpop.f32.mrb[0].mxu0
  %v4641 = vpop.f32.mrb[0].mxu0
  %v4642 = vadd.f32 %v4495, %v4641
  %v4643 = vpop.f32.mrb[0].mxu0
  %4644 = vmatprep.mubr.bf16.mxu0 %v4465
  %4645 = vmatmul.mubr.bf16.gmra.mrb[0].mxu0 %v3327
  %v4646 = vpop.f32.mrb[0].mxu0
  %v4647 = vadd.f32 %v4496, %v4646
  %v4648 = vpop.f32.mrb[0].mxu0
  %v4649 = vpop.f32.mrb[0].mxu0
  %v4650 = vadd.f32 %v4497, %v4649
  %v4651 = vpop.f32.mrb[0].mxu0
  %4652 = vmatprep.mubr.bf16.mxu0 %v4466
  %4653 = vmatmul.mubr.bf16.gmra.mrb[0].mxu0 %v3328
  %v4654 = vpop.f32.mrb[0].mxu0
  %v4655 = vadd.f32 %v4498, %v4654
  %v4656 = vpop.f32.mrb[0].mxu0
  %v4657 = vpop.f32.mrb[0].mxu0
  %v4658 = vadd.f32 %v4499, %v4657
  %v4659 = vpop.f32.mrb[0].mxu0
  %4660 = vdwg.mxu0
  %v4661 = vtanh.pop %v4535
  %v4662 = vtanh.pop %v4538
  %v4663 = vtanh.pop %v4543
  %v4664 = vtanh.pop %v4546
  %v4665 = vtanh.pop %v4551
  %v4666 = vtanh.pop %v4554
  %v4667 = vtanh.pop %v4559
  %v4668 = vtanh.pop %v4562
  %v4669 = vtanh.pop %v4567
  %v4670 = vtanh.pop %v4570
  %v4671 = vtanh.pop %v4575
  %v4672 = vtanh.pop %v4578
  %v4673 = vtanh.pop %v4583
  %v4674 = vtanh.pop %v4586
  %v4675 = vtanh.pop %v4591
  %v4676 = vtanh.pop %v4594
  %v4677 = vtanh.pop %v4599
  %v4678 = vtanh.pop %v4602
  %v4679 = vtanh.pop %v4607
  %v4680 = vtanh.pop %v4610
  %v4681 = vtanh.pop %v4615
  %v4682 = vtanh.pop %v4618
  %v4683 = vtanh.pop %v4623
  %v4684 = vtanh.pop %v4626
  %v4685 = vtanh.pop %v4631
  %v4686 = vtanh.pop %v4634
  %v4687 = vtanh.pop %v4639
  %v4688 = vtanh.pop %v4642
  %v4689 = vtanh.pop %v4647
  %v4690 = vtanh.pop %v4650
  %v4691 = vtanh.pop %v4655
  %v4692 = vtanh.pop %v4658
  %v4693 = vpack.c.bf16 %v4662, %v4661
  %v4694 = vpack.c.bf16 %v4664, %v4663
  %v4695 = vpack.c.bf16 %v4666, %v4665
  %v4696 = vpack.c.bf16 %v4668, %v4667
  %v4697 = vpack.c.bf16 %v4670, %v4669
  %v4698 = vpack.c.bf16 %v4672, %v4671
  %v4699 = vpack.c.bf16 %v4674, %v4673
  %v4700 = vpack.c.bf16 %v4676, %v4675
  %v4701 = vpack.c.bf16 %v4678, %v4677
  %v4702 = vpack.c.bf16 %v4680, %v4679
  %v4703 = vpack.c.bf16 %v4682, %v4681
  %v4704 = vpack.c.bf16 %v4684, %v4683
  %v4705 = vpack.c.bf16 %v4686, %v4685
  %v4706 = vpack.c.bf16 %v4688, %v4687
  %v4707 = vpack.c.bf16 %v4690, %v4689
  %v4708 = vpack.c.bf16 %v4692, %v4691
  %4709 = vmatprep.subr.bf16.mxu0 %v527
  %4710 = vmatpush1.bf16.msra.mxu0 %v526
  %4711 = vmatprep.subr.bf16.mxu0 %v529
  %4712 = vmatpush1.bf16.msra.mxu0 %v528
  %4713 = vmatprep.subr.bf16.mxu0 %v531
  %4714 = vmatpush1.bf16.msra.mxu0 %v530
  %4715 = vmatprep.subr.bf16.mxu0 %v533
  %4716 = vmatpush1.bf16.msra.mxu0 %v532
  %4717 = vmatprep.subr.bf16.mxu0 %v535
  %4718 = vmatpush1.bf16.msra.mxu0 %v534
  %4719 = vmatprep.subr.bf16.mxu0 %v537
  %4720 = vmatpush1.bf16.msra.mxu0 %v536
  %4721 = vmatprep.subr.bf16.mxu0 %v539
  %4722 = vmatpush1.bf16.msra.mxu0 %v538
  %4723 = vmatprep.subr.bf16.mxu0 %v541
  %4724 = vmatpush1.bf16.msra.mxu0 %v540
  %4725 = vmatprep.subr.bf16.mxu0 0
  %4726 = vmatpush1.bf16.msra.mxu0 0
  %4727 = vmatprep.subr.bf16.mxu0 0
  %4728 = vmatpush1.bf16.msra.mxu0 0
  %4729 = vmatprep.subr.bf16.mxu0 0
  %4730 = vmatpush1.bf16.msra.mxu0 0
  %4731 = vmatprep.subr.bf16.mxu0 0
  %4732 = vmatpush1.bf16.msra.mxu0 0
  %4733 = vmatprep.subr.bf16.mxu0 0
  %4734 = vmatpush1.bf16.msra.mxu0 0
  %4735 = vmatprep.subr.bf16.mxu0 0
  %4736 = vmatpush1.bf16.msra.mxu0 0
  %4737 = vmatprep.subr.bf16.mxu0 0
  %4738 = vmatpush1.bf16.msra.mxu0 0
  %4739 = vmatprep.subr.bf16.mxu0 0
  %4740 = vmatpush1.bf16.msra.mxu0 0
  %4741 = vmatprep.mubr.bf16.mxu0 0
  %4742 = vmatmul.mubr.bf16.gmra.mrb[0].mxu0 %v4693
  %v4743 = vpop.f32.mrb[0].mxu0
  %v4744 = vadd.f32 %v471, %v4743
  %v4745 = vpop.f32.mrb[0].mxu0
  %v4746 = vadd.f32 %v475, %v4745
  %v4747 = vpop.f32.mrb[0].mxu0
  %v4748 = vadd.f32 %v471, %v4747
  %v4749 = vpop.f32.mrb[0].mxu0
  %v4750 = vadd.f32 %v475, %v4749
  %4751 = vmatprep.mubr.bf16.mxu0 0
  %4752 = vmatmul.mubr.bf16.gmra.mrb[0].mxu0 %v4694
  %v4753 = vpop.f32.mrb[0].mxu0
  %v4754 = vadd.f32 %v471, %v4753
  %v4755 = vpop.f32.mrb[0].mxu0
  %v4756 = vadd.f32 %v475, %v4755
  %v4757 = vpop.f32.mrb[0].mxu0
  %v4758 = vadd.f32 %v471, %v4757
  %v4759 = vpop.f32.mrb[0].mxu0
  %v4760 = vadd.f32 %v475, %v4759
  %4761 = vmatprep.mubr.bf16.mxu0 0
  %4762 = vmatmul.mubr.bf16.gmra.mrb[0].mxu0 %v4695
  %v4763 = vpop.f32.mrb[0].mxu0
  %v4764 = vadd.f32 %v471, %v4763
  %v4765 = vpop.f32.mrb[0].mxu0
  %v4766 = vadd.f32 %v475, %v4765
  %v4767 = vpop.f32.mrb[0].mxu0
  %v4768 = vadd.f32 %v471, %v4767
  %v4769 = vpop.f32.mrb[0].mxu0
  %v4770 = vadd.f32 %v475, %v4769
  %4771 = vmatprep.mubr.bf16.mxu0 0
  %4772 = vmatmul.mubr.bf16.gmra.mrb[0].mxu0 %v4696
  %v4773 = vpop.f32.mrb[0].mxu0
  %v4774 = vadd.f32 %v471, %v4773
  %v4775 = vpop.f32.mrb[0].mxu0
  %v4776 = vadd.f32 %v475, %v4775
  %v4777 = vpop.f32.mrb[0].mxu0
  %v4778 = vadd.f32 %v471, %v4777
  %v4779 = vpop.f32.mrb[0].mxu0
  %v4780 = vadd.f32 %v475, %v4779
  %4781 = vmatprep.mubr.bf16.mxu0 0
  %4782 = vmatmul.mubr.bf16.gmra.mrb[0].mxu0 %v4697
  %v4783 = vpop.f32.mrb[0].mxu0
  %v4784 = vadd.f32 %v471, %v4783
  %v4785 = vpop.f32.mrb[0].mxu0
  %v4786 = vadd.f32 %v475, %v4785
  %v4787 = vpop.f32.mrb[0].mxu0
  %v4788 = vadd.f32 %v471, %v4787
  %v4789 = vpop.f32.mrb[0].mxu0
  %v4790 = vadd.f32 %v475, %v4789
  %4791 = vmatprep.mubr.bf16.mxu0 0
  %4792 = vmatmul.mubr.bf16.gmra.mrb[0].mxu0 %v4698
  %v4793 = vpop.f32.mrb[0].mxu0
  %v4794 = vadd.f32 %v471, %v4793
  %v4795 = vpop.f32.mrb[0].mxu0
  %v4796 = vadd.f32 %v475, %v4795
  %v4797 = vpop.f32.mrb[0].mxu0
  %v4798 = vadd.f32 %v471, %v4797
  %v4799 = vpop.f32.mrb[0].mxu0
  %v4800 = vadd.f32 %v475, %v4799
  %4801 = vmatprep.mubr.bf16.mxu0 0
  %4802 = vmatmul.mubr.bf16.gmra.mrb[0].mxu0 %v4699
  %v4803 = vpop.f32.mrb[0].mxu0
  %v4804 = vadd.f32 %v471, %v4803
  %v4805 = vpop.f32.mrb[0].mxu0
  %v4806 = vadd.f32 %v475, %v4805
  %v4807 = vpop.f32.mrb[0].mxu0
  %v4808 = vadd.f32 %v471, %v4807
  %v4809 = vpop.f32.mrb[0].mxu0
  %v4810 = vadd.f32 %v475, %v4809
  %4811 = vmatprep.mubr.bf16.mxu0 0
  %4812 = vmatmul.mubr.bf16.gmra.mrb[0].mxu0 %v4700
  %v4813 = vpop.f32.mrb[0].mxu0
  %v4814 = vadd.f32 %v471, %v4813
  %v4815 = vpop.f32.mrb[0].mxu0
  %v4816 = vadd.f32 %v475, %v4815
  %v4817 = vpop.f32.mrb[0].mxu0
  %v4818 = vadd.f32 %v471, %v4817
  %v4819 = vpop.f32.mrb[0].mxu0
  %v4820 = vadd.f32 %v475, %v4819
  %4821 = vmatprep.mubr.bf16.mxu0 0
  %4822 = vmatmul.mubr.bf16.gmra.mrb[0].mxu0 %v4701
  %v4823 = vpop.f32.mrb[0].mxu0
  %v4824 = vadd.f32 %v471, %v4823
  %v4825 = vpop.f32.mrb[0].mxu0
  %v4826 = vadd.f32 %v475, %v4825
  %v4827 = vpop.f32.mrb[0].mxu0
  %v4828 = vadd.f32 %v471, %v4827
  %v4829 = vpop.f32.mrb[0].mxu0
  %v4830 = vadd.f32 %v475, %v4829
  %4831 = vmatprep.mubr.bf16.mxu0 0
  %4832 = vmatmul.mubr.bf16.gmra.mrb[0].mxu0 %v4702
  %v4833 = vpop.f32.mrb[0].mxu0
  %v4834 = vadd.f32 %v471, %v4833
  %v4835 = vpop.f32.mrb[0].mxu0
  %v4836 = vadd.f32 %v475, %v4835
  %v4837 = vpop.f32.mrb[0].mxu0
  %v4838 = vadd.f32 %v471, %v4837
  %v4839 = vpop.f32.mrb[0].mxu0
  %v4840 = vadd.f32 %v475, %v4839
  %4841 = vmatprep.mubr.bf16.mxu0 0
  %4842 = vmatmul.mubr.bf16.gmra.mrb[0].mxu0 %v4703
  %v4843 = vpop.f32.mrb[0].mxu0
  %v4844 = vadd.f32 %v471, %v4843
  %v4845 = vpop.f32.mrb[0].mxu0
  %v4846 = vadd.f32 %v475, %v4845
  %v4847 = vpop.f32.mrb[0].mxu0
  %v4848 = vadd.f32 %v471, %v4847
  %v4849 = vpop.f32.mrb[0].mxu0
  %v4850 = vadd.f32 %v475, %v4849
  %4851 = vmatprep.mubr.bf16.mxu0 0
  %4852 = vmatmul.mubr.bf16.gmra.mrb[0].mxu0 %v4704
  %v4853 = vpop.f32.mrb[0].mxu0
  %v4854 = vadd.f32 %v471, %v4853
  %v4855 = vpop.f32.mrb[0].mxu0
  %v4856 = vadd.f32 %v475, %v4855
  %v4857 = vpop.f32.mrb[0].mxu0
  %v4858 = vadd.f32 %v471, %v4857
  %v4859 = vpop.f32.mrb[0].mxu0
  %v4860 = vadd.f32 %v475, %v4859
  %4861 = vmatprep.mubr.bf16.mxu0 0
  %4862 = vmatmul.mubr.bf16.gmra.mrb[0].mxu0 %v4705
  %v4863 = vpop.f32.mrb[0].mxu0
  %v4864 = vadd.f32 %v471, %v4863
  %v4865 = vpop.f32.mrb[0].mxu0
  %v4866 = vadd.f32 %v475, %v4865
  %v4867 = vpop.f32.mrb[0].mxu0
  %v4868 = vadd.f32 %v471, %v4867
  %v4869 = vpop.f32.mrb[0].mxu0
  %v4870 = vadd.f32 %v475, %v4869
  %4871 = vmatprep.mubr.bf16.mxu0 0
  %4872 = vmatmul.mubr.bf16.gmra.mrb[0].mxu0 %v4706
  %v4873 = vpop.f32.mrb[0].mxu0
  %v4874 = vadd.f32 %v471, %v4873
  %v4875 = vpop.f32.mrb[0].mxu0
  %v4876 = vadd.f32 %v475, %v4875
  %v4877 = vpop.f32.mrb[0].mxu0
  %v4878 = vadd.f32 %v471, %v4877
  %v4879 = vpop.f32.mrb[0].mxu0
  %v4880 = vadd.f32 %v475, %v4879
  %4881 = vmatprep.mubr.bf16.mxu0 0
  %4882 = vmatmul.mubr.bf16.gmra.mrb[0].mxu0 %v4707
  %v4883 = vpop.f32.mrb[0].mxu0
  %v4884 = vadd.f32 %v471, %v4883
  %v4885 = vpop.f32.mrb[0].mxu0
  %v4886 = vadd.f32 %v475, %v4885
  %v4887 = vpop.f32.mrb[0].mxu0
  %v4888 = vadd.f32 %v471, %v4887
  %v4889 = vpop.f32.mrb[0].mxu0
  %v4890 = vadd.f32 %v475, %v4889
  %4891 = vmatprep.mubr.bf16.mxu0 0
  %4892 = vmatmul.mubr.bf16.gmra.mrb[0].mxu0 %v4708
  %v4893 = vpop.f32.mrb[0].mxu0
  %v4894 = vadd.f32 %v471, %v4893
  %v4895 = vpop.f32.mrb[0].mxu0
  %v4896 = vadd.f32 %v475, %v4895
  %v4897 = vpop.f32.mrb[0].mxu0
  %v4898 = vadd.f32 %v471, %v4897
  %v4899 = vpop.f32.mrb[0].mxu0
  %v4900 = vadd.f32 %v475, %v4899
  %4901 = vdwg.mxu0
  %v4902 = vmax.f32 %v4746, 0.0
  %v4903 = vmax.f32 %v4750, 0.0
  %v4904 = vmax.f32 %v4756, 0.0
  %v4905 = vmax.f32 %v4760, 0.0
  %v4906 = vmax.f32 %v4766, 0.0
  %v4907 = vmax.f32 %v4770, 0.0
  %v4908 = vmax.f32 %v4776, 0.0
  %v4909 = vmax.f32 %v4780, 0.0
  %v4910 = vmax.f32 %v4786, 0.0
  %v4911 = vmax.f32 %v4790, 0.0
  %v4912 = vmax.f32 %v4796, 0.0
  %v4913 = vmax.f32 %v4800, 0.0
  %v4914 = vmax.f32 %v4806, 0.0
  %v4915 = vmax.f32 %v4810, 0.0
  %v4916 = vmax.f32 %v4816, 0.0
  %v4917 = vmax.f32 %v4820, 0.0
  %v4918 = vmax.f32 %v4826, 0.0
  %v4919 = vmax.f32 %v4830, 0.0
  %v4920 = vmax.f32 %v4836, 0.0
  %v4921 = vmax.f32 %v4840, 0.0
  %v4922 = vmax.f32 %v4846, 0.0
  %v4923 = vmax.f32 %v4850, 0.0
  %v4924 = vmax.f32 %v4856, 0.0
  %v4925 = vmax.f32 %v4860, 0.0
  %v4926 = vmax.f32 %v4866, 0.0
  %v4927 = vmax.f32 %v4870, 0.0
  %v4928 = vmax.f32 %v4876, 0.0
  %v4929 = vmax.f32 %v4880, 0.0
  %v4930 = vmax.f32 %v4886, 0.0
  %v4931 = vmax.f32 %v4890, 0.0
  %v4932 = vmax.f32 %v4896, 0.0
  %v4933 = vmax.f32 %v4900, 0.0
  %vm4934 = vcmp.ne.f32.partialorder %v4746, %v4746
  %vm4935 = vcmp.ne.f32.partialorder %v4750, %v4750
  %vm4936 = vcmp.ne.f32.partialorder %v4756, %v4756
  %vm4937 = vcmp.ne.f32.partialorder %v4760, %v4760
  %vm4938 = vcmp.ne.f32.partialorder %v4766, %v4766
  %vm4939 = vcmp.ne.f32.partialorder %v4770, %v4770
  %vm4940 = vcmp.ne.f32.partialorder %v4776, %v4776
  %vm4941 = vcmp.ne.f32.partialorder %v4780, %v4780
  %vm4942 = vcmp.ne.f32.partialorder %v4786, %v4786
  %vm4943 = vcmp.ne.f32.partialorder %v4790, %v4790
  %vm4944 = vcmp.ne.f32.partialorder %v4796, %v4796
  %vm4945 = vcmp.ne.f32.partialorder %v4800, %v4800
  %vm4946 = vcmp.ne.f32.partialorder %v4806, %v4806
  %vm4947 = vcmp.ne.f32.partialorder %v4810, %v4810
  %vm4948 = vcmp.ne.f32.partialorder %v4816, %v4816
  %vm4949 = vcmp.ne.f32.partialorder %v4820, %v4820
  %vm4950 = vcmp.ne.f32.partialorder %v4826, %v4826
  %vm4951 = vcmp.ne.f32.partialorder %v4830, %v4830
  %vm4952 = vcmp.ne.f32.partialorder %v4836, %v4836
  %vm4953 = vcmp.ne.f32.partialorder %v4840, %v4840
  %vm4954 = vcmp.ne.f32.partialorder %v4846, %v4846
  %vm4955 = vcmp.ne.f32.partialorder %v4850, %v4850
  %vm4956 = vcmp.ne.f32.partialorder %v4856, %v4856
  %vm4957 = vcmp.ne.f32.partialorder %v4860, %v4860
  %vm4958 = vcmp.ne.f32.partialorder %v4866, %v4866
  %vm4959 = vcmp.ne.f32.partialorder %v4870, %v4870
  %vm4960 = vcmp.ne.f32.partialorder %v4876, %v4876
  %vm4961 = vcmp.ne.f32.partialorder %v4880, %v4880
  %vm4962 = vcmp.ne.f32.partialorder %v4886, %v4886
  %vm4963 = vcmp.ne.f32.partialorder %v4890, %v4890
  %vm4964 = vcmp.ne.f32.partialorder %v4896, %v4896
  %vm4965 = vcmp.ne.f32.partialorder %v4900, %v4900
  %v4966 = vadd.f32 %v4746, 0.0
  %v4967 = vadd.f32 %v4750, 0.0
  %v4968 = vadd.f32 %v4756, 0.0
  %v4969 = vadd.f32 %v4760, 0.0
  %v4970 = vadd.f32 %v4766, 0.0
  %v4971 = vadd.f32 %v4770, 0.0
  %v4972 = vadd.f32 %v4776, 0.0
  %v4973 = vadd.f32 %v4780, 0.0
  %v4974 = vadd.f32 %v4786, 0.0
  %v4975 = vadd.f32 %v4790, 0.0
  %v4976 = vadd.f32 %v4796, 0.0
  %v4977 = vadd.f32 %v4800, 0.0
  %v4978 = vadd.f32 %v4806, 0.0
  %v4979 = vadd.f32 %v4810, 0.0
  %v4980 = vadd.f32 %v4816, 0.0
  %v4981 = vadd.f32 %v4820, 0.0
  %v4982 = vadd.f32 %v4826, 0.0
  %v4983 = vadd.f32 %v4830, 0.0
  %v4984 = vadd.f32 %v4836, 0.0
  %v4985 = vadd.f32 %v4840, 0.0
  %v4986 = vadd.f32 %v4846, 0.0
  %v4987 = vadd.f32 %v4850, 0.0
  %v4988 = vadd.f32 %v4856, 0.0
  %v4989 = vadd.f32 %v4860, 0.0
  %v4990 = vadd.f32 %v4866, 0.0
  %v4991 = vadd.f32 %v4870, 0.0
  %v4992 = vadd.f32 %v4876, 0.0
  %v4993 = vadd.f32 %v4880, 0.0
  %v4994 = vadd.f32 %v4886, 0.0
  %v4995 = vadd.f32 %v4890, 0.0
  %v4996 = vadd.f32 %v4896, 0.0
  %v4997 = vadd.f32 %v4900, 0.0
  %v4998 = vand.u32 2147483647, %v4746
  %v4999 = vand.u32 2147483647, %v4750
  %v5000 = vand.u32 2147483647, %v4756
  %v5001 = vand.u32 2147483647, %v4760
  %v5002 = vand.u32 2147483647, %v4766
  %v5003 = vand.u32 2147483647, %v4770
  %v5004 = vand.u32 2147483647, %v4776
  %v5005 = vand.u32 2147483647, %v4780
  %v5006 = vand.u32 2147483647, %v4786
  %v5007 = vand.u32 2147483647, %v4790
  %v5008 = vand.u32 2147483647, %v4796
  %v5009 = vand.u32 2147483647, %v4800
  %v5010 = vand.u32 2147483647, %v4806
  %v5011 = vand.u32 2147483647, %v4810
  %v5012 = vand.u32 2147483647, %v4816
  %v5013 = vand.u32 2147483647, %v4820
  %v5014 = vand.u32 2147483647, %v4826
  %v5015 = vand.u32 2147483647, %v4830
  %v5016 = vand.u32 2147483647, %v4836
  %v5017 = vand.u32 2147483647, %v4840
  %v5018 = vand.u32 2147483647, %v4846
  %v5019 = vand.u32 2147483647, %v4850
  %v5020 = vand.u32 2147483647, %v4856
  %v5021 = vand.u32 2147483647, %v4860
  %v5022 = vand.u32 2147483647, %v4866
  %v5023 = vand.u32 2147483647, %v4870
  %v5024 = vand.u32 2147483647, %v4876
  %v5025 = vand.u32 2147483647, %v4880
  %v5026 = vand.u32 2147483647, %v4886
  %v5027 = vand.u32 2147483647, %v4890
  %v5028 = vand.u32 2147483647, %v4896
  %v5029 = vand.u32 2147483647, %v4900
  %v5030 = vsub.f32 0.0, %v4998
  %v5031 = vsub.f32 0.0, %v4999
  %v5032 = vsub.f32 0.0, %v5000
  %v5033 = vsub.f32 0.0, %v5001
  %v5034 = vsub.f32 0.0, %v5002
  %v5035 = vsub.f32 0.0, %v5003
  %v5036 = vsub.f32 0.0, %v5004
  %v5037 = vsub.f32 0.0, %v5005
  %v5038 = vsub.f32 0.0, %v5006
  %v5039 = vsub.f32 0.0, %v5007
  %v5040 = vsub.f32 0.0, %v5008
  %v5041 = vsub.f32 0.0, %v5009
  %v5042 = vsub.f32 0.0, %v5010
  %v5043 = vsub.f32 0.0, %v5011
  %v5044 = vsub.f32 0.0, %v5012
  %v5045 = vsub.f32 0.0, %v5013
  %v5046 = vsub.f32 0.0, %v5014
  %v5047 = vsub.f32 0.0, %v5015
  %v5048 = vsub.f32 0.0, %v5016
  %v5049 = vsub.f32 0.0, %v5017
  %v5050 = vsub.f32 0.0, %v5018
  %v5051 = vsub.f32 0.0, %v5019
  %v5052 = vsub.f32 0.0, %v5020
  %v5053 = vsub.f32 0.0, %v5021
  %v5054 = vsub.f32 0.0, %v5022
  %v5055 = vsub.f32 0.0, %v5023
  %v5056 = vsub.f32 0.0, %v5024
  %v5057 = vsub.f32 0.0, %v5025
  %v5058 = vsub.f32 0.0, %v5026
  %v5059 = vsub.f32 0.0, %v5027
  %v5060 = vsub.f32 0.0, %v5028
  %v5061 = vsub.f32 0.0, %v5029
  %v5062 = vmul.f32 %v5030, 1.442695
  %v5063 = vpow.pop %v5062
  %v5064 = vmul.f32 %v5031, 1.442695
  %v5065 = vpow.pop %v5064
  %v5066 = vmul.f32 %v5032, 1.442695
  %v5067 = vpow.pop %v5066
  %v5068 = vmul.f32 %v5033, 1.442695
  %v5069 = vpow.pop %v5068
  %v5070 = vmul.f32 %v5034, 1.442695
  %v5071 = vpow.pop %v5070
  %v5072 = vmul.f32 %v5035, 1.442695
  %v5073 = vpow.pop %v5072
  %v5074 = vmul.f32 %v5036, 1.442695
  %v5075 = vpow.pop %v5074
  %v5076 = vmul.f32 %v5037, 1.442695
  %v5077 = vpow.pop %v5076
  %v5078 = vmul.f32 %v5038, 1.442695
  %v5079 = vpow.pop %v5078
  %v5080 = vmul.f32 %v5039, 1.442695
  %v5081 = vpow.pop %v5080
  %v5082 = vmul.f32 %v5040, 1.442695
  %v5083 = vpow.pop %v5082
  %v5084 = vmul.f32 %v5041, 1.442695
  %v5085 = vpow.pop %v5084
  %v5086 = vmul.f32 %v5042, 1.442695
  %v5087 = vpow.pop %v5086
  %v5088 = vmul.f32 %v5043, 1.442695
  %v5089 = vpow.pop %v5088
  %v5090 = vmul.f32 %v5044, 1.442695
  %v5091 = vpow.pop %v5090
  %v5092 = vmul.f32 %v5045, 1.442695
  %v5093 = vpow.pop %v5092
  %v5094 = vmul.f32 %v5046, 1.442695
  %v5095 = vpow.pop %v5094
  %v5096 = vmul.f32 %v5047, 1.442695
  %v5097 = vpow.pop %v5096
  %v5098 = vmul.f32 %v5048, 1.442695
  %v5099 = vpow.pop %v5098
  %v5100 = vmul.f32 %v5049, 1.442695
  %v5101 = vpow.pop %v5100
  %v5102 = vmul.f32 %v5050, 1.442695
  %v5103 = vpow.pop %v5102
  %v5104 = vmul.f32 %v5051, 1.442695
  %v5105 = vpow.pop %v5104
  %v5106 = vmul.f32 %v5052, 1.442695
  %v5107 = vpow.pop %v5106
  %v5108 = vmul.f32 %v5053, 1.442695
  %v5109 = vpow.pop %v5108
  %v5110 = vmul.f32 %v5054, 1.442695
  %v5111 = vpow.pop %v5110
  %v5112 = vmul.f32 %v5055, 1.442695
  %v5113 = vpow.pop %v5112
  %v5114 = vmul.f32 %v5056, 1.442695
  %v5115 = vpow.pop %v5114
  %v5116 = vmul.f32 %v5057, 1.442695
  %v5117 = vpow.pop %v5116
  %v5118 = vmul.f32 %v5058, 1.442695
  %v5119 = vpow.pop %v5118
  %v5120 = vmul.f32 %v5059, 1.442695
  %v5121 = vpow.pop %v5120
  %v5122 = vmul.f32 %v5060, 1.442695
  %v5123 = vpow.pop %v5122
  %v5124 = vmul.f32 %v5061, 1.442695
  %v5125 = vpow.pop %v5124
  %v5126 = vadd.f32 %v5063, 1.0
  %v5127 = vlog2.pop %v5126
  %v5128 = vmul.f32 %v5127, 0.6931472
  %v5129 = vmul.f32 -0.5, %v5063
  %v5130 = vadd.f32 %v5129, 1.0
  %v5131 = vmul.f32 %v5130, %v5063
  %v5132 = vand.u32 2147483647, %v5063
  %vm5133 = vcmp.lt.f32.partialorder %v5132, 0.0004427343
  %v5134 = vsel %vm5133, %v5131, %v5128
  %v5135 = vadd.f32 %v5065, 1.0
  %v5136 = vlog2.pop %v5135
  %v5137 = vmul.f32 %v5136, 0.6931472
  %v5138 = vmul.f32 -0.5, %v5065
  %v5139 = vadd.f32 %v5138, 1.0
  %v5140 = vmul.f32 %v5139, %v5065
  %v5141 = vand.u32 2147483647, %v5065
  %vm5142 = vcmp.lt.f32.partialorder %v5141, 0.0004427343
  %v5143 = vsel %vm5142, %v5140, %v5137
  %v5144 = vadd.f32 %v5067, 1.0
  %v5145 = vlog2.pop %v5144
  %v5146 = vmul.f32 %v5145, 0.6931472
  %v5147 = vmul.f32 -0.5, %v5067
  %v5148 = vadd.f32 %v5147, 1.0
  %v5149 = vmul.f32 %v5148, %v5067
  %v5150 = vand.u32 2147483647, %v5067
  %vm5151 = vcmp.lt.f32.partialorder %v5150, 0.0004427343
  %v5152 = vsel %vm5151, %v5149, %v5146
  %v5153 = vadd.f32 %v5069, 1.0
  %v5154 = vlog2.pop %v5153
  %v5155 = vmul.f32 %v5154, 0.6931472
  %v5156 = vmul.f32 -0.5, %v5069
  %v5157 = vadd.f32 %v5156, 1.0
  %v5158 = vmul.f32 %v5157, %v5069
  %v5159 = vand.u32 2147483647, %v5069
  %vm5160 = vcmp.lt.f32.partialorder %v5159, 0.0004427343
  %v5161 = vsel %vm5160, %v5158, %v5155
  %v5162 = vadd.f32 %v5071, 1.0
  %v5163 = vlog2.pop %v5162
  %v5164 = vmul.f32 %v5163, 0.6931472
  %v5165 = vmul.f32 -0.5, %v5071
  %v5166 = vadd.f32 %v5165, 1.0
  %v5167 = vmul.f32 %v5166, %v5071
  %v5168 = vand.u32 2147483647, %v5071
  %vm5169 = vcmp.lt.f32.partialorder %v5168, 0.0004427343
  %v5170 = vsel %vm5169, %v5167, %v5164
  %v5171 = vadd.f32 %v5073, 1.0
  %v5172 = vlog2.pop %v5171
  %v5173 = vmul.f32 %v5172, 0.6931472
  %v5174 = vmul.f32 -0.5, %v5073
  %v5175 = vadd.f32 %v5174, 1.0
  %v5176 = vmul.f32 %v5175, %v5073
  %v5177 = vand.u32 2147483647, %v5073
  %vm5178 = vcmp.lt.f32.partialorder %v5177, 0.0004427343
  %v5179 = vsel %vm5178, %v5176, %v5173
  %v5180 = vadd.f32 %v5075, 1.0
  %v5181 = vlog2.pop %v5180
  %v5182 = vmul.f32 %v5181, 0.6931472
  %v5183 = vmul.f32 -0.5, %v5075
  %v5184 = vadd.f32 %v5183, 1.0
  %v5185 = vmul.f32 %v5184, %v5075
  %v5186 = vand.u32 2147483647, %v5075
  %vm5187 = vcmp.lt.f32.partialorder %v5186, 0.0004427343
  %v5188 = vsel %vm5187, %v5185, %v5182
  %v5189 = vadd.f32 %v5077, 1.0
  %v5190 = vlog2.pop %v5189
  %v5191 = vmul.f32 %v5190, 0.6931472
  %v5192 = vmul.f32 -0.5, %v5077
  %v5193 = vadd.f32 %v5192, 1.0
  %v5194 = vmul.f32 %v5193, %v5077
  %v5195 = vand.u32 2147483647, %v5077
  %vm5196 = vcmp.lt.f32.partialorder %v5195, 0.0004427343
  %v5197 = vsel %vm5196, %v5194, %v5191
  %v5198 = vadd.f32 %v5079, 1.0
  %v5199 = vlog2.pop %v5198
  %v5200 = vmul.f32 %v5199, 0.6931472
  %v5201 = vmul.f32 -0.5, %v5079
  %v5202 = vadd.f32 %v5201, 1.0
  %v5203 = vmul.f32 %v5202, %v5079
  %v5204 = vand.u32 2147483647, %v5079
  %vm5205 = vcmp.lt.f32.partialorder %v5204, 0.0004427343
  %v5206 = vsel %vm5205, %v5203, %v5200
  %v5207 = vadd.f32 %v5081, 1.0
  %v5208 = vlog2.pop %v5207
  %v5209 = vmul.f32 %v5208, 0.6931472
  %v5210 = vmul.f32 -0.5, %v5081
  %v5211 = vadd.f32 %v5210, 1.0
  %v5212 = vmul.f32 %v5211, %v5081
  %v5213 = vand.u32 2147483647, %v5081
  %vm5214 = vcmp.lt.f32.partialorder %v5213, 0.0004427343
  %v5215 = vsel %vm5214, %v5212, %v5209
  %v5216 = vadd.f32 %v5083, 1.0
  %v5217 = vlog2.pop %v5216
  %v5218 = vmul.f32 %v5217, 0.6931472
  %v5219 = vmul.f32 -0.5, %v5083
  %v5220 = vadd.f32 %v5219, 1.0
  %v5221 = vmul.f32 %v5220, %v5083
  %v5222 = vand.u32 2147483647, %v5083
  %vm5223 = vcmp.lt.f32.partialorder %v5222, 0.0004427343
  %v5224 = vsel %vm5223, %v5221, %v5218
  %v5225 = vadd.f32 %v5085, 1.0
  %v5226 = vlog2.pop %v5225
  %v5227 = vmul.f32 %v5226, 0.6931472
  %v5228 = vmul.f32 -0.5, %v5085
  %v5229 = vadd.f32 %v5228, 1.0
  %v5230 = vmul.f32 %v5229, %v5085
  %v5231 = vand.u32 2147483647, %v5085
  %vm5232 = vcmp.lt.f32.partialorder %v5231, 0.0004427343
  %v5233 = vsel %vm5232, %v5230, %v5227
  %v5234 = vadd.f32 %v5087, 1.0
  %v5235 = vlog2.pop %v5234
  %v5236 = vmul.f32 %v5235, 0.6931472
  %v5237 = vmul.f32 -0.5, %v5087
  %v5238 = vadd.f32 %v5237, 1.0
  %v5239 = vmul.f32 %v5238, %v5087
  %v5240 = vand.u32 2147483647, %v5087
  %vm5241 = vcmp.lt.f32.partialorder %v5240, 0.0004427343
  %v5242 = vsel %vm5241, %v5239, %v5236
  %v5243 = vadd.f32 %v5089, 1.0
  %v5244 = vlog2.pop %v5243
  %v5245 = vmul.f32 %v5244, 0.6931472
  %v5246 = vmul.f32 -0.5, %v5089
  %v5247 = vadd.f32 %v5246, 1.0
  %v5248 = vmul.f32 %v5247, %v5089
  %v5249 = vand.u32 2147483647, %v5089
  %vm5250 = vcmp.lt.f32.partialorder %v5249, 0.0004427343
  %v5251 = vsel %vm5250, %v5248, %v5245
  %v5252 = vadd.f32 %v5091, 1.0
  %v5253 = vlog2.pop %v5252
  %v5254 = vmul.f32 %v5253, 0.6931472
  %v5255 = vmul.f32 -0.5, %v5091
  %v5256 = vadd.f32 %v5255, 1.0
  %v5257 = vmul.f32 %v5256, %v5091
  %v5258 = vand.u32 2147483647, %v5091
  %vm5259 = vcmp.lt.f32.partialorder %v5258, 0.0004427343
  %v5260 = vsel %vm5259, %v5257, %v5254
  %v5261 = vadd.f32 %v5093, 1.0
  %v5262 = vlog2.pop %v5261
  %v5263 = vmul.f32 %v5262, 0.6931472
  %v5264 = vmul.f32 -0.5, %v5093
  %v5265 = vadd.f32 %v5264, 1.0
  %v5266 = vmul.f32 %v5265, %v5093
  %v5267 = vand.u32 2147483647, %v5093
  %vm5268 = vcmp.lt.f32.partialorder %v5267, 0.0004427343
  %v5269 = vsel %vm5268, %v5266, %v5263
  %v5270 = vadd.f32 %v5095, 1.0
  %v5271 = vlog2.pop %v5270
  %v5272 = vmul.f32 %v5271, 0.6931472
  %v5273 = vmul.f32 -0.5, %v5095
  %v5274 = vadd.f32 %v5273, 1.0
  %v5275 = vmul.f32 %v5274, %v5095
  %v5276 = vand.u32 2147483647, %v5095
  %vm5277 = vcmp.lt.f32.partialorder %v5276, 0.0004427343
  %v5278 = vsel %vm5277, %v5275, %v5272
  %v5279 = vadd.f32 %v5097, 1.0
  %v5280 = vlog2.pop %v5279
  %v5281 = vmul.f32 %v5280, 0.6931472
  %v5282 = vmul.f32 -0.5, %v5097
  %v5283 = vadd.f32 %v5282, 1.0
  %v5284 = vmul.f32 %v5283, %v5097
  %v5285 = vand.u32 2147483647, %v5097
  %vm5286 = vcmp.lt.f32.partialorder %v5285, 0.0004427343
  %v5287 = vsel %vm5286, %v5284, %v5281
  %v5288 = vadd.f32 %v5099, 1.0
  %v5289 = vlog2.pop %v5288
  %v5290 = vmul.f32 %v5289, 0.6931472
  %v5291 = vmul.f32 -0.5, %v5099
  %v5292 = vadd.f32 %v5291, 1.0
  %v5293 = vmul.f32 %v5292, %v5099
  %v5294 = vand.u32 2147483647, %v5099
  %vm5295 = vcmp.lt.f32.partialorder %v5294, 0.0004427343
  %v5296 = vsel %vm5295, %v5293, %v5290
  %v5297 = vadd.f32 %v5101, 1.0
  %v5298 = vlog2.pop %v5297
  %v5299 = vmul.f32 %v5298, 0.6931472
  %v5300 = vmul.f32 -0.5, %v5101
  %v5301 = vadd.f32 %v5300, 1.0
  %v5302 = vmul.f32 %v5301, %v5101
  %v5303 = vand.u32 2147483647, %v5101
  %vm5304 = vcmp.lt.f32.partialorder %v5303, 0.0004427343
  %v5305 = vsel %vm5304, %v5302, %v5299
  %v5306 = vadd.f32 %v5103, 1.0
  %v5307 = vlog2.pop %v5306
  %v5308 = vmul.f32 %v5307, 0.6931472
  %v5309 = vmul.f32 -0.5, %v5103
  %v5310 = vadd.f32 %v5309, 1.0
  %v5311 = vmul.f32 %v5310, %v5103
  %v5312 = vand.u32 2147483647, %v5103
  %vm5313 = vcmp.lt.f32.partialorder %v5312, 0.0004427343
  %v5314 = vsel %vm5313, %v5311, %v5308
  %v5315 = vadd.f32 %v5105, 1.0
  %v5316 = vlog2.pop %v5315
  %v5317 = vmul.f32 %v5316, 0.6931472
  %v5318 = vmul.f32 -0.5, %v5105
  %v5319 = vadd.f32 %v5318, 1.0
  %v5320 = vmul.f32 %v5319, %v5105
  %v5321 = vand.u32 2147483647, %v5105
  %vm5322 = vcmp.lt.f32.partialorder %v5321, 0.0004427343
  %v5323 = vsel %vm5322, %v5320, %v5317
  %v5324 = vadd.f32 %v5107, 1.0
  %v5325 = vlog2.pop %v5324
  %v5326 = vmul.f32 %v5325, 0.6931472
  %v5327 = vmul.f32 -0.5, %v5107
  %v5328 = vadd.f32 %v5327, 1.0
  %v5329 = vmul.f32 %v5328, %v5107
  %v5330 = vand.u32 2147483647, %v5107
  %vm5331 = vcmp.lt.f32.partialorder %v5330, 0.0004427343
  %v5332 = vsel %vm5331, %v5329, %v5326
  %v5333 = vadd.f32 %v5109, 1.0
  %v5334 = vlog2.pop %v5333
  %v5335 = vmul.f32 %v5334, 0.6931472
  %v5336 = vmul.f32 -0.5, %v5109
  %v5337 = vadd.f32 %v5336, 1.0
  %v5338 = vmul.f32 %v5337, %v5109
  %v5339 = vand.u32 2147483647, %v5109
  %vm5340 = vcmp.lt.f32.partialorder %v5339, 0.0004427343
  %v5341 = vsel %vm5340, %v5338, %v5335
  %v5342 = vadd.f32 %v5111, 1.0
  %v5343 = vlog2.pop %v5342
  %v5344 = vmul.f32 %v5343, 0.6931472
  %v5345 = vmul.f32 -0.5, %v5111
  %v5346 = vadd.f32 %v5345, 1.0
  %v5347 = vmul.f32 %v5346, %v5111
  %v5348 = vand.u32 2147483647, %v5111
  %vm5349 = vcmp.lt.f32.partialorder %v5348, 0.0004427343
  %v5350 = vsel %vm5349, %v5347, %v5344
  %v5351 = vadd.f32 %v5113, 1.0
  %v5352 = vlog2.pop %v5351
  %v5353 = vmul.f32 %v5352, 0.6931472
  %v5354 = vmul.f32 -0.5, %v5113
  %v5355 = vadd.f32 %v5354, 1.0
  %v5356 = vmul.f32 %v5355, %v5113
  %v5357 = vand.u32 2147483647, %v5113
  %vm5358 = vcmp.lt.f32.partialorder %v5357, 0.0004427343
  %v5359 = vsel %vm5358, %v5356, %v5353
  %v5360 = vadd.f32 %v5115, 1.0
  %v5361 = vlog2.pop %v5360
  %v5362 = vmul.f32 %v5361, 0.6931472
  %v5363 = vmul.f32 -0.5, %v5115
  %v5364 = vadd.f32 %v5363, 1.0
  %v5365 = vmul.f32 %v5364, %v5115
  %v5366 = vand.u32 2147483647, %v5115
  %vm5367 = vcmp.lt.f32.partialorder %v5366, 0.0004427343
  %v5368 = vsel %vm5367, %v5365, %v5362
  %v5369 = vadd.f32 %v5117, 1.0
  %v5370 = vlog2.pop %v5369
  %v5371 = vmul.f32 %v5370, 0.6931472
  %v5372 = vmul.f32 -0.5, %v5117
  %v5373 = vadd.f32 %v5372, 1.0
  %v5374 = vmul.f32 %v5373, %v5117
  %v5375 = vand.u32 2147483647, %v5117
  %vm5376 = vcmp.lt.f32.partialorder %v5375, 0.0004427343
  %v5377 = vsel %vm5376, %v5374, %v5371
  %v5378 = vadd.f32 %v5119, 1.0
  %v5379 = vlog2.pop %v5378
  %v5380 = vmul.f32 %v5379, 0.6931472
  %v5381 = vmul.f32 -0.5, %v5119
  %v5382 = vadd.f32 %v5381, 1.0
  %v5383 = vmul.f32 %v5382, %v5119
  %v5384 = vand.u32 2147483647, %v5119
  %vm5385 = vcmp.lt.f32.partialorder %v5384, 0.0004427343
  %v5386 = vsel %vm5385, %v5383, %v5380
  %v5387 = vadd.f32 %v5121, 1.0
  %v5388 = vlog2.pop %v5387
  %v5389 = vmul.f32 %v5388, 0.6931472
  %v5390 = vmul.f32 -0.5, %v5121
  %v5391 = vadd.f32 %v5390, 1.0
  %v5392 = vmul.f32 %v5391, %v5121
  %v5393 = vand.u32 2147483647, %v5121
  %vm5394 = vcmp.lt.f32.partialorder %v5393, 0.0004427343
  %v5395 = vsel %vm5394, %v5392, %v5389
  %v5396 = vadd.f32 %v5123, 1.0
  %v5397 = vlog2.pop %v5396
  %v5398 = vmul.f32 %v5397, 0.6931472
  %v5399 = vmul.f32 -0.5, %v5123
  %v5400 = vadd.f32 %v5399, 1.0
  %v5401 = vmul.f32 %v5400, %v5123
  %v5402 = vand.u32 2147483647, %v5123
  %vm5403 = vcmp.lt.f32.partialorder %v5402, 0.0004427343
  %v5404 = vsel %vm5403, %v5401, %v5398
  %v5405 = vadd.f32 %v5125, 1.0
  %v5406 = vlog2.pop %v5405
  %v5407 = vmul.f32 %v5406, 0.6931472
  %v5408 = vmul.f32 -0.5, %v5125
  %v5409 = vadd.f32 %v5408, 1.0
  %v5410 = vmul.f32 %v5409, %v5125
  %v5411 = vand.u32 2147483647, %v5125
  %vm5412 = vcmp.lt.f32.partialorder %v5411, 0.0004427343
  %v5413 = vsel %vm5412, %v5410, %v5407
  %v5414 = vadd.f32 %v4902, %v5134
  %v5415 = vadd.f32 %v4903, %v5143
  %v5416 = vadd.f32 %v4904, %v5152
  %v5417 = vadd.f32 %v4905, %v5161
  %v5418 = vadd.f32 %v4906, %v5170
  %v5419 = vadd.f32 %v4907, %v5179
  %v5420 = vadd.f32 %v4908, %v5188
  %v5421 = vadd.f32 %v4909, %v5197
  %v5422 = vadd.f32 %v4910, %v5206
  %v5423 = vadd.f32 %v4911, %v5215
  %v5424 = vadd.f32 %v4912, %v5224
  %v5425 = vadd.f32 %v4913, %v5233
  %v5426 = vadd.f32 %v4914, %v5242
  %v5427 = vadd.f32 %v4915, %v5251
  %v5428 = vadd.f32 %v4916, %v5260
  %v5429 = vadd.f32 %v4917, %v5269
  %v5430 = vadd.f32 %v4918, %v5278
  %v5431 = vadd.f32 %v4919, %v5287
  %v5432 = vadd.f32 %v4920, %v5296
  %v5433 = vadd.f32 %v4921, %v5305
  %v5434 = vadd.f32 %v4922, %v5314
  %v5435 = vadd.f32 %v4923, %v5323
  %v5436 = vadd.f32 %v4924, %v5332
  %v5437 = vadd.f32 %v4925, %v5341
  %v5438 = vadd.f32 %v4926, %v5350
  %v5439 = vadd.f32 %v4927, %v5359
  %v5440 = vadd.f32 %v4928, %v5368
  %v5441 = vadd.f32 %v4929, %v5377
  %v5442 = vadd.f32 %v4930, %v5386
  %v5443 = vadd.f32 %v4931, %v5395
  %v5444 = vadd.f32 %v4932, %v5404
  %v5445 = vadd.f32 %v4933, %v5413
  %v5446 = vsel %vm4934, %v4966, %v5414
  %v5447 = vsel %vm4935, %v4967, %v5415
  %v5448 = vsel %vm4936, %v4968, %v5416
  %v5449 = vsel %vm4937, %v4969, %v5417
  %v5450 = vsel %vm4938, %v4970, %v5418
  %v5451 = vsel %vm4939, %v4971, %v5419
  %v5452 = vsel %vm4940, %v4972, %v5420
  %v5453 = vsel %vm4941, %v4973, %v5421
  %v5454 = vsel %vm4942, %v4974, %v5422
  %v5455 = vsel %vm4943, %v4975, %v5423
  %v5456 = vsel %vm4944, %v4976, %v5424
  %v5457 = vsel %vm4945, %v4977, %v5425
  %v5458 = vsel %vm4946, %v4978, %v5426
  %v5459 = vsel %vm4947, %v4979, %v5427
  %v5460 = vsel %vm4948, %v4980, %v5428
  %v5461 = vsel %vm4949, %v4981, %v5429
  %v5462 = vsel %vm4950, %v4982, %v5430
  %v5463 = vsel %vm4951, %v4983, %v5431
  %v5464 = vsel %vm4952, %v4984, %v5432
  %v5465 = vsel %vm4953, %v4985, %v5433
  %v5466 = vsel %vm4954, %v4986, %v5434
  %v5467 = vsel %vm4955, %v4987, %v5435
  %v5468 = vsel %vm4956, %v4988, %v5436
  %v5469 = vsel %vm4957, %v4989, %v5437
  %v5470 = vsel %vm4958, %v4990, %v5438
  %v5471 = vsel %vm4959, %v4991, %v5439
  %v5472 = vsel %vm4960, %v4992, %v5440
  %v5473 = vsel %vm4961, %v4993, %v5441
  %v5474 = vsel %vm4962, %v4994, %v5442
  %v5475 = vsel %vm4963, %v4995, %v5443
  %v5476 = vsel %vm4964, %v4996, %v5444
  %v5477 = vsel %vm4965, %v4997, %v5445
  %s5478 = scalar_lea.vmem %s1, 768
  %v5479 = vld [vmem:[%s5478] sm:$0xff]
  %v5480 = vld [vmem:[%s5478 + $0x8] sm:$0xff]
  %v5481 = vld [vmem:[%s5478 + $0x10] sm:$0xff]
  %v5482 = vld [vmem:[%s5478 + $0x18] sm:$0xff]
  %v5483 = vld [vmem:[%s5478 + $0x20] sm:$0xff]
  %v5484 = vld [vmem:[%s5478 + $0x28] sm:$0xff]
  %v5485 = vld [vmem:[%s5478 + $0x30] sm:$0xff]
  %v5486 = vld [vmem:[%s5478 + $0x38] sm:$0xff]
  %v5487 = vld [vmem:[%s5478 + $0x40] sm:$0xff]
  %v5488 = vld [vmem:[%s5478 + $0x48] sm:$0xff]
  %v5489 = vld [vmem:[%s5478 + $0x50] sm:$0xff]
  %v5490 = vld [vmem:[%s5478 + $0x58] sm:$0xff]
  %v5491 = vld [vmem:[%s5478 + $0x60] sm:$0xff]
  %v5492 = vld [vmem:[%s5478 + $0x68] sm:$0xff]
  %v5493 = vld [vmem:[%s5478 + $0x70] sm:$0xff]
  %v5494 = vld [vmem:[%s5478 + $0x78] sm:$0xff]
  %v5495 = vld [vmem:[%s5478 + $0x80] sm:$0xff]
  %v5496 = vld [vmem:[%s5478 + $0x88] sm:$0xff]
  %v5497 = vld [vmem:[%s5478 + $0x90] sm:$0xff]
  %v5498 = vld [vmem:[%s5478 + $0x98] sm:$0xff]
  %v5499 = vld [vmem:[%s5478 + $0xa0] sm:$0xff]
  %v5500 = vld [vmem:[%s5478 + $0xa8] sm:$0xff]
  %v5501 = vld [vmem:[%s5478 + $0xb0] sm:$0xff]
  %v5502 = vld [vmem:[%s5478 + $0xb8] sm:$0xff]
  %v5503 = vld [vmem:[%s5478 + $0xc0] sm:$0xff]
  %v5504 = vld [vmem:[%s5478 + $0xc8] sm:$0xff]
  %v5505 = vld [vmem:[%s5478 + $0xd0] sm:$0xff]
  %v5506 = vld [vmem:[%s5478 + $0xd8] sm:$0xff]
  %v5507 = vld [vmem:[%s5478 + $0xe0] sm:$0xff]
  %v5508 = vld [vmem:[%s5478 + $0xe8] sm:$0xff]
  %v5509 = vld [vmem:[%s5478 + $0xf0] sm:$0xff]
  %v5510 = vld [vmem:[%s5478 + $0xf8] sm:$0xff]
  %v5511 = vmul.f32 %v5446, %v5479
  %v5512 = vmul.f32 %v5447, %v5480
  %v5513 = vmul.f32 %v5448, %v5481
  %v5514 = vmul.f32 %v5449, %v5482
  %v5515 = vmul.f32 %v5450, %v5483
  %v5516 = vmul.f32 %v5451, %v5484
  %v5517 = vmul.f32 %v5452, %v5485
  %v5518 = vmul.f32 %v5453, %v5486
  %v5519 = vmul.f32 %v5454, %v5487
  %v5520 = vmul.f32 %v5455, %v5488
  %v5521 = vmul.f32 %v5456, %v5489
  %v5522 = vmul.f32 %v5457, %v5490
  %v5523 = vmul.f32 %v5458, %v5491
  %v5524 = vmul.f32 %v5459, %v5492
  %v5525 = vmul.f32 %v5460, %v5493
  %v5526 = vmul.f32 %v5461, %v5494
  %v5527 = vmul.f32 %v5462, %v5495
  %v5528 = vmul.f32 %v5463, %v5496
  %v5529 = vmul.f32 %v5464, %v5497
  %v5530 = vmul.f32 %v5465, %v5498
  %v5531 = vmul.f32 %v5466, %v5499
  %v5532 = vmul.f32 %v5467, %v5500
  %v5533 = vmul.f32 %v5468, %v5501
  %v5534 = vmul.f32 %v5469, %v5502
  %v5535 = vmul.f32 %v5470, %v5503
  %v5536 = vmul.f32 %v5471, %v5504
  %v5537 = vmul.f32 %v5472, %v5505
  %v5538 = vmul.f32 %v5473, %v5506
  %v5539 = vmul.f32 %v5474, %v5507
  %v5540 = vmul.f32 %v5475, %v5508
  %v5541 = vmul.f32 %v5476, %v5509
  %v5542 = vmul.f32 %v5477, %v5510
  %v5543 = vadd.f32 %v4744, %v5511
  %v5544 = vadd.f32 %v4748, %v5512
  %v5545 = vadd.f32 %v4754, %v5513
  %v5546 = vadd.f32 %v4758, %v5514
  %v5547 = vadd.f32 %v4764, %v5515
  %v5548 = vadd.f32 %v4768, %v5516
  %v5549 = vadd.f32 %v4774, %v5517
  %v5550 = vadd.f32 %v4778, %v5518
  %v5551 = vadd.f32 %v4784, %v5519
  %v5552 = vadd.f32 %v4788, %v5520
  %v5553 = vadd.f32 %v4794, %v5521
  %v5554 = vadd.f32 %v4798, %v5522
  %v5555 = vadd.f32 %v4804, %v5523
  %v5556 = vadd.f32 %v4808, %v5524
  %v5557 = vadd.f32 %v4814, %v5525
  %v5558 = vadd.f32 %v4818, %v5526
  %v5559 = vadd.f32 %v4824, %v5527
  %v5560 = vadd.f32 %v4828, %v5528
  %v5561 = vadd.f32 %v4834, %v5529
  %v5562 = vadd.f32 %v4838, %v5530
  %v5563 = vadd.f32 %v4844, %v5531
  %v5564 = vadd.f32 %v4848, %v5532
  %v5565 = vadd.f32 %v4854, %v5533
  %v5566 = vadd.f32 %v4858, %v5534
  %v5567 = vadd.f32 %v4864, %v5535
  %v5568 = vadd.f32 %v4868, %v5536
  %v5569 = vadd.f32 %v4874, %v5537
  %v5570 = vadd.f32 %v4878, %v5538
  %v5571 = vadd.f32 %v4884, %v5539
  %v5572 = vadd.f32 %v4888, %v5540
  %v5573 = vadd.f32 %v4894, %v5541
  %v5574 = vadd.f32 %v4898, %v5542
  %v5575 = vmul.f32 %v4661, %v1427
  %v5576 = vmul.f32 %v4662, %v1427
  %v5577 = vmul.f32 %v4663, %v1427
  %v5578 = vmul.f32 %v4664, %v1427
  %v5579 = vmul.f32 %v4665, %v1427
  %v5580 = vmul.f32 %v4666, %v1427
  %v5581 = vmul.f32 %v4667, %v1427
  %v5582 = vmul.f32 %v4668, %v1427
  %v5583 = vmul.f32 %v4669, %v1427
  %v5584 = vmul.f32 %v4670, %v1427
  %v5585 = vmul.f32 %v4671, %v1427
  %v5586 = vmul.f32 %v4672, %v1427
  %v5587 = vmul.f32 %v4673, %v1427
  %v5588 = vmul.f32 %v4674, %v1427
  %v5589 = vmul.f32 %v4675, %v1427
  %v5590 = vmul.f32 %v4676, %v1427
  %v5591 = vmul.f32 %v4677, %v1427
  %v5592 = vmul.f32 %v4678, %v1427
  %v5593 = vmul.f32 %v4679, %v1427
  %v5594 = vmul.f32 %v4680, %v1427
  %v5595 = vmul.f32 %v4681, %v1427
  %v5596 = vmul.f32 %v4682, %v1427
  %v5597 = vmul.f32 %v4683, %v1427
  %v5598 = vmul.f32 %v4684, %v1427
  %v5599 = vmul.f32 %v4685, %v1427
  %v5600 = vmul.f32 %v4686, %v1427
  %v5601 = vmul.f32 %v4687, %v1427
  %v5602 = vmul.f32 %v4688, %v1427
  %v5603 = vmul.f32 %v4689, %v1427
  %v5604 = vmul.f32 %v4690, %v1427
  %v5605 = vmul.f32 %v4691, %v1427
  %v5606 = vmul.f32 %v4692, %v1427
  %5607 = vadd.xlane.f32.xlu0 %v5575
  %v5608 = vpop.xlane.xlu0 %5607
  %5609 = vadd.xlane.f32.xlu0 %v5576
  %v5610 = vpop.xlane.xlu0 %5609
  %5611 = vadd.xlane.f32.xlu0 %v5577
  %v5612 = vpop.xlane.xlu0 %5611
  %5613 = vadd.xlane.f32.xlu0 %v5578
  %v5614 = vpop.xlane.xlu0 %5613
  %5615 = vadd.xlane.f32.xlu0 %v5579
  %v5616 = vpop.xlane.xlu0 %5615
  %5617 = vadd.xlane.f32.xlu0 %v5580
  %v5618 = vpop.xlane.xlu0 %5617
  %5619 = vadd.xlane.f32.xlu0 %v5581
  %v5620 = vpop.xlane.xlu0 %5619
  %5621 = vadd.xlane.f32.xlu0 %v5582
  %v5622 = vpop.xlane.xlu0 %5621
  %5623 = vadd.xlane.f32.xlu0 %v5583
  %v5624 = vpop.xlane.xlu0 %5623
  %5625 = vadd.xlane.f32.xlu0 %v5584
  %v5626 = vpop.xlane.xlu0 %5625
  %5627 = vadd.xlane.f32.xlu0 %v5585
  %v5628 = vpop.xlane.xlu0 %5627
  %5629 = vadd.xlane.f32.xlu0 %v5586
  %v5630 = vpop.xlane.xlu0 %5629
  %5631 = vadd.xlane.f32.xlu0 %v5587
  %v5632 = vpop.xlane.xlu0 %5631
  %5633 = vadd.xlane.f32.xlu0 %v5588
  %v5634 = vpop.xlane.xlu0 %5633
  %5635 = vadd.xlane.f32.xlu0 %v5589
  %v5636 = vpop.xlane.xlu0 %5635
  %5637 = vadd.xlane.f32.xlu0 %v5590
  %v5638 = vpop.xlane.xlu0 %5637
  %5639 = vadd.xlane.f32.xlu0 %v5591
  %v5640 = vpop.xlane.xlu0 %5639
  %5641 = vadd.xlane.f32.xlu0 %v5592
  %v5642 = vpop.xlane.xlu0 %5641
  %5643 = vadd.xlane.f32.xlu0 %v5593
  %v5644 = vpop.xlane.xlu0 %5643
  %5645 = vadd.xlane.f32.xlu0 %v5594
  %v5646 = vpop.xlane.xlu0 %5645
  %5647 = vadd.xlane.f32.xlu0 %v5595
  %v5648 = vpop.xlane.xlu0 %5647
  %5649 = vadd.xlane.f32.xlu0 %v5596
  %v5650 = vpop.xlane.xlu0 %5649
  %5651 = vadd.xlane.f32.xlu0 %v5597
  %v5652 = vpop.xlane.xlu0 %5651
  %5653 = vadd.xlane.f32.xlu0 %v5598
  %v5654 = vpop.xlane.xlu0 %5653
  %5655 = vadd.xlane.f32.xlu0 %v5599
  %v5656 = vpop.xlane.xlu0 %5655
  %5657 = vadd.xlane.f32.xlu0 %v5600
  %v5658 = vpop.xlane.xlu0 %5657
  %5659 = vadd.xlane.f32.xlu0 %v5601
  %v5660 = vpop.xlane.xlu0 %5659
  %5661 = vadd.xlane.f32.xlu0 %v5602
  %v5662 = vpop.xlane.xlu0 %5661
  %5663 = vadd.xlane.f32.xlu0 %v5603
  %v5664 = vpop.xlane.xlu0 %5663
  %5665 = vadd.xlane.f32.xlu0 %v5604
  %v5666 = vpop.xlane.xlu0 %5665
  %5667 = vadd.xlane.f32.xlu0 %v5605
  %v5668 = vpop.xlane.xlu0 %5667
  %5669 = vadd.xlane.f32.xlu0 %v5606
  %v5670 = vpop.xlane.xlu0 %5669
  %v5671 = vmul.f32 %v5543, %v1529
  %v5672 = vmul.f32 %v5544, %v1529
  %v5673 = vmul.f32 %v5545, %v1529
  %v5674 = vmul.f32 %v5546, %v1529
  %v5675 = vmul.f32 %v5547, %v1529
  %v5676 = vmul.f32 %v5548, %v1529
  %v5677 = vmul.f32 %v5549, %v1529
  %v5678 = vmul.f32 %v5550, %v1529
  %v5679 = vmul.f32 %v5551, %v1529
  %v5680 = vmul.f32 %v5552, %v1529
  %v5681 = vmul.f32 %v5553, %v1529
  %v5682 = vmul.f32 %v5554, %v1529
  %v5683 = vmul.f32 %v5555, %v1529
  %v5684 = vmul.f32 %v5556, %v1529
  %v5685 = vmul.f32 %v5557, %v1529
  %v5686 = vmul.f32 %v5558, %v1529
  %v5687 = vmul.f32 %v5559, %v1529
  %v5688 = vmul.f32 %v5560, %v1529
  %v5689 = vmul.f32 %v5561, %v1529
  %v5690 = vmul.f32 %v5562, %v1529
  %v5691 = vmul.f32 %v5563, %v1529
  %v5692 = vmul.f32 %v5564, %v1529
  %v5693 = vmul.f32 %v5565, %v1529
  %v5694 = vmul.f32 %v5566, %v1529
  %v5695 = vmul.f32 %v5567, %v1529
  %v5696 = vmul.f32 %v5568, %v1529
  %v5697 = vmul.f32 %v5569, %v1529
  %v5698 = vmul.f32 %v5570, %v1529
  %v5699 = vmul.f32 %v5571, %v1529
  %v5700 = vmul.f32 %v5572, %v1529
  %v5701 = vmul.f32 %v5573, %v1529
  %v5702 = vmul.f32 %v5574, %v1529
  %5703 = vadd.xlane.f32.xlu0 %v5671
  %v5704 = vpop.xlane.xlu0 %5703
  %5705 = vadd.xlane.f32.xlu0 %v5672
  %v5706 = vpop.xlane.xlu0 %5705
  %5707 = vadd.xlane.f32.xlu0 %v5673
  %v5708 = vpop.xlane.xlu0 %5707
  %5709 = vadd.xlane.f32.xlu0 %v5674
  %v5710 = vpop.xlane.xlu0 %5709
  %5711 = vadd.xlane.f32.xlu0 %v5675
  %v5712 = vpop.xlane.xlu0 %5711
  %5713 = vadd.xlane.f32.xlu0 %v5676
  %v5714 = vpop.xlane.xlu0 %5713
  %5715 = vadd.xlane.f32.xlu0 %v5677
  %v5716 = vpop.xlane.xlu0 %5715
  %5717 = vadd.xlane.f32.xlu0 %v5678
  %v5718 = vpop.xlane.xlu0 %5717
  %5719 = vadd.xlane.f32.xlu0 %v5679
  %v5720 = vpop.xlane.xlu0 %5719
  %5721 = vadd.xlane.f32.xlu0 %v5680
  %v5722 = vpop.xlane.xlu0 %5721
  %5723 = vadd.xlane.f32.xlu0 %v5681
  %v5724 = vpop.xlane.xlu0 %5723
  %5725 = vadd.xlane.f32.xlu0 %v5682
  %v5726 = vpop.xlane.xlu0 %5725
  %5727 = vadd.xlane.f32.xlu0 %v5683
  %v5728 = vpop.xlane.xlu0 %5727
  %5729 = vadd.xlane.f32.xlu0 %v5684
  %v5730 = vpop.xlane.xlu0 %5729
  %5731 = vadd.xlane.f32.xlu0 %v5685
  %v5732 = vpop.xlane.xlu0 %5731
  %5733 = vadd.xlane.f32.xlu0 %v5686
  %v5734 = vpop.xlane.xlu0 %5733
  %5735 = vadd.xlane.f32.xlu0 %v5687
  %v5736 = vpop.xlane.xlu0 %5735
  %5737 = vadd.xlane.f32.xlu0 %v5688
  %v5738 = vpop.xlane.xlu0 %5737
  %5739 = vadd.xlane.f32.xlu0 %v5689
  %v5740 = vpop.xlane.xlu0 %5739
  %5741 = vadd.xlane.f32.xlu0 %v5690
  %v5742 = vpop.xlane.xlu0 %5741
  %5743 = vadd.xlane.f32.xlu0 %v5691
  %v5744 = vpop.xlane.xlu0 %5743
  %5745 = vadd.xlane.f32.xlu0 %v5692
  %v5746 = vpop.xlane.xlu0 %5745
  %5747 = vadd.xlane.f32.xlu0 %v5693
  %v5748 = vpop.xlane.xlu0 %5747
  %5749 = vadd.xlane.f32.xlu0 %v5694
  %v5750 = vpop.xlane.xlu0 %5749
  %5751 = vadd.xlane.f32.xlu0 %v5695
  %v5752 = vpop.xlane.xlu0 %5751
  %5753 = vadd.xlane.f32.xlu0 %v5696
  %v5754 = vpop.xlane.xlu0 %5753
  %5755 = vadd.xlane.f32.xlu0 %v5697
  %v5756 = vpop.xlane.xlu0 %5755
  %5757 = vadd.xlane.f32.xlu0 %v5698
  %v5758 = vpop.xlane.xlu0 %5757
  %5759 = vadd.xlane.f32.xlu0 %v5699
  %v5760 = vpop.xlane.xlu0 %5759
  %5761 = vadd.xlane.f32.xlu0 %v5700
  %v5762 = vpop.xlane.xlu0 %5761
  %5763 = vadd.xlane.f32.xlu0 %v5701
  %v5764 = vpop.xlane.xlu0 %5763
  %5765 = vadd.xlane.f32.xlu0 %v5702
  %v5766 = vpop.xlane.xlu0 %5765
  %v5767 = vadd.f32 %v5608, %v5704
  %v5768 = vadd.f32 %v5610, %v5706
  %v5769 = vadd.f32 %v5612, %v5708
  %v5770 = vadd.f32 %v5614, %v5710
  %v5771 = vadd.f32 %v5616, %v5712
  %v5772 = vadd.f32 %v5618, %v5714
  %v5773 = vadd.f32 %v5620, %v5716
  %v5774 = vadd.f32 %v5622, %v5718
  %v5775 = vadd.f32 %v5624, %v5720
  %v5776 = vadd.f32 %v5626, %v5722
  %v5777 = vadd.f32 %v5628, %v5724
  %v5778 = vadd.f32 %v5630, %v5726
  %v5779 = vadd.f32 %v5632, %v5728
  %v5780 = vadd.f32 %v5634, %v5730
  %v5781 = vadd.f32 %v5636, %v5732
  %v5782 = vadd.f32 %v5638, %v5734
  %v5783 = vadd.f32 %v5640, %v5736
  %v5784 = vadd.f32 %v5642, %v5738
  %v5785 = vadd.f32 %v5644, %v5740
  %v5786 = vadd.f32 %v5646, %v5742
  %v5787 = vadd.f32 %v5648, %v5744
  %v5788 = vadd.f32 %v5650, %v5746
  %v5789 = vadd.f32 %v5652, %v5748
  %v5790 = vadd.f32 %v5654, %v5750
  %v5791 = vadd.f32 %v5656, %v5752
  %v5792 = vadd.f32 %v5658, %v5754
  %v5793 = vadd.f32 %v5660, %v5756
  %v5794 = vadd.f32 %v5662, %v5758
  %v5795 = vadd.f32 %v5664, %v5760
  %v5796 = vadd.f32 %v5666, %v5762
  %v5797 = vadd.f32 %v5668, %v5764
  %v5798 = vadd.f32 %v5670, %v5766
  %v5799 = vadd.f32 %v4419, %v5767
  %v5800 = vadd.f32 %v4420, %v5768
  %v5801 = vadd.f32 %v4421, %v5769
  %v5802 = vadd.f32 %v4422, %v5770
  %v5803 = vadd.f32 %v4423, %v5771
  %v5804 = vadd.f32 %v4424, %v5772
  %v5805 = vadd.f32 %v4425, %v5773
  %v5806 = vadd.f32 %v4426, %v5774
  %v5807 = vadd.f32 %v4427, %v5775
  %v5808 = vadd.f32 %v4428, %v5776
  %v5809 = vadd.f32 %v4429, %v5777
  %v5810 = vadd.f32 %v4430, %v5778
  %v5811 = vadd.f32 %v4431, %v5779
  %v5812 = vadd.f32 %v4432, %v5780
  %v5813 = vadd.f32 %v4433, %v5781
  %v5814 = vadd.f32 %v4434, %v5782
  %v5815 = vadd.f32 %v4435, %v5783
  %v5816 = vadd.f32 %v4436, %v5784
  %v5817 = vadd.f32 %v4437, %v5785
  %v5818 = vadd.f32 %v4438, %v5786
  %v5819 = vadd.f32 %v4439, %v5787
  %v5820 = vadd.f32 %v4440, %v5788
  %v5821 = vadd.f32 %v4441, %v5789
  %v5822 = vadd.f32 %v4442, %v5790
  %v5823 = vadd.f32 %v4443, %v5791
  %v5824 = vadd.f32 %v4444, %v5792
  %v5825 = vadd.f32 %v4445, %v5793
  %v5826 = vadd.f32 %v4446, %v5794
  %v5827 = vadd.f32 %v4447, %v5795
  %v5828 = vadd.f32 %v4448, %v5796
  %v5829 = vadd.f32 %v4449, %v5797
  %v5830 = vadd.f32 %v4450, %v5798
  %vm5831 = vcmask 7168
  %5832 = vst.msk [vmem:[%s8] sm:$0xff] %vm5831, %v5799
  %5833 = vst.msk [vmem:[%s8 + $0x8] sm:$0xff] %vm5831, %v5800
  %5834 = vst.msk [vmem:[%s8 + $0x10] sm:$0xff] %vm5831, %v5801
  %5835 = vst.msk [vmem:[%s8 + $0x18] sm:$0xff] %vm5831, %v5802
  %5836 = vst.msk [vmem:[%s8 + $0x20] sm:$0xff] %vm5831, %v5803
  %5837 = vst.msk [vmem:[%s8 + $0x28] sm:$0xff] %vm5831, %v5804
  %5838 = vst.msk [vmem:[%s8 + $0x30] sm:$0xff] %vm5831, %v5805
  %5839 = vst.msk [vmem:[%s8 + $0x38] sm:$0xff] %vm5831, %v5806
  %5840 = vst.msk [vmem:[%s8 + $0x40] sm:$0xff] %vm5831, %v5807
  %5841 = vst.msk [vmem:[%s8 + $0x48] sm:$0xff] %vm5831, %v5808
  %5842 = vst.msk [vmem:[%s8 + $0x50] sm:$0xff] %vm5831, %v5809
  %5843 = vst.msk [vmem:[%s8 + $0x58] sm:$0xff] %vm5831, %v5810
  %5844 = vst.msk [vmem:[%s8 + $0x60] sm:$0xff] %vm5831, %v5811
  %5845 = vst.msk [vmem:[%s8 + $0x68] sm:$0xff] %vm5831, %v5812
  %5846 = vst.msk [vmem:[%s8 + $0x70] sm:$0xff] %vm5831, %v5813
  %5847 = vst.msk [vmem:[%s8 + $0x78] sm:$0xff] %vm5831, %v5814
  %5848 = vst.msk [vmem:[%s8 + $0x80] sm:$0xff] %vm5831, %v5815
  %5849 = vst.msk [vmem:[%s8 + $0x88] sm:$0xff] %vm5831, %v5816
  %5850 = vst.msk [vmem:[%s8 + $0x90] sm:$0xff] %vm5831, %v5817
  %5851 = vst.msk [vmem:[%s8 + $0x98] sm:$0xff] %vm5831, %v5818
  %5852 = vst.msk [vmem:[%s8 + $0xa0] sm:$0xff] %vm5831, %v5819
  %5853 = vst.msk [vmem:[%s8 + $0xa8] sm:$0xff] %vm5831, %v5820
  %5854 = vst.msk [vmem:[%s8 + $0xb0] sm:$0xff] %vm5831, %v5821
  %5855 = vst.msk [vmem:[%s8 + $0xb8] sm:$0xff] %vm5831, %v5822
  %5856 = vst.msk [vmem:[%s8 + $0xc0] sm:$0xff] %vm5831, %v5823
  %5857 = vst.msk [vmem:[%s8 + $0xc8] sm:$0xff] %vm5831, %v5824
  %5858 = vst.msk [vmem:[%s8 + $0xd0] sm:$0xff] %vm5831, %v5825
  %5859 = vst.msk [vmem:[%s8 + $0xd8] sm:$0xff] %vm5831, %v5826
  %5860 = vst.msk [vmem:[%s8 + $0xe0] sm:$0xff] %vm5831, %v5827
  %5861 = vst.msk [vmem:[%s8 + $0xe8] sm:$0xff] %vm5831, %v5828
  %5862 = vst.msk [vmem:[%s8 + $0xf0] sm:$0xff] %vm5831, %v5829
  %5863 = vst.msk [vmem:[%s8 + $0xf8] sm:$0xff] %vm5831, %v5830
  // Predicated region
  $region34: #{plan.2} parent=0 // pred_check
    _
  $region35: #{plan.2} parent=0 // pred_check_branch
    %5865 = sbr.rel (0) target = $region37
  $region36: #{plan.2} parent=0 // pred_region
    _
  $region37: #{plan.2} parent=0 // pred_fallthru
    _
  // Predicated region
  $region38: #{plan.2} parent=0 // pred_check
    _
  $region39: #{plan.2} parent=0 // pred_check_branch
    %5867 = sbr.rel (0) target = $region41
  $region40: #{plan.2} parent=0 // pred_region
    _
  $region41: #{plan.2} parent=0 // pred_fallthru
    _

</llo_original>
